<compile_context>
chip_gen: v7x
topology: tpu7x:2x2x1
jax: 0.10.0
libtpu: 0.0.40
codegen_flags: <defaults>
</compile_context>

<pallas_src>
import functools

import jax
import jax.numpy as jnp
from jax import lax
from jax.experimental import pallas as pl
from jax.experimental.pallas import tpu as pltpu


GENOTYPE = [[("conv_3x3x3", 0), ("skip_connect", 1),
             ("conv_3x3x3", 2), ("skip_connect", 0),
             ("conv_3x3x3", 3), ("skip_connect", 1)]]


def _fold_bn(gamma, beta, mean, var, eps=1e-5):
    scale = gamma / jnp.sqrt(var + eps)
    shift = beta - mean * scale
    return scale, shift


# =============================================================================
# Fused FixCell kernel: one grid step == one batch element, everything in VMEM.
# =============================================================================
def _fixcell_kernel(s1_ref, s0_ref, w_ref, sh_ref, we_ref, esh_ref, mask_ref,
                    o_ref, *state_scratch, op_names, C, Vp, G, HpWp, Wp):
    """Layouts (channels on sublanes, flattened padded (D+2,H+2,W+2) volume on lanes):
      s1_ref/s0_ref : (C, Mg)            f32   Mg = Vp + 2*G, zero halo + zero lane guards
      w_ref         : (n_conv*3, C, 9C)  bf16  per-(op, kd) BN-scale-folded conv weights
      sh_ref        : (n_conv, C, 1)     f32   folded BN shift per conv op
      we_ref        : (32, steps*C)      bf16  conv_end weight (BN scale folded)
      esh_ref       : (32, 1)            f32   conv_end BN shift
      mask_ref      : (1, Vp)            f32   1.0 on interior (d,h,w), 0.0 on halo
      o_ref         : (32, Vp)           f32   conv_end output (halo lanes = garbage,
                                               cropped by the wrapper)
      state_scratch : steps x (C, Mg)    f32   VMEM-resident cell states s2..
    """
    steps = len(state_scratch)
    g0 = G - (HpWp + Wp + 1)            # guard slack so all tap slices start >= 0

    # Re-zero the state scratch every grid step (keeps guards + halo exactly zero; also
    # megacore-safe since each core owns its own scratch copy).
    for sref in state_scratch:
        sref[...] = jnp.zeros_like(sref)

    interior = mask_ref[...] > 0.5                              # (1, Vp) bool

    def vol(ref):                                               # padded-volume window
        return ref[:, G:G + Vp]                                 # aligned lane start (G=128)

    def conv3x3x3_bn_lrelu(src_ref, ci):
        """3x3x3 conv as 3 big-K (K=9*C=72) MXU matmuls over in-VMEM stacked taps,
        then folded-BN shift + LeakyReLU(0.2).  Returns (C, Vp) f32."""
        x = src_ref[...]                                        # (C, Mg) f32, one load
        acc = jnp.zeros((C, Vp), jnp.float32)
        for kd in range(3):
            base = g0 + kd * HpWp
            taps = jnp.concatenate(
                [x[:, base + kh * Wp + kw: base + kh * Wp + kw + Vp]
                 for kh in range(3) for kw in range(3)], axis=0)        # (9C, Vp) f32
            acc = acc + jnp.dot(w_ref[ci * 3 + kd], taps.astype(jnp.bfloat16),
                                preferred_element_type=jnp.float32)     # (C, Vp) MXU
        y = acc + sh_ref[ci]                                    # BN scale folded into w
        return jnp.where(y > 0.0, y, 0.2 * y)                   # LeakyReLU(0.2)

    states = [s1_ref, s0_ref] + list(state_scratch)
    ci = 0
    for i in range(steps):
        s_val = jnp.zeros((C, Vp), jnp.float32)
        for ind in (2 * i, 2 * i + 1):
            name, idx = op_names[ind]
            if name == "skip_connect":
                s_val = s_val + vol(states[idx])                # fused identity branch
            elif name == "conv_3x3x3":
                s_val = s_val + conv3x3x3_bn_lrelu(states[idx], ci)
                ci += 1
            else:
                # TODO(synk): sep_conv / dil_conv OPS variants are not implemented.
                raise NotImplementedError(name)
        # Zero the (d,h,w) halo so later convs / skips read exact zero padding.
        states[2 + i][:, G:G + Vp] = jnp.where(interior, s_val, 0.0)

    # concat(states[-steps:], channel axis) + conv_end 1x1x1 (24->32) + BN + LReLU,
    # as ONE (32,24)@(24,Vp) matmul — the 24-channel concat never leaves VMEM.
    cat = jnp.concatenate([vol(states[-steps + j]) for j in range(steps)], axis=0)
    z = jnp.dot(we_ref[...], cat.astype(jnp.bfloat16),
                preferred_element_type=jnp.float32)             # (32, Vp)
    z = z + esh_ref[...]
    o_ref[...] = jnp.where(z > 0.0, z, 0.2 * z)


# =============================================================================
# Wrapper: layout prep (once per forward) + single pallas_call + halo crop.
# =============================================================================
def fix_cell_forward(params, s0, s1, drop_prob=0.0):
    """FixCell.forward (eval mode).  s0, s1: NCDHW (B,C,D,H,W) f32 -> (B,32,D,H,W) f32."""
    del drop_prob                       # drop_path is training-only; eval mode skips it
    op_names = GENOTYPE[0]
    steps = len(op_names) // 2
    B, C, D, H, W = s0.shape
    Dp, Hp, Wp = D + 2, H + 2, W + 2
    HpWp = Hp * Wp
    Vp = Dp * HpWp                      # flattened padded volume on lanes
    G = 128                             # lane guard (>= HpWp + Wp + 1), 128-aligned stores
    assert G >= HpWp + Wp + 1
    Mg = Vp + 2 * G

    def to_slab(x):                     # NCDHW -> (B, C, Mg) f32, zero halo + guards
        xp = jnp.pad(x, ((0, 0), (0, 0), (1, 1), (1, 1), (1, 1)))
        return jnp.pad(xp.reshape(B, C, Vp), ((0, 0), (0, 0), (G, G)))

    s0s, s1s = to_slab(s0), to_slab(s1)

    # Fold BN scale into the conv weights; arrange per (op, kd) as (Cout, 9*Cin) so the K
    # ordering matches the in-kernel tap stacking ((kh, kw) blocks of Cin rows).
    conv_w, conv_sh = [], []
    for (name, _), p in zip(op_names, params["ops"]):
        if name != "conv_3x3x3":
            continue
        scale, shift = _fold_bn(p["gamma"], p["beta"], p["mean"], p["var"])
        wt = jnp.transpose(p["w"], (0, 4, 1, 2, 3)).reshape(3, C, 9 * C)  # (kd,cout,kh*kw*cin)
        conv_w.append((wt * scale[None, :, None]).astype(jnp.bfloat16))
        conv_sh.append(shift.astype(jnp.float32))
    w_all = jnp.concatenate(conv_w, axis=0)               # (n_conv*3, C, 9C) bf16
    sh_all = jnp.stack(conv_sh, axis=0)[..., None]        # (n_conv, C, 1)    f32
    n_conv = len(conv_w)

    pe = params["conv_end"]
    Cout = pe["w"].shape[1]                               # 32
    e_scale, e_shift = _fold_bn(pe["gamma"], pe["beta"], pe["mean"], pe["var"])
    we = (pe["w"] * e_scale[None, :]).T.astype(jnp.bfloat16)      # (32, steps*C)
    esh = e_shift.astype(jnp.float32)[:, None]                    # (32, 1)

    # Interior (d,h,w) mask over the flattened padded volume.
    dd = jnp.arange(Dp)[:, None, None]
    hh = jnp.arange(Hp)[None, :, None]
    ww = jnp.arange(Wp)[None, None, :]
    interior = (dd >= 1) & (dd <= D) & (hh >= 1) & (hh <= H) & (ww >= 1) & (ww <= W)
    mask = interior.astype(jnp.float32).reshape(1, Vp)

    kernel = functools.partial(_fixcell_kernel, op_names=op_names, C=C,
                               Vp=Vp, G=G, HpWp=HpWp, Wp=Wp)

    flops = B * (2 * n_conv * C * Vp * 27 * C + 2 * Cout * Vp * steps * C)
    bytes_accessed = (2 * B * C * Mg * 4 + B * Cout * Vp * 4
                      + w_all.size * 2 + we.size * 2 + mask.size * 4)

    out = pl.pallas_call(
        kernel,
        out_shape=jax.ShapeDtypeStruct((B, Cout, Vp), jnp.float32),
        grid=(B,),
        in_specs=[
            pl.BlockSpec((None, C, Mg), lambda b: (b, 0, 0)),          # s1 slab
            pl.BlockSpec((None, C, Mg), lambda b: (b, 0, 0)),          # s0 slab
            pl.BlockSpec((n_conv * 3, C, 9 * C), lambda b: (0, 0, 0)),  # conv weights
            pl.BlockSpec((n_conv, C, 1), lambda b: (0, 0, 0)),          # conv BN shifts
            pl.BlockSpec((Cout, steps * C), lambda b: (0, 0)),          # conv_end weight
            pl.BlockSpec((Cout, 1), lambda b: (0, 0)),                  # conv_end BN shift
            pl.BlockSpec((1, Vp), lambda b: (0, 0)),                    # interior mask
        ],
        out_specs=pl.BlockSpec((None, Cout, Vp), lambda b: (b, 0, 0)),
        scratch_shapes=[pltpu.VMEM((C, Mg), jnp.float32) for _ in range(steps)],
        compiler_params=pltpu.CompilerParams(
            dimension_semantics=("parallel",),       # v7x: one batch per TensorCore
            vmem_limit_bytes=32 * 1024 * 1024),
        cost_estimate=pl.CostEstimate(flops=flops, transcendentals=0,
                                      bytes_accessed=bytes_accessed),
    )(s1s, s0s, w_all, sh_all, we, esh, mask)

    # Crop the halo: (B, 32, Vp) -> (B, 32, D, H, W)  (layout is already NCDHW).
    return out.reshape(B, Cout, Dp, Hp, Wp)[:, :, 1:D + 1, 1:H + 1, 1:W + 1]


# =============================================================================
# Genotype / parameters (shapes from FixCell.__init__)
# =============================================================================
def init_params(key, C, op_names):
    params = {"ops": []}
    for i, (name, _) in enumerate(op_names):
        if name == "conv_3x3x3":
            k = jax.random.fold_in(key, i)
            kw_, kg, kb, km, kv = jax.random.split(k, 5)
            p = dict(
                w=0.1 * jax.random.normal(kw_, (3, 3, 3, C, C), jnp.float32),
                gamma=1.0 + 0.1 * jax.random.normal(kg, (C,), jnp.float32),
                beta=0.1 * jax.random.normal(kb, (C,), jnp.float32),
                mean=0.1 * jax.random.normal(km, (C,), jnp.float32),
                var=jax.random.uniform(kv, (C,), jnp.float32, 0.5, 1.5),
            )
        else:
            p = None
        params["ops"].append(p)
    # conv_end: Conv3d(24, 32, 1x1x1, bias=False) + BatchNorm3d(32) + LeakyReLU(0.2)
    ke = jax.random.fold_in(key, 1000)
    kw_, kg, kb, km, kv = jax.random.split(ke, 5)
    params["conv_end"] = dict(
        w=0.1 * jax.random.normal(kw_, (24, 32), jnp.float32),
        gamma=1.0 + 0.1 * jax.random.normal(kg, (32,), jnp.float32),
        beta=0.1 * jax.random.normal(kb, (32,), jnp.float32),
        mean=0.1 * jax.random.normal(km, (32,), jnp.float32),
        var=jax.random.uniform(kv, (32,), jnp.float32, 0.5, 1.5),
    )
    return params


# =============================================================================
# Pure-JAX reference (mirrors the kernel's bf16 quantization points) for the check
# =============================================================================
def _ref_forward(params, s0, s1):
    bf = jnp.bfloat16
    op_names = GENOTYPE[0]
    steps = len(op_names) // 2

    def conv_bn_lrelu(x_f32, p):
        scale, shift = _fold_bn(p["gamma"], p["beta"], p["mean"], p["var"])
        w = (p["w"] * scale).astype(bf)                            # scale folded, then bf16
        x = jnp.transpose(x_f32, (0, 2, 3, 4, 1)).astype(bf)       # NDHWC bf16
        y = lax.conv_general_dilated(
            x, w, (1, 1, 1), "SAME",
            dimension_numbers=("NDHWC", "DHWIO", "NDHWC"),
            preferred_element_type=jnp.float32)
        y = y + shift
        y = jnp.where(y > 0, y, 0.2 * y)
        return jnp.transpose(y, (0, 4, 1, 2, 3))                   # f32 NCDHW

    states = [s1, s0]                                              # f32
    for i in range(steps):
        parts = []
        for ind in (2 * i, 2 * i + 1):
            name, idx = op_names[ind]
            if name == "skip_connect":
                parts.append(states[idx])
            else:
                parts.append(conv_bn_lrelu(states[idx], params["ops"][ind]))
        states.append(parts[0] + parts[1])

    cat = jnp.concatenate(states[-steps:], axis=1)                 # (B, 24, D, H, W) f32
    B, Cc, D, H, W = cat.shape
    pe = params["conv_end"]
    scale, shift = _fold_bn(pe["gamma"], pe["beta"], pe["mean"], pe["var"])
    we = (pe["w"] * scale[None, :]).astype(bf)                     # (24, 32)
    x2 = jnp.transpose(cat, (0, 2, 3, 4, 1)).reshape(-1, Cc).astype(bf)
    y = jnp.dot(x2, we, preferred_element_type=jnp.float32)
    y = y + shift
    y = jnp.where(y > 0, y, 0.2 * y)
    return jnp.transpose(y.reshape(B, D, H, W, -1), (0, 4, 1, 2, 3))


if __name__ == "__main__":
    key = jax.random.PRNGKey(0)
    # steps = 3, C = 8  ->  concat channels = 24, matching Conv3d(24, 32) in conv_end.
    B, C, D, H, W = 2, 8, 4, 8, 8
    k0, k1, kp = jax.random.split(key, 3)
    s0 = jax.random.normal(k0, (B, C, D, H, W), jnp.float32)
    s1 = jax.random.normal(k1, (B, C, D, H, W), jnp.float32)
    params = init_params(kp, C, GENOTYPE[0])

    fwd = jax.jit(functools.partial(fix_cell_forward, params))
    out = jax.block_until_ready(fwd(s0, s1))
    assert out.shape == (B, 32, D, H, W), out.shape

    ref = _ref_forward(params, s0, s1)
    err = float(jnp.max(jnp.abs(out - ref)))
    assert jnp.allclose(out, ref, rtol=2e-2, atol=2e-2), f"max abs err = {err}"

    print("KERNEL_OK")
</pallas_src>

<mosaic_0001>
module attributes {stable_mosaic.version = 11 : i64} {
  func.func @_fixcell_kernel(%arg0: i32, %arg1: memref<1x8x856xf32, #tpu.memory_space<vmem>>, %arg2: memref<1x8x856xf32, #tpu.memory_space<vmem>>, %arg3: memref<9x8x72xbf16, #tpu.memory_space<vmem>>, %arg4: memref<3x8x1xf32, #tpu.memory_space<vmem>>, %arg5: memref<32x24xbf16, #tpu.memory_space<vmem>>, %arg6: memref<32x1xf32, #tpu.memory_space<vmem>>, %arg7: memref<1x600xf32, #tpu.memory_space<vmem>>, %arg8: memref<1x32x600xf32, #tpu.memory_space<vmem>>, %arg9: memref<8x856xf32, #tpu.memory_space<vmem>>, %arg10: memref<8x856xf32, #tpu.memory_space<vmem>>, %arg11: memref<8x856xf32, #tpu.memory_space<vmem>>) attributes {dimension_semantics = [#tpu.dimension_semantics<parallel>], iteration_bounds = array<i64: 2>, scalar_prefetch = 0 : i64, scratch_operands = 3 : i64, tpu.core_type = #tpu.core_type<tc>, window_params = [{transform_indices = @transform_0, window_bounds = array<i64: 1, 8, 856>}, {transform_indices = @transform_1, window_bounds = array<i64: 1, 8, 856>}, {pipeline_mode = #tpu.pipeline_mode<synchronous>, transform_indices = @transform_2, window_bounds = array<i64: 9, 8, 72>}, {pipeline_mode = #tpu.pipeline_mode<synchronous>, transform_indices = @transform_3, window_bounds = array<i64: 3, 8, 1>}, {pipeline_mode = #tpu.pipeline_mode<synchronous>, transform_indices = @transform_4, window_bounds = array<i64: 32, 24>}, {pipeline_mode = #tpu.pipeline_mode<synchronous>, transform_indices = @transform_5, window_bounds = array<i64: 32, 1>}, {pipeline_mode = #tpu.pipeline_mode<synchronous>, transform_indices = @transform_6, window_bounds = array<i64: 1, 600>}, {transform_indices = @transform_7, window_bounds = array<i64: 1, 32, 600>}]} {
    %cst = arith.constant 0.000000e+00 : f32
    %0 = vector.broadcast %cst : f32 to vector<8x856xf32>
    %c0 = arith.constant 0 : index
    %c0_0 = arith.constant 0 : index
    %1 = vector.load %arg9[%c0, %c0_0] : memref<8x856xf32, #tpu.memory_space<vmem>>, vector<8x856xf32>
    tpu.vector_store %arg9[%c0, %c0_0], %0 {strides = array<i32>} : memref<8x856xf32, #tpu.memory_space<vmem>>, vector<8x856xf32>,
    %cst_1 = arith.constant 0.000000e+00 : f32
    %2 = vector.broadcast %cst_1 : f32 to vector<8x856xf32>
    %c0_2 = arith.constant 0 : index
    %c0_3 = arith.constant 0 : index
    %3 = vector.load %arg10[%c0_2, %c0_3] : memref<8x856xf32, #tpu.memory_space<vmem>>, vector<8x856xf32>
    tpu.vector_store %arg10[%c0_2, %c0_3], %2 {strides = array<i32>} : memref<8x856xf32, #tpu.memory_space<vmem>>, vector<8x856xf32>,
    %cst_4 = arith.constant 0.000000e+00 : f32
    %4 = vector.broadcast %cst_4 : f32 to vector<8x856xf32>
    %c0_5 = arith.constant 0 : index
    %c0_6 = arith.constant 0 : index
    %5 = vector.load %arg11[%c0_5, %c0_6] : memref<8x856xf32, #tpu.memory_space<vmem>>, vector<8x856xf32>
    tpu.vector_store %arg11[%c0_5, %c0_6], %4 {strides = array<i32>} : memref<8x856xf32, #tpu.memory_space<vmem>>, vector<8x856xf32>,
    %c0_7 = arith.constant 0 : index
    %c0_8 = arith.constant 0 : index
    %6 = vector.load %arg7[%c0_7, %c0_8] : memref<1x600xf32, #tpu.memory_space<vmem>>, vector<1x600xf32>
    %cst_9 = arith.constant 5.000000e-01 : f32
    %7 = vector.broadcast %cst_9 : f32 to vector<1x600xf32>
    %8 = arith.cmpf ogt, %6, %7 : vector<1x600xf32>
    %cst_10 = arith.constant 0.000000e+00 : f32
    %9 = vector.broadcast %cst_10 : f32 to vector<8x600xf32>
    %c0_11 = arith.constant 0 : index
    %c0_12 = arith.constant 0 : index
    %c0_13 = arith.constant 0 : index
    %10 = vector.load %arg1[%c0_11, %c0_12, %c0_13] : memref<1x8x856xf32, #tpu.memory_space<vmem>>, vector<1x8x856xf32>
    %11 = vector.shape_cast %10 : vector<1x8x856xf32> to vector<8x856xf32>
    %cst_14 = arith.constant 0.000000e+00 : f32
    %12 = vector.broadcast %cst_14 : f32 to vector<8x600xf32>
    %13 = vector.extract_strided_slice %11 {offsets = [0, 17], sizes = [8, 600], strides = [1, 1]} : vector<8x856xf32> to vector<8x600xf32>
    %14 = vector.extract_strided_slice %11 {offsets = [0, 18], sizes = [8, 600], strides = [1, 1]} : vector<8x856xf32> to vector<8x600xf32>
    %15 = vector.extract_strided_slice %11 {offsets = [0, 19], sizes = [8, 600], strides = [1, 1]} : vector<8x856xf32> to vector<8x600xf32>
    %16 = vector.extract_strided_slice %11 {offsets = [0, 27], sizes = [8, 600], strides = [1, 1]} : vector<8x856xf32> to vector<8x600xf32>
    %17 = vector.extract_strided_slice %11 {offsets = [0, 28], sizes = [8, 600], strides = [1, 1]} : vector<8x856xf32> to vector<8x600xf32>
    %18 = vector.extract_strided_slice %11 {offsets = [0, 29], sizes = [8, 600], strides = [1, 1]} : vector<8x856xf32> to vector<8x600xf32>
    %19 = vector.extract_strided_slice %11 {offsets = [0, 37], sizes = [8, 600], strides = [1, 1]} : vector<8x856xf32> to vector<8x600xf32>
    %20 = vector.extract_strided_slice %11 {offsets = [0, 38], sizes = [8, 600], strides = [1, 1]} : vector<8x856xf32> to vector<8x600xf32>
    %21 = vector.extract_strided_slice %11 {offsets = [0, 39], sizes = [8, 600], strides = [1, 1]} : vector<8x856xf32> to vector<8x600xf32>
    %22 = tpu.concatenate %13, %14, %15, %16, %17, %18, %19, %20, %21 in 0 : vector<8x600xf32>, vector<8x600xf32>, vector<8x600xf32>, vector<8x600xf32>, vector<8x600xf32>, vector<8x600xf32>, vector<8x600xf32>, vector<8x600xf32>, vector<8x600xf32> -> vector<72x600xf32>
    %c0_15 = arith.constant 0 : index
    %c0_16 = arith.constant 0 : index
    %c0_17 = arith.constant 0 : index
    %23 = vector.load %arg3[%c0_15, %c0_16, %c0_17] : memref<9x8x72xbf16, #tpu.memory_space<vmem>>, vector<1x8x72xbf16>
    %24 = vector.shape_cast %23 : vector<1x8x72xbf16> to vector<8x72xbf16>
    %25 = arith.truncf %22 : vector<72x600xf32> to vector<72x600xbf16>
    %cst_18 = arith.constant dense<0.000000e+00> : vector<8x600xf32>
    %26 = tpu.matmul %24, %25, %cst_18 {dimension_numbers = #tpu.dot_dimension_numbers<[1], [0], [0], [1], [0, 0, 1, 1], [], []>} : vector<8x72xbf16>, vector<72x600xbf16>, vector<8x600xf32> -> vector<8x600xf32>
    %27 = arith.addf %12, %26 : vector<8x600xf32>
    %28 = vector.extract_strided_slice %11 {offsets = [0, 117], sizes = [8, 600], strides = [1, 1]} : vector<8x856xf32> to vector<8x600xf32>
    %29 = vector.extract_strided_slice %11 {offsets = [0, 118], sizes = [8, 600], strides = [1, 1]} : vector<8x856xf32> to vector<8x600xf32>
    %30 = vector.extract_strided_slice %11 {offsets = [0, 119], sizes = [8, 600], strides = [1, 1]} : vector<8x856xf32> to vector<8x600xf32>
    %31 = vector.extract_strided_slice %11 {offsets = [0, 127], sizes = [8, 600], strides = [1, 1]} : vector<8x856xf32> to vector<8x600xf32>
    %32 = vector.extract_strided_slice %11 {offsets = [0, 128], sizes = [8, 600], strides = [1, 1]} : vector<8x856xf32> to vector<8x600xf32>
    %33 = vector.extract_strided_slice %11 {offsets = [0, 129], sizes = [8, 600], strides = [1, 1]} : vector<8x856xf32> to vector<8x600xf32>
    %34 = vector.extract_strided_slice %11 {offsets = [0, 137], sizes = [8, 600], strides = [1, 1]} : vector<8x856xf32> to vector<8x600xf32>
    %35 = vector.extract_strided_slice %11 {offsets = [0, 138], sizes = [8, 600], strides = [1, 1]} : vector<8x856xf32> to vector<8x600xf32>
    %36 = vector.extract_strided_slice %11 {offsets = [0, 139], sizes = [8, 600], strides = [1, 1]} : vector<8x856xf32> to vector<8x600xf32>
    %37 = tpu.concatenate %28, %29, %30, %31, %32, %33, %34, %35, %36 in 0 : vector<8x600xf32>, vector<8x600xf32>, vector<8x600xf32>, vector<8x600xf32>, vector<8x600xf32>, vector<8x600xf32>, vector<8x600xf32>, vector<8x600xf32>, vector<8x600xf32> -> vector<72x600xf32>
    %c1 = arith.constant 1 : index
    %c0_19 = arith.constant 0 : index
    %c0_20 = arith.constant 0 : index
    %38 = vector.load %arg3[%c1, %c0_19, %c0_20] : memref<9x8x72xbf16, #tpu.memory_space<vmem>>, vector<1x8x72xbf16>
    %39 = vector.shape_cast %38 : vector<1x8x72xbf16> to vector<8x72xbf16>
    %40 = arith.truncf %37 : vector<72x600xf32> to vector<72x600xbf16>
    %cst_21 = arith.constant dense<0.000000e+00> : vector<8x600xf32>
    %41 = tpu.matmul %39, %40, %cst_21 {dimension_numbers = #tpu.dot_dimension_numbers<[1], [0], [0], [1], [0, 0, 1, 1], [], []>} : vector<8x72xbf16>, vector<72x600xbf16>, vector<8x600xf32> -> vector<8x600xf32>
    %42 = arith.addf %27, %41 : vector<8x600xf32>
    %43 = vector.extract_strided_slice %11 {offsets = [0, 217], sizes = [8, 600], strides = [1, 1]} : vector<8x856xf32> to vector<8x600xf32>
    %44 = vector.extract_strided_slice %11 {offsets = [0, 218], sizes = [8, 600], strides = [1, 1]} : vector<8x856xf32> to vector<8x600xf32>
    %45 = vector.extract_strided_slice %11 {offsets = [0, 219], sizes = [8, 600], strides = [1, 1]} : vector<8x856xf32> to vector<8x600xf32>
    %46 = vector.extract_strided_slice %11 {offsets = [0, 227], sizes = [8, 600], strides = [1, 1]} : vector<8x856xf32> to vector<8x600xf32>
    %47 = vector.extract_strided_slice %11 {offsets = [0, 228], sizes = [8, 600], strides = [1, 1]} : vector<8x856xf32> to vector<8x600xf32>
    %48 = vector.extract_strided_slice %11 {offsets = [0, 229], sizes = [8, 600], strides = [1, 1]} : vector<8x856xf32> to vector<8x600xf32>
    %49 = vector.extract_strided_slice %11 {offsets = [0, 237], sizes = [8, 600], strides = [1, 1]} : vector<8x856xf32> to vector<8x600xf32>
    %50 = vector.extract_strided_slice %11 {offsets = [0, 238], sizes = [8, 600], strides = [1, 1]} : vector<8x856xf32> to vector<8x600xf32>
    %51 = vector.extract_strided_slice %11 {offsets = [0, 239], sizes = [8, 600], strides = [1, 1]} : vector<8x856xf32> to vector<8x600xf32>
    %52 = tpu.concatenate %43, %44, %45, %46, %47, %48, %49, %50, %51 in 0 : vector<8x600xf32>, vector<8x600xf32>, vector<8x600xf32>, vector<8x600xf32>, vector<8x600xf32>, vector<8x600xf32>, vector<8x600xf32>, vector<8x600xf32>, vector<8x600xf32> -> vector<72x600xf32>
    %c2 = arith.constant 2 : index
    %c0_22 = arith.constant 0 : index
    %c0_23 = arith.constant 0 : index
    %53 = vector.load %arg3[%c2, %c0_22, %c0_23] : memref<9x8x72xbf16, #tpu.memory_space<vmem>>, vector<1x8x72xbf16>
    %54 = vector.shape_cast %53 : vector<1x8x72xbf16> to vector<8x72xbf16>
    %55 = arith.truncf %52 : vector<72x600xf32> to vector<72x600xbf16>
    %cst_24 = arith.constant dense<0.000000e+00> : vector<8x600xf32>
    %56 = tpu.matmul %54, %55, %cst_24 {dimension_numbers = #tpu.dot_dimension_numbers<[1], [0], [0], [1], [0, 0, 1, 1], [], []>} : vector<8x72xbf16>, vector<72x600xbf16>, vector<8x600xf32> -> vector<8x600xf32>
    %57 = arith.addf %42, %56 : vector<8x600xf32>
    %c0_25 = arith.constant 0 : index
    %c0_26 = arith.constant 0 : index
    %c0_27 = arith.constant 0 : index
    %58 = vector.load %arg4[%c0_25, %c0_26, %c0_27] : memref<3x8x1xf32, #tpu.memory_space<vmem>>, vector<1x8x1xf32>
    %59 = vector.shape_cast %58 : vector<1x8x1xf32> to vector<8x1xf32>
    %60 = vector.broadcast %59 : vector<8x1xf32> to vector<8x600xf32>
    %61 = arith.addf %57, %60 : vector<8x600xf32>
    %cst_28 = arith.constant 0.000000e+00 : f32
    %62 = vector.broadcast %cst_28 : f32 to vector<8x600xf32>
    %63 = arith.cmpf ogt, %61, %62 : vector<8x600xf32>
    %cst_29 = arith.constant 2.000000e-01 : f32
    %64 = vector.broadcast %cst_29 : f32 to vector<8x600xf32>
    %65 = arith.mulf %64, %61 : vector<8x600xf32>
    %66 = arith.select %63, %61, %65 : vector<8x600xi1>, vector<8x600xf32>
    %67 = arith.addf %9, %66 : vector<8x600xf32>
    %c0_30 = arith.constant 0 : index
    %c0_31 = arith.constant 0 : index
    %c128 = arith.constant 128 : index
    %68 = vector.load %arg2[%c0_30, %c0_31, %c128] : memref<1x8x856xf32, #tpu.memory_space<vmem>>, vector<1x8x600xf32>
    %69 = vector.shape_cast %68 : vector<1x8x600xf32> to vector<8x600xf32>
    %70 = arith.addf %67, %69 : vector<8x600xf32>
    %cst_32 = arith.constant 0.000000e+00 : f32
    %71 = vector.shape_cast %8 : vector<1x600xi1> to vector<1x600xi1>
    %72 = vector.broadcast %71 : vector<1x600xi1> to vector<8x600xi1>
    %73 = vector.broadcast %cst_32 : f32 to vector<8x600xf32>
    %74 = arith.select %72, %70, %73 : vector<8x600xi1>, vector<8x600xf32>
    %c0_33 = arith.constant 0 : index
    %c128_34 = arith.constant 128 : index
    %75 = vector.load %arg9[%c0_33, %c128_34] : memref<8x856xf32, #tpu.memory_space<vmem>>, vector<8x600xf32>
    tpu.vector_store %arg9[%c0_33, %c128_34], %74 {strides = array<i32>} : memref<8x856xf32, #tpu.memory_space<vmem>>, vector<8x600xf32>,
    %cst_35 = arith.constant 0.000000e+00 : f32
    %76 = vector.broadcast %cst_35 : f32 to vector<8x600xf32>
    %c0_36 = arith.constant 0 : index
    %c0_37 = arith.constant 0 : index
    %77 = vector.load %arg9[%c0_36, %c0_37] : memref<8x856xf32, #tpu.memory_space<vmem>>, vector<8x856xf32>
    %cst_38 = arith.constant 0.000000e+00 : f32
    %78 = vector.broadcast %cst_38 : f32 to vector<8x600xf32>
    %79 = vector.extract_strided_slice %77 {offsets = [0, 17], sizes = [8, 600], strides = [1, 1]} : vector<8x856xf32> to vector<8x600xf32>
    %80 = vector.extract_strided_slice %77 {offsets = [0, 18], sizes = [8, 600], strides = [1, 1]} : vector<8x856xf32> to vector<8x600xf32>
    %81 = vector.extract_strided_slice %77 {offsets = [0, 19], sizes = [8, 600], strides = [1, 1]} : vector<8x856xf32> to vector<8x600xf32>
    %82 = vector.extract_strided_slice %77 {offsets = [0, 27], sizes = [8, 600], strides = [1, 1]} : vector<8x856xf32> to vector<8x600xf32>
    %83 = vector.extract_strided_slice %77 {offsets = [0, 28], sizes = [8, 600], strides = [1, 1]} : vector<8x856xf32> to vector<8x600xf32>
    %84 = vector.extract_strided_slice %77 {offsets = [0, 29], sizes = [8, 600], strides = [1, 1]} : vector<8x856xf32> to vector<8x600xf32>
    %85 = vector.extract_strided_slice %77 {offsets = [0, 37], sizes = [8, 600], strides = [1, 1]} : vector<8x856xf32> to vector<8x600xf32>
    %86 = vector.extract_strided_slice %77 {offsets = [0, 38], sizes = [8, 600], strides = [1, 1]} : vector<8x856xf32> to vector<8x600xf32>
    %87 = vector.extract_strided_slice %77 {offsets = [0, 39], sizes = [8, 600], strides = [1, 1]} : vector<8x856xf32> to vector<8x600xf32>
    %88 = tpu.concatenate %79, %80, %81, %82, %83, %84, %85, %86, %87 in 0 : vector<8x600xf32>, vector<8x600xf32>, vector<8x600xf32>, vector<8x600xf32>, vector<8x600xf32>, vector<8x600xf32>, vector<8x600xf32>, vector<8x600xf32>, vector<8x600xf32> -> vector<72x600xf32>
    %c3 = arith.constant 3 : index
    %c0_39 = arith.constant 0 : index
    %c0_40 = arith.constant 0 : index
    %89 = vector.load %arg3[%c3, %c0_39, %c0_40] : memref<9x8x72xbf16, #tpu.memory_space<vmem>>, vector<1x8x72xbf16>
    %90 = vector.shape_cast %89 : vector<1x8x72xbf16> to vector<8x72xbf16>
    %91 = arith.truncf %88 : vector<72x600xf32> to vector<72x600xbf16>
    %cst_41 = arith.constant dense<0.000000e+00> : vector<8x600xf32>
    %92 = tpu.matmul %90, %91, %cst_41 {dimension_numbers = #tpu.dot_dimension_numbers<[1], [0], [0], [1], [0, 0, 1, 1], [], []>} : vector<8x72xbf16>, vector<72x600xbf16>, vector<8x600xf32> -> vector<8x600xf32>
    %93 = arith.addf %78, %92 : vector<8x600xf32>
    %94 = vector.extract_strided_slice %77 {offsets = [0, 117], sizes = [8, 600], strides = [1, 1]} : vector<8x856xf32> to vector<8x600xf32>
    %95 = vector.extract_strided_slice %77 {offsets = [0, 118], sizes = [8, 600], strides = [1, 1]} : vector<8x856xf32> to vector<8x600xf32>
    %96 = vector.extract_strided_slice %77 {offsets = [0, 119], sizes = [8, 600], strides = [1, 1]} : vector<8x856xf32> to vector<8x600xf32>
    %97 = vector.extract_strided_slice %77 {offsets = [0, 127], sizes = [8, 600], strides = [1, 1]} : vector<8x856xf32> to vector<8x600xf32>
    %98 = vector.extract_strided_slice %77 {offsets = [0, 128], sizes = [8, 600], strides = [1, 1]} : vector<8x856xf32> to vector<8x600xf32>
    %99 = vector.extract_strided_slice %77 {offsets = [0, 129], sizes = [8, 600], strides = [1, 1]} : vector<8x856xf32> to vector<8x600xf32>
    %100 = vector.extract_strided_slice %77 {offsets = [0, 137], sizes = [8, 600], strides = [1, 1]} : vector<8x856xf32> to vector<8x600xf32>
    %101 = vector.extract_strided_slice %77 {offsets = [0, 138], sizes = [8, 600], strides = [1, 1]} : vector<8x856xf32> to vector<8x600xf32>
    %102 = vector.extract_strided_slice %77 {offsets = [0, 139], sizes = [8, 600], strides = [1, 1]} : vector<8x856xf32> to vector<8x600xf32>
    %103 = tpu.concatenate %94, %95, %96, %97, %98, %99, %100, %101, %102 in 0 : vector<8x600xf32>, vector<8x600xf32>, vector<8x600xf32>, vector<8x600xf32>, vector<8x600xf32>, vector<8x600xf32>, vector<8x600xf32>, vector<8x600xf32>, vector<8x600xf32> -> vector<72x600xf32>
    %c4 = arith.constant 4 : index
    %c0_42 = arith.constant 0 : index
    %c0_43 = arith.constant 0 : index
    %104 = vector.load %arg3[%c4, %c0_42, %c0_43] : memref<9x8x72xbf16, #tpu.memory_space<vmem>>, vector<1x8x72xbf16>
    %105 = vector.shape_cast %104 : vector<1x8x72xbf16> to vector<8x72xbf16>
    %106 = arith.truncf %103 : vector<72x600xf32> to vector<72x600xbf16>
    %cst_44 = arith.constant dense<0.000000e+00> : vector<8x600xf32>
    %107 = tpu.matmul %105, %106, %cst_44 {dimension_numbers = #tpu.dot_dimension_numbers<[1], [0], [0], [1], [0, 0, 1, 1], [], []>} : vector<8x72xbf16>, vector<72x600xbf16>, vector<8x600xf32> -> vector<8x600xf32>
    %108 = arith.addf %93, %107 : vector<8x600xf32>
    %109 = vector.extract_strided_slice %77 {offsets = [0, 217], sizes = [8, 600], strides = [1, 1]} : vector<8x856xf32> to vector<8x600xf32>
    %110 = vector.extract_strided_slice %77 {offsets = [0, 218], sizes = [8, 600], strides = [1, 1]} : vector<8x856xf32> to vector<8x600xf32>
    %111 = vector.extract_strided_slice %77 {offsets = [0, 219], sizes = [8, 600], strides = [1, 1]} : vector<8x856xf32> to vector<8x600xf32>
    %112 = vector.extract_strided_slice %77 {offsets = [0, 227], sizes = [8, 600], strides = [1, 1]} : vector<8x856xf32> to vector<8x600xf32>
    %113 = vector.extract_strided_slice %77 {offsets = [0, 228], sizes = [8, 600], strides = [1, 1]} : vector<8x856xf32> to vector<8x600xf32>
    %114 = vector.extract_strided_slice %77 {offsets = [0, 229], sizes = [8, 600], strides = [1, 1]} : vector<8x856xf32> to vector<8x600xf32>
    %115 = vector.extract_strided_slice %77 {offsets = [0, 237], sizes = [8, 600], strides = [1, 1]} : vector<8x856xf32> to vector<8x600xf32>
    %116 = vector.extract_strided_slice %77 {offsets = [0, 238], sizes = [8, 600], strides = [1, 1]} : vector<8x856xf32> to vector<8x600xf32>
    %117 = vector.extract_strided_slice %77 {offsets = [0, 239], sizes = [8, 600], strides = [1, 1]} : vector<8x856xf32> to vector<8x600xf32>
    %118 = tpu.concatenate %109, %110, %111, %112, %113, %114, %115, %116, %117 in 0 : vector<8x600xf32>, vector<8x600xf32>, vector<8x600xf32>, vector<8x600xf32>, vector<8x600xf32>, vector<8x600xf32>, vector<8x600xf32>, vector<8x600xf32>, vector<8x600xf32> -> vector<72x600xf32>
    %c5 = arith.constant 5 : index
    %c0_45 = arith.constant 0 : index
    %c0_46 = arith.constant 0 : index
    %119 = vector.load %arg3[%c5, %c0_45, %c0_46] : memref<9x8x72xbf16, #tpu.memory_space<vmem>>, vector<1x8x72xbf16>
    %120 = vector.shape_cast %119 : vector<1x8x72xbf16> to vector<8x72xbf16>
    %121 = arith.truncf %118 : vector<72x600xf32> to vector<72x600xbf16>
    %cst_47 = arith.constant dense<0.000000e+00> : vector<8x600xf32>
    %122 = tpu.matmul %120, %121, %cst_47 {dimension_numbers = #tpu.dot_dimension_numbers<[1], [0], [0], [1], [0, 0, 1, 1], [], []>} : vector<8x72xbf16>, vector<72x600xbf16>, vector<8x600xf32> -> vector<8x600xf32>
    %123 = arith.addf %108, %122 : vector<8x600xf32>
    %c1_48 = arith.constant 1 : index
    %c0_49 = arith.constant 0 : index
    %c0_50 = arith.constant 0 : index
    %124 = vector.load %arg4[%c1_48, %c0_49, %c0_50] : memref<3x8x1xf32, #tpu.memory_space<vmem>>, vector<1x8x1xf32>
    %125 = vector.shape_cast %124 : vector<1x8x1xf32> to vector<8x1xf32>
    %126 = vector.broadcast %125 : vector<8x1xf32> to vector<8x600xf32>
    %127 = arith.addf %123, %126 : vector<8x600xf32>
    %cst_51 = arith.constant 0.000000e+00 : f32
    %128 = vector.broadcast %cst_51 : f32 to vector<8x600xf32>
    %129 = arith.cmpf ogt, %127, %128 : vector<8x600xf32>
    %cst_52 = arith.constant 2.000000e-01 : f32
    %130 = vector.broadcast %cst_52 : f32 to vector<8x600xf32>
    %131 = arith.mulf %130, %127 : vector<8x600xf32>
    %132 = arith.select %129, %127, %131 : vector<8x600xi1>, vector<8x600xf32>
    %133 = arith.addf %76, %132 : vector<8x600xf32>
    %c0_53 = arith.constant 0 : index
    %c0_54 = arith.constant 0 : index
    %c128_55 = arith.constant 128 : index
    %134 = vector.load %arg1[%c0_53, %c0_54, %c128_55] : memref<1x8x856xf32, #tpu.memory_space<vmem>>, vector<1x8x600xf32>
    %135 = vector.shape_cast %134 : vector<1x8x600xf32> to vector<8x600xf32>
    %136 = arith.addf %133, %135 : vector<8x600xf32>
    %cst_56 = arith.constant 0.000000e+00 : f32
    %137 = vector.shape_cast %8 : vector<1x600xi1> to vector<1x600xi1>
    %138 = vector.broadcast %137 : vector<1x600xi1> to vector<8x600xi1>
    %139 = vector.broadcast %cst_56 : f32 to vector<8x600xf32>
    %140 = arith.select %138, %136, %139 : vector<8x600xi1>, vector<8x600xf32>
    %c0_57 = arith.constant 0 : index
    %c128_58 = arith.constant 128 : index
    %141 = vector.load %arg10[%c0_57, %c128_58] : memref<8x856xf32, #tpu.memory_space<vmem>>, vector<8x600xf32>
    tpu.vector_store %arg10[%c0_57, %c128_58], %140 {strides = array<i32>} : memref<8x856xf32, #tpu.memory_space<vmem>>, vector<8x600xf32>,
    %cst_59 = arith.constant 0.000000e+00 : f32
    %142 = vector.broadcast %cst_59 : f32 to vector<8x600xf32>
    %c0_60 = arith.constant 0 : index
    %c0_61 = arith.constant 0 : index
    %143 = vector.load %arg10[%c0_60, %c0_61] : memref<8x856xf32, #tpu.memory_space<vmem>>, vector<8x856xf32>
    %cst_62 = arith.constant 0.000000e+00 : f32
    %144 = vector.broadcast %cst_62 : f32 to vector<8x600xf32>
    %145 = vector.extract_strided_slice %143 {offsets = [0, 17], sizes = [8, 600], strides = [1, 1]} : vector<8x856xf32> to vector<8x600xf32>
    %146 = vector.extract_strided_slice %143 {offsets = [0, 18], sizes = [8, 600], strides = [1, 1]} : vector<8x856xf32> to vector<8x600xf32>
    %147 = vector.extract_strided_slice %143 {offsets = [0, 19], sizes = [8, 600], strides = [1, 1]} : vector<8x856xf32> to vector<8x600xf32>
    %148 = vector.extract_strided_slice %143 {offsets = [0, 27], sizes = [8, 600], strides = [1, 1]} : vector<8x856xf32> to vector<8x600xf32>
    %149 = vector.extract_strided_slice %143 {offsets = [0, 28], sizes = [8, 600], strides = [1, 1]} : vector<8x856xf32> to vector<8x600xf32>
    %150 = vector.extract_strided_slice %143 {offsets = [0, 29], sizes = [8, 600], strides = [1, 1]} : vector<8x856xf32> to vector<8x600xf32>
    %151 = vector.extract_strided_slice %143 {offsets = [0, 37], sizes = [8, 600], strides = [1, 1]} : vector<8x856xf32> to vector<8x600xf32>
    %152 = vector.extract_strided_slice %143 {offsets = [0, 38], sizes = [8, 600], strides = [1, 1]} : vector<8x856xf32> to vector<8x600xf32>
    %153 = vector.extract_strided_slice %143 {offsets = [0, 39], sizes = [8, 600], strides = [1, 1]} : vector<8x856xf32> to vector<8x600xf32>
    %154 = tpu.concatenate %145, %146, %147, %148, %149, %150, %151, %152, %153 in 0 : vector<8x600xf32>, vector<8x600xf32>, vector<8x600xf32>, vector<8x600xf32>, vector<8x600xf32>, vector<8x600xf32>, vector<8x600xf32>, vector<8x600xf32>, vector<8x600xf32> -> vector<72x600xf32>
    %c6 = arith.constant 6 : index
    %c0_63 = arith.constant 0 : index
    %c0_64 = arith.constant 0 : index
    %155 = vector.load %arg3[%c6, %c0_63, %c0_64] : memref<9x8x72xbf16, #tpu.memory_space<vmem>>, vector<1x8x72xbf16>
    %156 = vector.shape_cast %155 : vector<1x8x72xbf16> to vector<8x72xbf16>
    %157 = arith.truncf %154 : vector<72x600xf32> to vector<72x600xbf16>
    %cst_65 = arith.constant dense<0.000000e+00> : vector<8x600xf32>
    %158 = tpu.matmul %156, %157, %cst_65 {dimension_numbers = #tpu.dot_dimension_numbers<[1], [0], [0], [1], [0, 0, 1, 1], [], []>} : vector<8x72xbf16>, vector<72x600xbf16>, vector<8x600xf32> -> vector<8x600xf32>
    %159 = arith.addf %144, %158 : vector<8x600xf32>
    %160 = vector.extract_strided_slice %143 {offsets = [0, 117], sizes = [8, 600], strides = [1, 1]} : vector<8x856xf32> to vector<8x600xf32>
    %161 = vector.extract_strided_slice %143 {offsets = [0, 118], sizes = [8, 600], strides = [1, 1]} : vector<8x856xf32> to vector<8x600xf32>
    %162 = vector.extract_strided_slice %143 {offsets = [0, 119], sizes = [8, 600], strides = [1, 1]} : vector<8x856xf32> to vector<8x600xf32>
    %163 = vector.extract_strided_slice %143 {offsets = [0, 127], sizes = [8, 600], strides = [1, 1]} : vector<8x856xf32> to vector<8x600xf32>
    %164 = vector.extract_strided_slice %143 {offsets = [0, 128], sizes = [8, 600], strides = [1, 1]} : vector<8x856xf32> to vector<8x600xf32>
    %165 = vector.extract_strided_slice %143 {offsets = [0, 129], sizes = [8, 600], strides = [1, 1]} : vector<8x856xf32> to vector<8x600xf32>
    %166 = vector.extract_strided_slice %143 {offsets = [0, 137], sizes = [8, 600], strides = [1, 1]} : vector<8x856xf32> to vector<8x600xf32>
    %167 = vector.extract_strided_slice %143 {offsets = [0, 138], sizes = [8, 600], strides = [1, 1]} : vector<8x856xf32> to vector<8x600xf32>
    %168 = vector.extract_strided_slice %143 {offsets = [0, 139], sizes = [8, 600], strides = [1, 1]} : vector<8x856xf32> to vector<8x600xf32>
    %169 = tpu.concatenate %160, %161, %162, %163, %164, %165, %166, %167, %168 in 0 : vector<8x600xf32>, vector<8x600xf32>, vector<8x600xf32>, vector<8x600xf32>, vector<8x600xf32>, vector<8x600xf32>, vector<8x600xf32>, vector<8x600xf32>, vector<8x600xf32> -> vector<72x600xf32>
    %c7 = arith.constant 7 : index
    %c0_66 = arith.constant 0 : index
    %c0_67 = arith.constant 0 : index
    %170 = vector.load %arg3[%c7, %c0_66, %c0_67] : memref<9x8x72xbf16, #tpu.memory_space<vmem>>, vector<1x8x72xbf16>
    %171 = vector.shape_cast %170 : vector<1x8x72xbf16> to vector<8x72xbf16>
    %172 = arith.truncf %169 : vector<72x600xf32> to vector<72x600xbf16>
    %cst_68 = arith.constant dense<0.000000e+00> : vector<8x600xf32>
    %173 = tpu.matmul %171, %172, %cst_68 {dimension_numbers = #tpu.dot_dimension_numbers<[1], [0], [0], [1], [0, 0, 1, 1], [], []>} : vector<8x72xbf16>, vector<72x600xbf16>, vector<8x600xf32> -> vector<8x600xf32>
    %174 = arith.addf %159, %173 : vector<8x600xf32>
    %175 = vector.extract_strided_slice %143 {offsets = [0, 217], sizes = [8, 600], strides = [1, 1]} : vector<8x856xf32> to vector<8x600xf32>
    %176 = vector.extract_strided_slice %143 {offsets = [0, 218], sizes = [8, 600], strides = [1, 1]} : vector<8x856xf32> to vector<8x600xf32>
    %177 = vector.extract_strided_slice %143 {offsets = [0, 219], sizes = [8, 600], strides = [1, 1]} : vector<8x856xf32> to vector<8x600xf32>
    %178 = vector.extract_strided_slice %143 {offsets = [0, 227], sizes = [8, 600], strides = [1, 1]} : vector<8x856xf32> to vector<8x600xf32>
    %179 = vector.extract_strided_slice %143 {offsets = [0, 228], sizes = [8, 600], strides = [1, 1]} : vector<8x856xf32> to vector<8x600xf32>
    %180 = vector.extract_strided_slice %143 {offsets = [0, 229], sizes = [8, 600], strides = [1, 1]} : vector<8x856xf32> to vector<8x600xf32>
    %181 = vector.extract_strided_slice %143 {offsets = [0, 237], sizes = [8, 600], strides = [1, 1]} : vector<8x856xf32> to vector<8x600xf32>
    %182 = vector.extract_strided_slice %143 {offsets = [0, 238], sizes = [8, 600], strides = [1, 1]} : vector<8x856xf32> to vector<8x600xf32>
    %183 = vector.extract_strided_slice %143 {offsets = [0, 239], sizes = [8, 600], strides = [1, 1]} : vector<8x856xf32> to vector<8x600xf32>
    %184 = tpu.concatenate %175, %176, %177, %178, %179, %180, %181, %182, %183 in 0 : vector<8x600xf32>, vector<8x600xf32>, vector<8x600xf32>, vector<8x600xf32>, vector<8x600xf32>, vector<8x600xf32>, vector<8x600xf32>, vector<8x600xf32>, vector<8x600xf32> -> vector<72x600xf32>
    %c8 = arith.constant 8 : index
    %c0_69 = arith.constant 0 : index
    %c0_70 = arith.constant 0 : index
    %185 = vector.load %arg3[%c8, %c0_69, %c0_70] : memref<9x8x72xbf16, #tpu.memory_space<vmem>>, vector<1x8x72xbf16>
    %186 = vector.shape_cast %185 : vector<1x8x72xbf16> to vector<8x72xbf16>
    %187 = arith.truncf %184 : vector<72x600xf32> to vector<72x600xbf16>
    %cst_71 = arith.constant dense<0.000000e+00> : vector<8x600xf32>
    %188 = tpu.matmul %186, %187, %cst_71 {dimension_numbers = #tpu.dot_dimension_numbers<[1], [0], [0], [1], [0, 0, 1, 1], [], []>} : vector<8x72xbf16>, vector<72x600xbf16>, vector<8x600xf32> -> vector<8x600xf32>
    %189 = arith.addf %174, %188 : vector<8x600xf32>
    %c2_72 = arith.constant 2 : index
    %c0_73 = arith.constant 0 : index
    %c0_74 = arith.constant 0 : index
    %190 = vector.load %arg4[%c2_72, %c0_73, %c0_74] : memref<3x8x1xf32, #tpu.memory_space<vmem>>, vector<1x8x1xf32>
    %191 = vector.shape_cast %190 : vector<1x8x1xf32> to vector<8x1xf32>
    %192 = vector.broadcast %191 : vector<8x1xf32> to vector<8x600xf32>
    %193 = arith.addf %189, %192 : vector<8x600xf32>
    %cst_75 = arith.constant 0.000000e+00 : f32
    %194 = vector.broadcast %cst_75 : f32 to vector<8x600xf32>
    %195 = arith.cmpf ogt, %193, %194 : vector<8x600xf32>
    %cst_76 = arith.constant 2.000000e-01 : f32
    %196 = vector.broadcast %cst_76 : f32 to vector<8x600xf32>
    %197 = arith.mulf %196, %193 : vector<8x600xf32>
    %198 = arith.select %195, %193, %197 : vector<8x600xi1>, vector<8x600xf32>
    %199 = arith.addf %142, %198 : vector<8x600xf32>
    %c0_77 = arith.constant 0 : index
    %c0_78 = arith.constant 0 : index
    %c128_79 = arith.constant 128 : index
    %200 = vector.load %arg2[%c0_77, %c0_78, %c128_79] : memref<1x8x856xf32, #tpu.memory_space<vmem>>, vector<1x8x600xf32>
    %201 = vector.shape_cast %200 : vector<1x8x600xf32> to vector<8x600xf32>
    %202 = arith.addf %199, %201 : vector<8x600xf32>
    %cst_80 = arith.constant 0.000000e+00 : f32
    %203 = vector.shape_cast %8 : vector<1x600xi1> to vector<1x600xi1>
    %204 = vector.broadcast %203 : vector<1x600xi1> to vector<8x600xi1>
    %205 = vector.broadcast %cst_80 : f32 to vector<8x600xf32>
    %206 = arith.select %204, %202, %205 : vector<8x600xi1>, vector<8x600xf32>
    %c0_81 = arith.constant 0 : index
    %c128_82 = arith.constant 128 : index
    %207 = vector.load %arg11[%c0_81, %c128_82] : memref<8x856xf32, #tpu.memory_space<vmem>>, vector<8x600xf32>
    tpu.vector_store %arg11[%c0_81, %c128_82], %206 {strides = array<i32>} : memref<8x856xf32, #tpu.memory_space<vmem>>, vector<8x600xf32>,
    %c0_83 = arith.constant 0 : index
    %c128_84 = arith.constant 128 : index
    %208 = vector.load %arg9[%c0_83, %c128_84] : memref<8x856xf32, #tpu.memory_space<vmem>>, vector<8x600xf32>
    %c0_85 = arith.constant 0 : index
    %c128_86 = arith.constant 128 : index
    %209 = vector.load %arg10[%c0_85, %c128_86] : memref<8x856xf32, #tpu.memory_space<vmem>>, vector<8x600xf32>
    %c0_87 = arith.constant 0 : index
    %c128_88 = arith.constant 128 : index
    %210 = vector.load %arg11[%c0_87, %c128_88] : memref<8x856xf32, #tpu.memory_space<vmem>>, vector<8x600xf32>
    %211 = tpu.concatenate %208, %209, %210 in 0 : vector<8x600xf32>, vector<8x600xf32>, vector<8x600xf32> -> vector<24x600xf32>
    %c0_89 = arith.constant 0 : index
    %c0_90 = arith.constant 0 : index
    %212 = vector.load %arg5[%c0_89, %c0_90] : memref<32x24xbf16, #tpu.memory_space<vmem>>, vector<32x24xbf16>
    %213 = arith.truncf %211 : vector<24x600xf32> to vector<24x600xbf16>
    %cst_91 = arith.constant dense<0.000000e+00> : vector<32x600xf32>
    %214 = tpu.matmul %212, %213, %cst_91 {dimension_numbers = #tpu.dot_dimension_numbers<[1], [0], [0], [1], [0, 0, 1, 1], [], []>} : vector<32x24xbf16>, vector<24x600xbf16>, vector<32x600xf32> -> vector<32x600xf32>
    %c0_92 = arith.constant 0 : index
    %c0_93 = arith.constant 0 : index
    %215 = vector.load %arg6[%c0_92, %c0_93] : memref<32x1xf32, #tpu.memory_space<vmem>>, vector<32x1xf32>
    %216 = vector.broadcast %215 : vector<32x1xf32> to vector<32x600xf32>
    %217 = arith.addf %214, %216 : vector<32x600xf32>
    %cst_94 = arith.constant 0.000000e+00 : f32
    %218 = vector.broadcast %cst_94 : f32 to vector<32x600xf32>
    %219 = arith.cmpf ogt, %217, %218 : vector<32x600xf32>
    %cst_95 = arith.constant 2.000000e-01 : f32
    %220 = vector.broadcast %cst_95 : f32 to vector<32x600xf32>
    %221 = arith.mulf %220, %217 : vector<32x600xf32>
    %222 = arith.select %219, %217, %221 : vector<32x600xi1>, vector<32x600xf32>
    %c0_96 = arith.constant 0 : index
    %c0_97 = arith.constant 0 : index
    %c0_98 = arith.constant 0 : index
    %223 = vector.load %arg8[%c0_96, %c0_97, %c0_98] : memref<1x32x600xf32, #tpu.memory_space<vmem>>, vector<1x32x600xf32>
    %224 = vector.shape_cast %223 : vector<1x32x600xf32> to vector<32x600xf32>
    %225 = vector.shape_cast %222 : vector<32x600xf32> to vector<1x32x600xf32>
    tpu.vector_store %arg8[%c0_96, %c0_97, %c0_98], %225 {strides = array<i32>} : memref<1x32x600xf32, #tpu.memory_space<vmem>>, vector<1x32x600xf32>,
    return
  }
  func.func @transform_0(%arg0: i32) -> (i32, i32, i32) {
    %c0_i32 = arith.constant 0 : i32
    %c0_i32_0 = arith.constant 0 : i32
    %c0_i32_1 = arith.constant 0 : i32
    return %arg0, %c0_i32, %c0_i32_0 : i32, i32, i32
  }
  func.func @transform_1(%arg0: i32) -> (i32, i32, i32) {
    %c0_i32 = arith.constant 0 : i32
    %c0_i32_0 = arith.constant 0 : i32
    %c0_i32_1 = arith.constant 0 : i32
    return %arg0, %c0_i32, %c0_i32_0 : i32, i32, i32
  }
  func.func @transform_2(%arg0: i32) -> (i32, i32, i32) {
    %c0_i32 = arith.constant 0 : i32
    %c0_i32_0 = arith.constant 0 : i32
    %c0_i32_1 = arith.constant 0 : i32
    %c0_i32_2 = arith.constant 0 : i32
    return %c0_i32, %c0_i32_0, %c0_i32_1 : i32, i32, i32
  }
  func.func @transform_3(%arg0: i32) -> (i32, i32, i32) {
    %c0_i32 = arith.constant 0 : i32
    %c0_i32_0 = arith.constant 0 : i32
    %c0_i32_1 = arith.constant 0 : i32
    %c0_i32_2 = arith.constant 0 : i32
    return %c0_i32, %c0_i32_0, %c0_i32_1 : i32, i32, i32
  }
  func.func @transform_4(%arg0: i32) -> (i32, i32) {
    %c0_i32 = arith.constant 0 : i32
    %c0_i32_0 = arith.constant 0 : i32
    %c0_i32_1 = arith.constant 0 : i32
    return %c0_i32, %c0_i32_0 : i32, i32
  }
  func.func @transform_5(%arg0: i32) -> (i32, i32) {
    %c0_i32 = arith.constant 0 : i32
    %c0_i32_0 = arith.constant 0 : i32
    %c0_i32_1 = arith.constant 0 : i32
    return %c0_i32, %c0_i32_0 : i32, i32
  }
  func.func @transform_6(%arg0: i32) -> (i32, i32) {
    %c0_i32 = arith.constant 0 : i32
    %c0_i32_0 = arith.constant 0 : i32
    %c0_i32_1 = arith.constant 0 : i32
    return %c0_i32, %c0_i32_0 : i32, i32
  }
  func.func @transform_7(%arg0: i32) -> (i32, i32, i32) {
    %c0_i32 = arith.constant 0 : i32
    %c0_i32_0 = arith.constant 0 : i32
    %c0_i32_1 = arith.constant 0 : i32
    return %arg0, %c0_i32, %c0_i32_0 : i32, i32, i32
  }
}

</mosaic_0001>

<llo_original>
// kernel: fix_cell_forward.1
$region0: #{fix_cell_forward.1}
  #allocation0 [shape = 'u32[]', space=smem, size = 0x4, offset = 0x4, fixed_abs, tag = 'smem constant byte address 0x4 - core index']
  #allocation1 [shape = 'u32[144,128]{1,0:T(1,128)}', space=vmem, size = 0x12000, scoped, tag = 'internal scratch']
  #allocation2 [shape = 'f32[8,856]{1,0:T(8,128)}', space=vmem, size = 0x7000, scoped, tag = 'scratch operand']
  #allocation3 [shape = 'f32[8,856]{1,0:T(8,128)}', space=vmem, size = 0x7000, scoped, tag = 'scratch operand']
  #allocation4 [shape = 'f32[8,856]{1,0:T(8,128)}', space=vmem, size = 0x7000, scoped, tag = 'scratch operand']
  %s0 = inlined_call_operand.vmem [shape: f32[2,8,856], index: 0, kind: input, shape index: {}]
  %s1 = inlined_call_operand.vmem [shape: f32[2,8,856], index: 1, kind: input, shape index: {}]
  %s2 = inlined_call_operand.vmem [shape: bf16[9,8,72], index: 2, kind: input, shape index: {}]
  %s3 = inlined_call_operand.vmem [shape: f32[3,8,1], index: 3, kind: input, shape index: {}]
  %s4 = inlined_call_operand.vmem [shape: bf16[32,24], index: 4, kind: input, shape index: {}]
  %s5 = inlined_call_operand.vmem [shape: f32[32,1], index: 5, kind: input, shape index: {}]
  %s6 = inlined_call_operand.vmem [shape: f32[1,600], index: 6, kind: input, shape index: {}]
  %s7 = inlined_call_operand.vmem [shape: f32[2,32,600], index: 7, kind: output, shape index: {}]
  %s8 = sld [smem:[#allocation0]]
  $region61: #{fix_cell_forward.1} parent=0
    _
  %s10 = ssub.s32 1, %s8
  %s11 = scalar_select 0, %s10, %s8
  loop: start=0, step=1, limit=4
  $region2: #{fix_cell_forward.1} parent=0 // loop_pre_header
    _
  $region3: #{fix_cell_forward.1} parent=0 // loop_header
    %s13 = sphi 0, %s17
    %p14 = scmp.ge.s32.totalorder %s13, 4
    %s23 = sphi 0, %s25
    %s26 = sphi 0, %s23
    %s27 = sphi 0, %s26
    %s43 = sphi 0, %s27
    %s49 = sphi 0, %s51
    %s52 = sphi 0, %s49
    %s53 = sphi 0, %s52
    %s69 = sphi 0, %s53
    %s73 = sphi 0, %s73
    %s75 = sphi 0, %s73
    %s76 = sphi 0, %s75
    %s90 = sphi 0, %s76
    %s94 = sphi 0, %s94
    %s96 = sphi 0, %s94
    %s97 = sphi 0, %s96
    %s111 = sphi 0, %s97
    %s115 = sphi 0, %s115
    %s117 = sphi 0, %s115
    %s118 = sphi 0, %s117
    %s132 = sphi 0, %s118
    %s136 = sphi 0, %s136
    %s138 = sphi 0, %s136
    %s139 = sphi 0, %s138
    %s153 = sphi 0, %s139
    %s157 = sphi 0, %s157
    %s159 = sphi 0, %s157
    %s160 = sphi 0, %s159
    %s174 = sphi 0, %s160
    %s180 = sphi 0, %s182
    %s183 = sphi 0, %s180
    %s184 = sphi 0, %s183
    %s200 = sphi 0, %s184
  $region4: #{fix_cell_forward.1} parent=0 // loop_header_branch
    %16 = sbr.rel (%p14) target = $region8
  $region5: #{fix_cell_forward.1} parent=0 // loop_body
    %s18 = ssub.s32 %s13, 1
    %s19 = ssub.s32 %s13, 2
    %s20 = sadd.s32 %s13, 1
    %s21 = ssub.s32 %s13, %s20
    %p22 = scmp.eq.s32.totalorder %s21, 0
    %s24 = sadd.s32 %s23, 1
    %s25 = scalar_select %p22, %s23, %s24
    %p28 = pneg %p22
    %p29 = scmp.eq.s32.totalorder %s13, 1
    %p30 = por %p28, %p29
    %p31 = scmp.ne.s32.totalorder %s23, %s26
    %p32 = scmp.eq.s32.totalorder %s13, 0
    %p33 = por %p31, %p32
    %p34 = scmp.ne.s32.totalorder %s23, %s26
    %p35 = scmp.eq.s32.totalorder %s18, 1
    %p36 = por %p34, %p35
    %p37 = scmp.ne.s32.totalorder %s26, %s27
    %p38 = scmp.eq.s32.totalorder %s18, 0
    %p39 = por %p37, %p38
    %p40 = scmp.ne.s32.totalorder %s26, %s27
    %p41 = scmp.eq.s32.totalorder %s19, 1
    %p42 = por %p40, %p41
    %p44 = scmp.ne.s32.totalorder %s27, %s43
    %p45 = scmp.eq.s32.totalorder %s19, 0
    %p46 = por %p44, %p45
    %s47 = ssub.s32 %s13, %s20
    %p48 = scmp.eq.s32.totalorder %s47, 0
    %s50 = sadd.s32 %s49, 1
    %s51 = scalar_select %p48, %s49, %s50
    %p54 = pneg %p48
    %p55 = scmp.eq.s32.totalorder %s13, 1
    %p56 = por %p54, %p55
    %p57 = scmp.ne.s32.totalorder %s49, %s52
    %p58 = scmp.eq.s32.totalorder %s13, 0
    %p59 = por %p57, %p58
    %p60 = scmp.ne.s32.totalorder %s49, %s52
    %p61 = scmp.eq.s32.totalorder %s18, 1
    %p62 = por %p60, %p61
    %p63 = scmp.ne.s32.totalorder %s52, %s53
    %p64 = scmp.eq.s32.totalorder %s18, 0
    %p65 = por %p63, %p64
    %p66 = scmp.ne.s32.totalorder %s52, %s53
    %p67 = scmp.eq.s32.totalorder %s19, 1
    %p68 = por %p66, %p67
    %p70 = scmp.ne.s32.totalorder %s53, %s69
    %p71 = scmp.eq.s32.totalorder %s19, 0
    %p72 = por %p70, %p71
    %s74 = sadd.s32 %s73, 1
    %p77 = scmp.eq.s32.totalorder %s13, 1
    %p78 = scmp.ne.s32.totalorder %s73, %s75
    %p79 = scmp.eq.s32.totalorder %s13, 0
    %p80 = por %p78, %p79
    %p81 = scmp.ne.s32.totalorder %s73, %s75
    %p82 = scmp.eq.s32.totalorder %s18, 1
    %p83 = por %p81, %p82
    %p84 = scmp.ne.s32.totalorder %s75, %s76
    %p85 = scmp.eq.s32.totalorder %s18, 0
    %p86 = por %p84, %p85
    %p87 = scmp.ne.s32.totalorder %s75, %s76
    %p88 = scmp.eq.s32.totalorder %s19, 1
    %p89 = por %p87, %p88
    %p91 = scmp.ne.s32.totalorder %s76, %s90
    %p92 = scmp.eq.s32.totalorder %s19, 0
    %p93 = por %p91, %p92
    %s95 = sadd.s32 %s94, 1
    %p98 = scmp.eq.s32.totalorder %s13, 1
    %p99 = scmp.ne.s32.totalorder %s94, %s96
    %p100 = scmp.eq.s32.totalorder %s13, 0
    %p101 = por %p99, %p100
    %p102 = scmp.ne.s32.totalorder %s94, %s96
    %p103 = scmp.eq.s32.totalorder %s18, 1
    %p104 = por %p102, %p103
    %p105 = scmp.ne.s32.totalorder %s96, %s97
    %p106 = scmp.eq.s32.totalorder %s18, 0
    %p107 = por %p105, %p106
    %p108 = scmp.ne.s32.totalorder %s96, %s97
    %p109 = scmp.eq.s32.totalorder %s19, 1
    %p110 = por %p108, %p109
    %p112 = scmp.ne.s32.totalorder %s97, %s111
    %p113 = scmp.eq.s32.totalorder %s19, 0
    %p114 = por %p112, %p113
    %s116 = sadd.s32 %s115, 1
    %p119 = scmp.eq.s32.totalorder %s13, 1
    %p120 = scmp.ne.s32.totalorder %s115, %s117
    %p121 = scmp.eq.s32.totalorder %s13, 0
    %p122 = por %p120, %p121
    %p123 = scmp.ne.s32.totalorder %s115, %s117
    %p124 = scmp.eq.s32.totalorder %s18, 1
    %p125 = por %p123, %p124
    %p126 = scmp.ne.s32.totalorder %s117, %s118
    %p127 = scmp.eq.s32.totalorder %s18, 0
    %p128 = por %p126, %p127
    %p129 = scmp.ne.s32.totalorder %s117, %s118
    %p130 = scmp.eq.s32.totalorder %s19, 1
    %p131 = por %p129, %p130
    %p133 = scmp.ne.s32.totalorder %s118, %s132
    %p134 = scmp.eq.s32.totalorder %s19, 0
    %p135 = por %p133, %p134
    %s137 = sadd.s32 %s136, 1
    %p140 = scmp.eq.s32.totalorder %s13, 1
    %p141 = scmp.ne.s32.totalorder %s136, %s138
    %p142 = scmp.eq.s32.totalorder %s13, 0
    %p143 = por %p141, %p142
    %p144 = scmp.ne.s32.totalorder %s136, %s138
    %p145 = scmp.eq.s32.totalorder %s18, 1
    %p146 = por %p144, %p145
    %p147 = scmp.ne.s32.totalorder %s138, %s139
    %p148 = scmp.eq.s32.totalorder %s18, 0
    %p149 = por %p147, %p148
    %p150 = scmp.ne.s32.totalorder %s138, %s139
    %p151 = scmp.eq.s32.totalorder %s19, 1
    %p152 = por %p150, %p151
    %p154 = scmp.ne.s32.totalorder %s139, %s153
    %p155 = scmp.eq.s32.totalorder %s19, 0
    %p156 = por %p154, %p155
    %s158 = sadd.s32 %s157, 1
    %p161 = scmp.eq.s32.totalorder %s13, 1
    %p162 = scmp.ne.s32.totalorder %s157, %s159
    %p163 = scmp.eq.s32.totalorder %s13, 0
    %p164 = por %p162, %p163
    %p165 = scmp.ne.s32.totalorder %s157, %s159
    %p166 = scmp.eq.s32.totalorder %s18, 1
    %p167 = por %p165, %p166
    %p168 = scmp.ne.s32.totalorder %s159, %s160
    %p169 = scmp.eq.s32.totalorder %s18, 0
    %p170 = por %p168, %p169
    %p171 = scmp.ne.s32.totalorder %s159, %s160
    %p172 = scmp.eq.s32.totalorder %s19, 1
    %p173 = por %p171, %p172
    %p175 = scmp.ne.s32.totalorder %s160, %s174
    %p176 = scmp.eq.s32.totalorder %s19, 0
    %p177 = por %p175, %p176
    %s178 = ssub.s32 %s13, %s20
    %p179 = scmp.eq.s32.totalorder %s178, 0
    %s181 = sadd.s32 %s180, 1
    %s182 = scalar_select %p179, %s180, %s181
    %p185 = pneg %p179
    %p186 = scmp.eq.s32.totalorder %s13, 1
    %p187 = por %p185, %p186
    %p188 = scmp.ne.s32.totalorder %s180, %s183
    %p189 = scmp.eq.s32.totalorder %s13, 0
    %p190 = por %p188, %p189
    %p191 = scmp.ne.s32.totalorder %s180, %s183
    %p192 = scmp.eq.s32.totalorder %s18, 1
    %p193 = por %p191, %p192
    %p194 = scmp.ne.s32.totalorder %s183, %s184
    %p195 = scmp.eq.s32.totalorder %s18, 0
    %p196 = por %p194, %p195
    %p197 = scmp.ne.s32.totalorder %s183, %s184
    %p198 = scmp.eq.s32.totalorder %s19, 1
    %p199 = por %p197, %p198
    %p201 = scmp.ne.s32.totalorder %s184, %s200
    %p202 = scmp.eq.s32.totalorder %s19, 0
    %p203 = por %p201, %p202
    %p204 = scmp.le.s32.totalorder 1, %s13
    %p205 = scmp.lt.s32.totalorder %s13, 3
    %p206 = pnand %p204, %p205
    %p207 = pneg %p206
    // Predicated region
    $region9: #{fix_cell_forward.1} parent=5 // pred_check
      _
    $region10: #{fix_cell_forward.1} parent=5 // pred_check_branch
      %209 = sbr.rel (%p206) target = $region12
    $region11: #{fix_cell_forward.1} parent=5 // pred_region
      %s210 = ssub.s32 %s13, 1
      // Predicated region
      $region13: #{fix_cell_forward.1} parent=11 // pred_check
        %p211 = pneg %p86
      $region14: #{fix_cell_forward.1} parent=11 // pred_check_branch
        %213 = sbr.rel (%p211) target = $region16
      $region15: #{fix_cell_forward.1} parent=11 // pred_region
        _
      $region16: #{fix_cell_forward.1} parent=11 // pred_fallthru
        _
      // Predicated region
      $region17: #{fix_cell_forward.1} parent=11 // pred_check
        %p214 = pneg %p107
      $region18: #{fix_cell_forward.1} parent=11 // pred_check_branch
        %216 = sbr.rel (%p214) target = $region20
      $region19: #{fix_cell_forward.1} parent=11 // pred_region
        _
      $region20: #{fix_cell_forward.1} parent=11 // pred_fallthru
        _
      // Predicated region
      $region21: #{fix_cell_forward.1} parent=11 // pred_check
        %p217 = pneg %p128
      $region22: #{fix_cell_forward.1} parent=11 // pred_check_branch
        %219 = sbr.rel (%p217) target = $region24
      $region23: #{fix_cell_forward.1} parent=11 // pred_region
        _
      $region24: #{fix_cell_forward.1} parent=11 // pred_fallthru
        _
      // Predicated region
      $region25: #{fix_cell_forward.1} parent=11 // pred_check
        %p220 = pneg %p149
      $region26: #{fix_cell_forward.1} parent=11 // pred_check_branch
        %222 = sbr.rel (%p220) target = $region28
      $region27: #{fix_cell_forward.1} parent=11 // pred_region
        _
      $region28: #{fix_cell_forward.1} parent=11 // pred_fallthru
        _
      // Predicated region
      $region29: #{fix_cell_forward.1} parent=11 // pred_check
        %p223 = pneg %p170
      $region30: #{fix_cell_forward.1} parent=11 // pred_check_branch
        %225 = sbr.rel (%p223) target = $region32
      $region31: #{fix_cell_forward.1} parent=11 // pred_region
        _
      $region32: #{fix_cell_forward.1} parent=11 // pred_fallthru
        _
    $region12: #{fix_cell_forward.1} parent=5 // pred_fallthru
      _
    %p226 = scmp.lt.s32.totalorder %s13, 2
    // Predicated region
    $region33: #{fix_cell_forward.1} parent=5 // pred_check
      %p227 = pneg %p226
    $region34: #{fix_cell_forward.1} parent=5 // pred_check_branch
      %229 = sbr.rel (%p227) target = $region36
    $region35: #{fix_cell_forward.1} parent=5 // pred_region
      // Predicated region
      $region37: #{fix_cell_forward.1} parent=35 // pred_check
        %p230 = pneg %p33
      $region38: #{fix_cell_forward.1} parent=35 // pred_check_branch
        %232 = sbr.rel (%p230) target = $region40
      $region39: #{fix_cell_forward.1} parent=35 // pred_region
        %p233 = scmp.lt.s32.totalorder %s13, 1
        %s234 = scalar_select %p233, %s13, 1
        %s235 = smul.addr %s234, 7
        %s236 = smul.addr %s235, 8
        %s237 = scalar_lea.vmem %s0, %s236
      $region40: #{fix_cell_forward.1} parent=35 // pred_fallthru
        _
      // Predicated region
      $region41: #{fix_cell_forward.1} parent=35 // pred_check
        %p238 = pneg %p59
      $region42: #{fix_cell_forward.1} parent=35 // pred_check_branch
        %240 = sbr.rel (%p238) target = $region44
      $region43: #{fix_cell_forward.1} parent=35 // pred_region
        %p241 = scmp.lt.s32.totalorder %s13, 1
        %s242 = scalar_select %p241, %s13, 1
        %s243 = smul.addr %s242, 7
        %s244 = smul.addr %s243, 8
        %s245 = scalar_lea.vmem %s1, %s244
      $region44: #{fix_cell_forward.1} parent=35 // pred_fallthru
        _
    $region36: #{fix_cell_forward.1} parent=5 // pred_fallthru
      _
    %p246 = scmp.le.s32.totalorder 1, %s13
    %p247 = scmp.lt.s32.totalorder %s13, 3
    %p248 = pnand %p246, %p247
    %p249 = pneg %p248
    // Predicated region
    $region45: #{fix_cell_forward.1} parent=5 // pred_check
      _
    $region46: #{fix_cell_forward.1} parent=5 // pred_check_branch
      %251 = sbr.rel (%p248) target = $region48
    $region47: #{fix_cell_forward.1} parent=5 // pred_region
      %s252 = ssub.s32 %s13, 1
      %p253 = scmp.lt.s32.totalorder %s18, 1
      %s254 = scalar_select %p253, %s18, 1
      %s255 = smul.addr %s254, 7
      %s256 = smul.addr %s255, 8
      %s257 = scalar_lea.vmem %s0, %s256
      %p258 = pneg %p39
      %p259 = pneg %p36
      %p260 = scmp.lt.s32.totalorder %s18, 1
      %s261 = scalar_select %p260, %s18, 1
      %s262 = smul.addr %s261, 7
      %s263 = smul.addr %s262, 8
      %s264 = scalar_lea.vmem %s1, %s263
      %p265 = pneg %p65
      %p266 = pneg %p62
      %p267 = pneg %p86
      %p268 = pneg %p83
      %p269 = pneg %p107
      %p270 = pneg %p104
      %p271 = pneg %p128
      %p272 = pneg %p125
      %p273 = pneg %p149
      %p274 = pneg %p146
      %p275 = pneg %p170
      %p276 = pneg %p167
      %p277 = pneg %p196
      %p278 = pneg %p193
      %p279 = scmp.lt.s32.totalorder %s18, 1
      %s280 = scalar_select %p279, %s18, 1
      %s281 = smul.addr %s280, 20
      %s282 = smul.addr %s281, 8
      %s283 = scalar_lea.vmem %s7, %s282
      %p284 = scmp.lt.s32.totalorder %s18, 1
      %s285 = scalar_select %p284, %s18, 1
      %s286 = smul.addr %s285, 7
      %s287 = smul.addr %s286, 8
      %s288 = scalar_lea.vmem %s0, %s287
      %p289 = scmp.lt.s32.totalorder %s18, 1
      %s290 = scalar_select %p289, %s18, 1
      %s291 = smul.addr %s290, 7
      %s292 = smul.addr %s291, 8
      %s293 = scalar_lea.vmem %s1, %s292
      %p294 = scmp.lt.s32.totalorder %s18, 1
      %s295 = scalar_select %p294, %s18, 1
      %s296 = smul.addr %s295, 20
      %s297 = smul.addr %s296, 8
      %s298 = scalar_lea.vmem %s7, %s297
      %300 = vst [vmem:[#allocation2] sm:$0xff] 0.0
      %301 = vst [vmem:[#allocation2 + $0x8] sm:$0xff] 0.0
      %302 = vst [vmem:[#allocation2 + $0x10] sm:$0xff] 0.0
      %303 = vst [vmem:[#allocation2 + $0x18] sm:$0xff] 0.0
      %304 = vst [vmem:[#allocation2 + $0x20] sm:$0xff] 0.0
      %305 = vst [vmem:[#allocation2 + $0x28] sm:$0xff] 0.0
      %vm306 = vcmask 719872
      %307 = vst.msk [vmem:[#allocation2 + $0x30] sm:$0xff] %vm306, 0.0
      %308 = vst [vmem:[#allocation3] sm:$0xff] 0.0
      %309 = vst [vmem:[#allocation3 + $0x8] sm:$0xff] 0.0
      %310 = vst [vmem:[#allocation3 + $0x10] sm:$0xff] 0.0
      %311 = vst [vmem:[#allocation3 + $0x18] sm:$0xff] 0.0
      %312 = vst [vmem:[#allocation3 + $0x20] sm:$0xff] 0.0
      %313 = vst [vmem:[#allocation3 + $0x28] sm:$0xff] 0.0
      %314 = vst.msk [vmem:[#allocation3 + $0x30] sm:$0xff] %vm306, 0.0
      %315 = vst [vmem:[#allocation4] sm:$0xff] 0.0
      %316 = vst [vmem:[#allocation4 + $0x8] sm:$0xff] 0.0
      %317 = vst [vmem:[#allocation4 + $0x10] sm:$0xff] 0.0
      %318 = vst [vmem:[#allocation4 + $0x18] sm:$0xff] 0.0
      %319 = vst [vmem:[#allocation4 + $0x20] sm:$0xff] 0.0
      %320 = vst [vmem:[#allocation4 + $0x28] sm:$0xff] 0.0
      %321 = vst.msk [vmem:[#allocation4 + $0x30] sm:$0xff] %vm306, 0.0
      %v322 = vld [vmem:[%s6] sm:$0x1f]
      %vm323 = vcmp.gt.f32.partialorder %v322, 0.5
      %v324 = vld [vmem:[%s288] sm:$0xff]
      %v325 = vld [vmem:[%s288 + $0x8] sm:$0xff]
      %v326 = vld [vmem:[%s288 + $0x10] sm:$0xff]
      %v327 = vld [vmem:[%s288 + $0x18] sm:$0xff]
      %v328 = vld [vmem:[%s288 + $0x20] sm:$0xff]
      %v329 = vld [vmem:[%s288 + $0x28] sm:$0xff]
      %v330 = vld [vmem:[%s288 + $0x30] sm:$0xff]
      %336 = vrot.lane.b32.xlu0 %v324, 127
      %v337 = vpop.permute.xlu0 %336
      %338 = vrot.lane.b32.xlu0 %v325, 127
      %v339 = vpop.permute.xlu0 %338
      %340 = vrot.lane.b32.xlu0 %v326, 127
      %v341 = vpop.permute.xlu0 %340
      %342 = vrot.lane.b32.xlu0 %v327, 127
      %v343 = vpop.permute.xlu0 %342
      %344 = vrot.lane.b32.xlu0 %v328, 127
      %v345 = vpop.permute.xlu0 %344
      %vm346 = vcmask 1039360
      %v347 = vsel %vm346, %v337, %v339
      %v348 = vsel %vm346, %v339, %v341
      %v349 = vsel %vm346, %v341, %v343
      %v350 = vsel %vm346, %v343, %v345
      %356 = vrot.lane.b32.xlu0 %v324, 126
      %v357 = vpop.permute.xlu0 %356
      %358 = vrot.lane.b32.xlu0 %v325, 126
      %v359 = vpop.permute.xlu0 %358
      %360 = vrot.lane.b32.xlu0 %v326, 126
      %v361 = vpop.permute.xlu0 %360
      %362 = vrot.lane.b32.xlu0 %v327, 126
      %v363 = vpop.permute.xlu0 %362
      %364 = vrot.lane.b32.xlu0 %v328, 126
      %v365 = vpop.permute.xlu0 %364
      %vm366 = vcmask 1031168
      %v367 = vsel %vm366, %v357, %v359
      %v368 = vsel %vm366, %v359, %v361
      %v369 = vsel %vm366, %v361, %v363
      %v370 = vsel %vm366, %v363, %v365
      %376 = vrot.lane.b32.xlu0 %v324, 118
      %v377 = vpop.permute.xlu0 %376
      %378 = vrot.lane.b32.xlu0 %v325, 118
      %v379 = vpop.permute.xlu0 %378
      %380 = vrot.lane.b32.xlu0 %v326, 118
      %v381 = vpop.permute.xlu0 %380
      %382 = vrot.lane.b32.xlu0 %v327, 118
      %v383 = vpop.permute.xlu0 %382
      %384 = vrot.lane.b32.xlu0 %v328, 118
      %v385 = vpop.permute.xlu0 %384
      %vm386 = vcmask 965632
      %v387 = vsel %vm386, %v377, %v379
      %v388 = vsel %vm386, %v379, %v381
      %v389 = vsel %vm386, %v381, %v383
      %v390 = vsel %vm386, %v383, %v385
      %396 = vrot.lane.b32.xlu0 %v324, 117
      %v397 = vpop.permute.xlu0 %396
      %398 = vrot.lane.b32.xlu0 %v325, 117
      %v399 = vpop.permute.xlu0 %398
      %400 = vrot.lane.b32.xlu0 %v326, 117
      %v401 = vpop.permute.xlu0 %400
      %402 = vrot.lane.b32.xlu0 %v327, 117
      %v403 = vpop.permute.xlu0 %402
      %404 = vrot.lane.b32.xlu0 %v328, 117
      %v405 = vpop.permute.xlu0 %404
      %vm406 = vcmask 957440
      %v407 = vsel %vm406, %v397, %v399
      %v408 = vsel %vm406, %v399, %v401
      %v409 = vsel %vm406, %v401, %v403
      %v410 = vsel %vm406, %v403, %v405
      %416 = vrot.lane.b32.xlu0 %v324, 116
      %v417 = vpop.permute.xlu0 %416
      %418 = vrot.lane.b32.xlu0 %v325, 116
      %v419 = vpop.permute.xlu0 %418
      %420 = vrot.lane.b32.xlu0 %v326, 116
      %v421 = vpop.permute.xlu0 %420
      %422 = vrot.lane.b32.xlu0 %v327, 116
      %v423 = vpop.permute.xlu0 %422
      %424 = vrot.lane.b32.xlu0 %v328, 116
      %v425 = vpop.permute.xlu0 %424
      %vm426 = vcmask 949248
      %v427 = vsel %vm426, %v417, %v419
      %v428 = vsel %vm426, %v419, %v421
      %v429 = vsel %vm426, %v421, %v423
      %v430 = vsel %vm426, %v423, %v425
      %436 = vrot.lane.b32.xlu0 %v324, 108
      %v437 = vpop.permute.xlu0 %436
      %438 = vrot.lane.b32.xlu0 %v325, 108
      %v439 = vpop.permute.xlu0 %438
      %440 = vrot.lane.b32.xlu0 %v326, 108
      %v441 = vpop.permute.xlu0 %440
      %442 = vrot.lane.b32.xlu0 %v327, 108
      %v443 = vpop.permute.xlu0 %442
      %444 = vrot.lane.b32.xlu0 %v328, 108
      %v445 = vpop.permute.xlu0 %444
      %vm446 = vcmask 883712
      %v447 = vsel %vm446, %v437, %v439
      %v448 = vsel %vm446, %v439, %v441
      %v449 = vsel %vm446, %v441, %v443
      %v450 = vsel %vm446, %v443, %v445
      %456 = vrot.lane.b32.xlu0 %v324, 107
      %v457 = vpop.permute.xlu0 %456
      %458 = vrot.lane.b32.xlu0 %v325, 107
      %v459 = vpop.permute.xlu0 %458
      %460 = vrot.lane.b32.xlu0 %v326, 107
      %v461 = vpop.permute.xlu0 %460
      %462 = vrot.lane.b32.xlu0 %v327, 107
      %v463 = vpop.permute.xlu0 %462
      %464 = vrot.lane.b32.xlu0 %v328, 107
      %v465 = vpop.permute.xlu0 %464
      %vm466 = vcmask 875520
      %v467 = vsel %vm466, %v457, %v459
      %v468 = vsel %vm466, %v459, %v461
      %v469 = vsel %vm466, %v461, %v463
      %v470 = vsel %vm466, %v463, %v465
      %476 = vrot.lane.b32.xlu0 %v324, 106
      %v477 = vpop.permute.xlu0 %476
      %478 = vrot.lane.b32.xlu0 %v325, 106
      %v479 = vpop.permute.xlu0 %478
      %480 = vrot.lane.b32.xlu0 %v326, 106
      %v481 = vpop.permute.xlu0 %480
      %482 = vrot.lane.b32.xlu0 %v327, 106
      %v483 = vpop.permute.xlu0 %482
      %484 = vrot.lane.b32.xlu0 %v328, 106
      %v485 = vpop.permute.xlu0 %484
      %vm486 = vcmask 867328
      %v487 = vsel %vm486, %v477, %v479
      %v488 = vsel %vm486, %v479, %v481
      %v489 = vsel %vm486, %v481, %v483
      %v490 = vsel %vm486, %v483, %v485
      %v496 = vld [vmem:[%s2] sm:$0xf]
      %v497 = vpack.c.bf16 %v347, %v324
      %v498 = vpack.c.bf16 %v348, %v325
      %v499 = vpack.c.bf16 %v349, %v326
      %v500 = vpack.c.bf16 %v350, %v327
      %v501 = vpack.c.bf16 %v345, %v328
      %v502 = vpack.c.bf16 %v387, %v367
      %v503 = vpack.c.bf16 %v388, %v368
      %v504 = vpack.c.bf16 %v389, %v369
      %v505 = vpack.c.bf16 %v390, %v370
      %v506 = vpack.c.bf16 %v385, %v365
      %v507 = vpack.c.bf16 %v427, %v407
      %v508 = vpack.c.bf16 %v428, %v408
      %v509 = vpack.c.bf16 %v429, %v409
      %v510 = vpack.c.bf16 %v430, %v410
      %v511 = vpack.c.bf16 %v425, %v405
      %v512 = vpack.c.bf16 %v467, %v447
      %v513 = vpack.c.bf16 %v468, %v448
      %v514 = vpack.c.bf16 %v469, %v449
      %v515 = vpack.c.bf16 %v470, %v450
      %v516 = vpack.c.bf16 %v465, %v445
      %v517 = vpack.c.bf16 %v487, %v487
      %v518 = vpack.c.bf16 %v488, %v488
      %v519 = vpack.c.bf16 %v489, %v489
      %v520 = vpack.c.bf16 %v490, %v490
      %v521 = vpack.c.bf16 %v485, %v485
      %523 = vrot.lane.b32.xlu0 %v329, 127
      %v524 = vpop.permute.xlu0 %523
      %v525 = vsel %vm346, %v345, %v524
      %528 = vrot.lane.b32.xlu0 %v329, 126
      %v529 = vpop.permute.xlu0 %528
      %v530 = vsel %vm366, %v365, %v529
      %533 = vrot.lane.b32.xlu0 %v329, 118
      %v534 = vpop.permute.xlu0 %533
      %v535 = vsel %vm386, %v385, %v534
      %538 = vrot.lane.b32.xlu0 %v329, 117
      %v539 = vpop.permute.xlu0 %538
      %v540 = vsel %vm406, %v405, %v539
      %544 = vrot.lane.b32.xlu0 %v329, 116
      %v545 = vpop.permute.xlu0 %544
      %v546 = vsel %vm426, %v425, %v545
      %550 = vrot.lane.b32.xlu0 %v329, 108
      %v551 = vpop.permute.xlu0 %550
      %v552 = vsel %vm446, %v445, %v551
      %556 = vrot.lane.b32.xlu0 %v329, 107
      %v557 = vpop.permute.xlu0 %556
      %v558 = vsel %vm466, %v465, %v557
      %562 = vrot.lane.b32.xlu0 %v329, 106
      %v563 = vpop.permute.xlu0 %562
      %v564 = vsel %vm486, %v485, %v563
      %s568 = scalar_lea.vmem %s2, 4
      %v569 = vld [vmem:[%s568] sm:$0xf]
      %v570 = vpack.c.bf16 %v525, %v328
      %v571 = vpack.c.bf16 %v524, %v329
      %v572 = vpack.c.bf16 %v535, %v530
      %v573 = vpack.c.bf16 %v534, %v529
      %v574 = vpack.c.bf16 %v419, %v399
      %v575 = vpack.c.bf16 %v546, %v540
      %v576 = vpack.c.bf16 %v545, %v539
      %v577 = vpack.c.bf16 %v459, %v439
      %v578 = vpack.c.bf16 %v558, %v552
      %v579 = vpack.c.bf16 %v557, %v551
      %v580 = vpack.c.bf16 %v479, %v479
      %v581 = vpack.c.bf16 %v564, %v564
      %v582 = vpack.c.bf16 %v563, %v563
      %613 = vrot.lane.b32.xlu0 %v497, 11
      %v614 = vpop.permute.xlu0 %613
      %615 = vrot.lane.b32.xlu0 %v498, 11
      %v616 = vpop.permute.xlu0 %615
      %617 = vrot.lane.b32.xlu0 %v499, 11
      %v618 = vpop.permute.xlu0 %617
      %619 = vrot.lane.b32.xlu0 %v500, 11
      %v620 = vpop.permute.xlu0 %619
      %621 = vrot.lane.b32.xlu0 %v570, 11
      %v622 = vpop.permute.xlu0 %621
      %623 = vrot.lane.b32.xlu0 %v571, 11
      %v624 = vpop.permute.xlu0 %623
      %625 = vrot.lane.b32.xlu0 %v502, 11
      %v626 = vpop.permute.xlu0 %625
      %627 = vrot.lane.b32.xlu0 %v503, 11
      %v628 = vpop.permute.xlu0 %627
      %629 = vrot.lane.b32.xlu0 %v504, 11
      %v630 = vpop.permute.xlu0 %629
      %631 = vrot.lane.b32.xlu0 %v505, 11
      %v632 = vpop.permute.xlu0 %631
      %633 = vrot.lane.b32.xlu0 %v572, 11
      %v634 = vpop.permute.xlu0 %633
      %635 = vrot.lane.b32.xlu0 %v573, 11
      %v636 = vpop.permute.xlu0 %635
      %637 = vrot.lane.b32.xlu0 %v574, 11
      %v638 = vpop.permute.xlu0 %637
      %639 = vrot.lane.b32.xlu0 %v508, 11
      %v640 = vpop.permute.xlu0 %639
      %641 = vrot.lane.b32.xlu0 %v509, 11
      %v642 = vpop.permute.xlu0 %641
      %643 = vrot.lane.b32.xlu0 %v510, 11
      %v644 = vpop.permute.xlu0 %643
      %645 = vrot.lane.b32.xlu0 %v575, 11
      %v646 = vpop.permute.xlu0 %645
      %647 = vrot.lane.b32.xlu0 %v576, 11
      %v648 = vpop.permute.xlu0 %647
      %649 = vrot.lane.b32.xlu0 %v577, 11
      %v650 = vpop.permute.xlu0 %649
      %651 = vrot.lane.b32.xlu0 %v513, 11
      %v652 = vpop.permute.xlu0 %651
      %653 = vrot.lane.b32.xlu0 %v514, 11
      %v654 = vpop.permute.xlu0 %653
      %655 = vrot.lane.b32.xlu0 %v515, 11
      %v656 = vpop.permute.xlu0 %655
      %657 = vrot.lane.b32.xlu0 %v578, 11
      %v658 = vpop.permute.xlu0 %657
      %659 = vrot.lane.b32.xlu0 %v579, 11
      %v660 = vpop.permute.xlu0 %659
      %661 = vrot.lane.b32.xlu0 %v580, 11
      %v662 = vpop.permute.xlu0 %661
      %663 = vrot.lane.b32.xlu0 %v518, 11
      %v664 = vpop.permute.xlu0 %663
      %665 = vrot.lane.b32.xlu0 %v519, 11
      %v666 = vpop.permute.xlu0 %665
      %667 = vrot.lane.b32.xlu0 %v520, 11
      %v668 = vpop.permute.xlu0 %667
      %669 = vrot.lane.b32.xlu0 %v581, 11
      %v670 = vpop.permute.xlu0 %669
      %671 = vrot.lane.b32.xlu0 %v582, 11
      %v672 = vpop.permute.xlu0 %671
      %vm673 = vcmask 89088
      %v674 = vsel %vm673, %v614, %v616
      %v675 = vsel %vm673, %v616, %v618
      %v676 = vsel %vm673, %v618, %v620
      %v677 = vsel %vm673, %v620, %v622
      %v678 = vsel %vm673, %v622, %v624
      %v679 = vsel %vm673, %v626, %v628
      %v680 = vsel %vm673, %v628, %v630
      %v681 = vsel %vm673, %v630, %v632
      %v682 = vsel %vm673, %v632, %v634
      %v683 = vsel %vm673, %v634, %v636
      %v684 = vsel %vm673, %v638, %v640
      %v685 = vsel %vm673, %v640, %v642
      %v686 = vsel %vm673, %v642, %v644
      %v687 = vsel %vm673, %v644, %v646
      %v688 = vsel %vm673, %v646, %v648
      %v689 = vsel %vm673, %v650, %v652
      %v690 = vsel %vm673, %v652, %v654
      %v691 = vsel %vm673, %v654, %v656
      %v692 = vsel %vm673, %v656, %v658
      %v693 = vsel %vm673, %v658, %v660
      %v694 = vsel %vm673, %v662, %v664
      %v695 = vsel %vm673, %v664, %v666
      %v696 = vsel %vm673, %v666, %v668
      %v697 = vsel %vm673, %v668, %v670
      %v698 = vsel %vm673, %v670, %v672
      %vm719 = vcmask 588800
      %v721 = vsel %vm719, %v569, 0
      %vm723 = vcmask 1043456
      %v725 = vsel %vm723, %v694, 0
      %v728 = vsel %vm723, %v695, 0
      %v731 = vsel %vm723, %v696, 0
      %v734 = vsel %vm723, %v697, 0
      %v737 = vsel %vm723, %v698, 0
      %739 = vmatprep.subr.bf16.mxu0 %v675
      %740 = vmatpush1.bf16.msra.mxu0 %v674
      %741 = vmatprep.subr.bf16.mxu0 %v680
      %742 = vmatpush1.bf16.msra.mxu0 %v679
      %743 = vmatprep.subr.bf16.mxu0 %v685
      %744 = vmatpush1.bf16.msra.mxu0 %v684
      %745 = vmatprep.subr.bf16.mxu0 %v690
      %746 = vmatpush1.bf16.msra.mxu0 %v689
      %747 = vmatprep.subr.bf16.mxu0 %v728
      %748 = vmatpush1.bf16.msra.mxu0 %v725
      %749 = vmatprep.subr.bf16.mxu0 0
      %750 = vmatpush1.bf16.msra.mxu0 0
      %751 = vmatprep.subr.bf16.mxu0 0
      %752 = vmatpush1.bf16.msra.mxu0 0
      %753 = vmatprep.subr.bf16.mxu0 0
      %754 = vmatpush1.bf16.msra.mxu0 0
      %755 = vmatprep.subr.bf16.mxu0 0
      %756 = vmatpush1.bf16.msra.mxu0 0
      %757 = vmatprep.subr.bf16.mxu0 0
      %758 = vmatpush1.bf16.msra.mxu0 0
      %759 = vmatprep.subr.bf16.mxu0 0
      %760 = vmatpush1.bf16.msra.mxu0 0
      %761 = vmatprep.subr.bf16.mxu0 0
      %762 = vmatpush1.bf16.msra.mxu0 0
      %763 = vmatprep.subr.bf16.mxu0 0
      %764 = vmatpush1.bf16.msra.mxu0 0
      %765 = vmatprep.subr.bf16.mxu0 0
      %766 = vmatpush1.bf16.msra.mxu0 0
      %767 = vmatprep.subr.bf16.mxu0 0
      %768 = vmatpush1.bf16.msra.mxu0 0
      %769 = vmatprep.subr.bf16.mxu0 0
      %770 = vmatpush1.bf16.msra.mxu0 0
      %771 = vmatprep.mubr.bf16.mxu0 0
      %772 = vmatmul.mubr.bf16.gmra.mrb[0].mxu0 %v721
      %v773 = vpop.f32.mrb[0].mxu0
      %v774 = vadd.f32 0.0, %v773
      %v775 = vpop.f32.mrb[0].mxu0
      %v776 = vadd.f32 0.0, %v775
      %v777 = vpop.f32.mrb[0].mxu0
      %v778 = vpop.f32.mrb[0].mxu0
      %779 = vdwg.mxu0
      %780 = vmatprep.subr.bf16.mxu0 %v677
      %781 = vmatpush1.bf16.msra.mxu0 %v676
      %782 = vmatprep.subr.bf16.mxu0 %v682
      %783 = vmatpush1.bf16.msra.mxu0 %v681
      %784 = vmatprep.subr.bf16.mxu0 %v687
      %785 = vmatpush1.bf16.msra.mxu0 %v686
      %786 = vmatprep.subr.bf16.mxu0 %v692
      %787 = vmatpush1.bf16.msra.mxu0 %v691
      %788 = vmatprep.subr.bf16.mxu0 %v734
      %789 = vmatpush1.bf16.msra.mxu0 %v731
      %790 = vmatprep.subr.bf16.mxu0 0
      %791 = vmatpush1.bf16.msra.mxu0 0
      %792 = vmatprep.subr.bf16.mxu0 0
      %793 = vmatpush1.bf16.msra.mxu0 0
      %794 = vmatprep.subr.bf16.mxu0 0
      %795 = vmatpush1.bf16.msra.mxu0 0
      %796 = vmatprep.subr.bf16.mxu0 0
      %797 = vmatpush1.bf16.msra.mxu0 0
      %798 = vmatprep.subr.bf16.mxu0 0
      %799 = vmatpush1.bf16.msra.mxu0 0
      %800 = vmatprep.subr.bf16.mxu0 0
      %801 = vmatpush1.bf16.msra.mxu0 0
      %802 = vmatprep.subr.bf16.mxu0 0
      %803 = vmatpush1.bf16.msra.mxu0 0
      %804 = vmatprep.subr.bf16.mxu0 0
      %805 = vmatpush1.bf16.msra.mxu0 0
      %806 = vmatprep.subr.bf16.mxu0 0
      %807 = vmatpush1.bf16.msra.mxu0 0
      %808 = vmatprep.subr.bf16.mxu0 0
      %809 = vmatpush1.bf16.msra.mxu0 0
      %810 = vmatprep.subr.bf16.mxu0 0
      %811 = vmatpush1.bf16.msra.mxu0 0
      %812 = vmatprep.mubr.bf16.mxu0 0
      %813 = vmatmul.mubr.bf16.gmra.mrb[0].mxu0 %v721
      %v814 = vpop.f32.mrb[0].mxu0
      %v815 = vadd.f32 0.0, %v814
      %v816 = vpop.f32.mrb[0].mxu0
      %v817 = vadd.f32 0.0, %v816
      %v818 = vpop.f32.mrb[0].mxu0
      %v819 = vpop.f32.mrb[0].mxu0
      %820 = vdwg.mxu0
      %821 = vmatprep.subr.bf16.mxu0 0
      %822 = vmatpush1.bf16.msra.mxu0 %v678
      %823 = vmatprep.subr.bf16.mxu0 0
      %824 = vmatpush1.bf16.msra.mxu0 %v683
      %825 = vmatprep.subr.bf16.mxu0 0
      %826 = vmatpush1.bf16.msra.mxu0 %v688
      %827 = vmatprep.subr.bf16.mxu0 0
      %828 = vmatpush1.bf16.msra.mxu0 %v693
      %829 = vmatprep.subr.bf16.mxu0 0
      %830 = vmatpush1.bf16.msra.mxu0 %v737
      %831 = vmatprep.subr.bf16.mxu0 0
      %832 = vmatpush1.bf16.msra.mxu0 0
      %833 = vmatprep.subr.bf16.mxu0 0
      %834 = vmatpush1.bf16.msra.mxu0 0
      %835 = vmatprep.subr.bf16.mxu0 0
      %836 = vmatpush1.bf16.msra.mxu0 0
      %837 = vmatprep.subr.bf16.mxu0 0
      %838 = vmatpush1.bf16.msra.mxu0 0
      %839 = vmatprep.subr.bf16.mxu0 0
      %840 = vmatpush1.bf16.msra.mxu0 0
      %841 = vmatprep.subr.bf16.mxu0 0
      %842 = vmatpush1.bf16.msra.mxu0 0
      %843 = vmatprep.subr.bf16.mxu0 0
      %844 = vmatpush1.bf16.msra.mxu0 0
      %845 = vmatprep.subr.bf16.mxu0 0
      %846 = vmatpush1.bf16.msra.mxu0 0
      %847 = vmatprep.subr.bf16.mxu0 0
      %848 = vmatpush1.bf16.msra.mxu0 0
      %849 = vmatprep.subr.bf16.mxu0 0
      %850 = vmatpush1.bf16.msra.mxu0 0
      %851 = vmatprep.subr.bf16.mxu0 0
      %852 = vmatpush1.bf16.msra.mxu0 0
      %853 = vmatprep.mubr.bf16.mxu0 0
      %854 = vmatmul.mubr.bf16.gmra.mrb[0].mxu0 %v721
      %v855 = vpop.f32.mrb[0].mxu0
      %v856 = vadd.f32 0.0, %v855
      %v857 = vpop.f32.mrb[0].mxu0
      %v858 = vpop.f32.mrb[0].mxu0
      %v859 = vpop.f32.mrb[0].mxu0
      %860 = vdwg.mxu0
      %869 = vrot.lane.b32.xlu0 %v497, 111
      %v870 = vpop.permute.xlu0 %869
      %871 = vrot.lane.b32.xlu0 %v498, 111
      %v872 = vpop.permute.xlu0 %871
      %873 = vrot.lane.b32.xlu0 %v499, 111
      %v874 = vpop.permute.xlu0 %873
      %875 = vrot.lane.b32.xlu0 %v500, 111
      %v876 = vpop.permute.xlu0 %875
      %877 = vrot.lane.b32.xlu0 %v501, 111
      %v878 = vpop.permute.xlu0 %877
      %879 = vrot.lane.b32.xlu0 %v502, 111
      %v880 = vpop.permute.xlu0 %879
      %881 = vrot.lane.b32.xlu0 %v503, 111
      %v882 = vpop.permute.xlu0 %881
      %883 = vrot.lane.b32.xlu0 %v504, 111
      %v884 = vpop.permute.xlu0 %883
      %885 = vrot.lane.b32.xlu0 %v505, 111
      %v886 = vpop.permute.xlu0 %885
      %887 = vrot.lane.b32.xlu0 %v506, 111
      %v888 = vpop.permute.xlu0 %887
      %889 = vrot.lane.b32.xlu0 %v507, 111
      %v890 = vpop.permute.xlu0 %889
      %891 = vrot.lane.b32.xlu0 %v508, 111
      %v892 = vpop.permute.xlu0 %891
      %893 = vrot.lane.b32.xlu0 %v509, 111
      %v894 = vpop.permute.xlu0 %893
      %895 = vrot.lane.b32.xlu0 %v510, 111
      %v896 = vpop.permute.xlu0 %895
      %897 = vrot.lane.b32.xlu0 %v511, 111
      %v898 = vpop.permute.xlu0 %897
      %899 = vrot.lane.b32.xlu0 %v512, 111
      %v900 = vpop.permute.xlu0 %899
      %901 = vrot.lane.b32.xlu0 %v513, 111
      %v902 = vpop.permute.xlu0 %901
      %903 = vrot.lane.b32.xlu0 %v514, 111
      %v904 = vpop.permute.xlu0 %903
      %905 = vrot.lane.b32.xlu0 %v515, 111
      %v906 = vpop.permute.xlu0 %905
      %907 = vrot.lane.b32.xlu0 %v516, 111
      %v908 = vpop.permute.xlu0 %907
      %909 = vrot.lane.b32.xlu0 %v517, 111
      %v910 = vpop.permute.xlu0 %909
      %911 = vrot.lane.b32.xlu0 %v518, 111
      %v912 = vpop.permute.xlu0 %911
      %913 = vrot.lane.b32.xlu0 %v519, 111
      %v914 = vpop.permute.xlu0 %913
      %915 = vrot.lane.b32.xlu0 %v520, 111
      %v916 = vpop.permute.xlu0 %915
      %917 = vrot.lane.b32.xlu0 %v521, 111
      %v918 = vpop.permute.xlu0 %917
      %vm919 = vcmask 908288
      %v920 = vsel %vm919, %v870, %v872
      %v921 = vsel %vm919, %v872, %v874
      %v922 = vsel %vm919, %v874, %v876
      %v923 = vsel %vm919, %v876, %v878
      %v924 = vsel %vm919, %v880, %v882
      %v925 = vsel %vm919, %v882, %v884
      %v926 = vsel %vm919, %v884, %v886
      %v927 = vsel %vm919, %v886, %v888
      %v928 = vsel %vm919, %v890, %v892
      %v929 = vsel %vm919, %v892, %v894
      %v930 = vsel %vm919, %v894, %v896
      %v931 = vsel %vm919, %v896, %v898
      %v932 = vsel %vm919, %v900, %v902
      %v933 = vsel %vm919, %v902, %v904
      %v934 = vsel %vm919, %v904, %v906
      %v935 = vsel %vm919, %v906, %v908
      %v936 = vsel %vm919, %v910, %v912
      %v937 = vsel %vm919, %v912, %v914
      %v938 = vsel %vm919, %v914, %v916
      %v939 = vsel %vm919, %v916, %v918
      %v961 = vsel %vm719, %v496, 0
      %v964 = vsel %vm723, %v936, 0
      %v967 = vsel %vm723, %v937, 0
      %v970 = vsel %vm723, %v938, 0
      %v973 = vsel %vm723, %v939, 0
      %v976 = vsel %vm723, %v918, 0
      %978 = vmatprep.subr.bf16.mxu0 %v921
      %979 = vmatpush1.bf16.msra.mxu0 %v920
      %980 = vmatprep.subr.bf16.mxu0 %v925
      %981 = vmatpush1.bf16.msra.mxu0 %v924
      %982 = vmatprep.subr.bf16.mxu0 %v929
      %983 = vmatpush1.bf16.msra.mxu0 %v928
      %984 = vmatprep.subr.bf16.mxu0 %v933
      %985 = vmatpush1.bf16.msra.mxu0 %v932
      %986 = vmatprep.subr.bf16.mxu0 %v967
      %987 = vmatpush1.bf16.msra.mxu0 %v964
      %988 = vmatprep.subr.bf16.mxu0 0
      %989 = vmatpush1.bf16.msra.mxu0 0
      %990 = vmatprep.subr.bf16.mxu0 0
      %991 = vmatpush1.bf16.msra.mxu0 0
      %992 = vmatprep.subr.bf16.mxu0 0
      %993 = vmatpush1.bf16.msra.mxu0 0
      %994 = vmatprep.subr.bf16.mxu0 0
      %995 = vmatpush1.bf16.msra.mxu0 0
      %996 = vmatprep.subr.bf16.mxu0 0
      %997 = vmatpush1.bf16.msra.mxu0 0
      %998 = vmatprep.subr.bf16.mxu0 0
      %999 = vmatpush1.bf16.msra.mxu0 0
      %1000 = vmatprep.subr.bf16.mxu0 0
      %1001 = vmatpush1.bf16.msra.mxu0 0
      %1002 = vmatprep.subr.bf16.mxu0 0
      %1003 = vmatpush1.bf16.msra.mxu0 0
      %1004 = vmatprep.subr.bf16.mxu0 0
      %1005 = vmatpush1.bf16.msra.mxu0 0
      %1006 = vmatprep.subr.bf16.mxu0 0
      %1007 = vmatpush1.bf16.msra.mxu0 0
      %1008 = vmatprep.subr.bf16.mxu0 0
      %1009 = vmatpush1.bf16.msra.mxu0 0
      %1010 = vmatprep.mubr.bf16.mxu0 0
      %1011 = vmatmul.mubr.bf16.gmra.mrb[0].mxu0 %v961
      %v1012 = vpop.f32.mrb[0].mxu0
      %v1013 = vadd.f32 %v774, %v1012
      %v1014 = vpop.f32.mrb[0].mxu0
      %v1015 = vadd.f32 %v776, %v1014
      %v1016 = vpop.f32.mrb[0].mxu0
      %v1017 = vpop.f32.mrb[0].mxu0
      %1018 = vdwg.mxu0
      %1019 = vmatprep.subr.bf16.mxu0 %v923
      %1020 = vmatpush1.bf16.msra.mxu0 %v922
      %1021 = vmatprep.subr.bf16.mxu0 %v927
      %1022 = vmatpush1.bf16.msra.mxu0 %v926
      %1023 = vmatprep.subr.bf16.mxu0 %v931
      %1024 = vmatpush1.bf16.msra.mxu0 %v930
      %1025 = vmatprep.subr.bf16.mxu0 %v935
      %1026 = vmatpush1.bf16.msra.mxu0 %v934
      %1027 = vmatprep.subr.bf16.mxu0 %v973
      %1028 = vmatpush1.bf16.msra.mxu0 %v970
      %1029 = vmatprep.subr.bf16.mxu0 0
      %1030 = vmatpush1.bf16.msra.mxu0 0
      %1031 = vmatprep.subr.bf16.mxu0 0
      %1032 = vmatpush1.bf16.msra.mxu0 0
      %1033 = vmatprep.subr.bf16.mxu0 0
      %1034 = vmatpush1.bf16.msra.mxu0 0
      %1035 = vmatprep.subr.bf16.mxu0 0
      %1036 = vmatpush1.bf16.msra.mxu0 0
      %1037 = vmatprep.subr.bf16.mxu0 0
      %1038 = vmatpush1.bf16.msra.mxu0 0
      %1039 = vmatprep.subr.bf16.mxu0 0
      %1040 = vmatpush1.bf16.msra.mxu0 0
      %1041 = vmatprep.subr.bf16.mxu0 0
      %1042 = vmatpush1.bf16.msra.mxu0 0
      %1043 = vmatprep.subr.bf16.mxu0 0
      %1044 = vmatpush1.bf16.msra.mxu0 0
      %1045 = vmatprep.subr.bf16.mxu0 0
      %1046 = vmatpush1.bf16.msra.mxu0 0
      %1047 = vmatprep.subr.bf16.mxu0 0
      %1048 = vmatpush1.bf16.msra.mxu0 0
      %1049 = vmatprep.subr.bf16.mxu0 0
      %1050 = vmatpush1.bf16.msra.mxu0 0
      %1051 = vmatprep.mubr.bf16.mxu0 0
      %1052 = vmatmul.mubr.bf16.gmra.mrb[0].mxu0 %v961
      %v1053 = vpop.f32.mrb[0].mxu0
      %v1054 = vadd.f32 %v815, %v1053
      %v1055 = vpop.f32.mrb[0].mxu0
      %v1056 = vadd.f32 %v817, %v1055
      %v1057 = vpop.f32.mrb[0].mxu0
      %v1058 = vpop.f32.mrb[0].mxu0
      %1059 = vdwg.mxu0
      %1060 = vmatprep.subr.bf16.mxu0 0
      %1061 = vmatpush1.bf16.msra.mxu0 %v878
      %1062 = vmatprep.subr.bf16.mxu0 0
      %1063 = vmatpush1.bf16.msra.mxu0 %v888
      %1064 = vmatprep.subr.bf16.mxu0 0
      %1065 = vmatpush1.bf16.msra.mxu0 %v898
      %1066 = vmatprep.subr.bf16.mxu0 0
      %1067 = vmatpush1.bf16.msra.mxu0 %v908
      %1068 = vmatprep.subr.bf16.mxu0 0
      %1069 = vmatpush1.bf16.msra.mxu0 %v976
      %1070 = vmatprep.subr.bf16.mxu0 0
      %1071 = vmatpush1.bf16.msra.mxu0 0
      %1072 = vmatprep.subr.bf16.mxu0 0
      %1073 = vmatpush1.bf16.msra.mxu0 0
      %1074 = vmatprep.subr.bf16.mxu0 0
      %1075 = vmatpush1.bf16.msra.mxu0 0
      %1076 = vmatprep.subr.bf16.mxu0 0
      %1077 = vmatpush1.bf16.msra.mxu0 0
      %1078 = vmatprep.subr.bf16.mxu0 0
      %1079 = vmatpush1.bf16.msra.mxu0 0
      %1080 = vmatprep.subr.bf16.mxu0 0
      %1081 = vmatpush1.bf16.msra.mxu0 0
      %1082 = vmatprep.subr.bf16.mxu0 0
      %1083 = vmatpush1.bf16.msra.mxu0 0
      %1084 = vmatprep.subr.bf16.mxu0 0
      %1085 = vmatpush1.bf16.msra.mxu0 0
      %1086 = vmatprep.subr.bf16.mxu0 0
      %1087 = vmatpush1.bf16.msra.mxu0 0
      %1088 = vmatprep.subr.bf16.mxu0 0
      %1089 = vmatpush1.bf16.msra.mxu0 0
      %1090 = vmatprep.subr.bf16.mxu0 0
      %1091 = vmatpush1.bf16.msra.mxu0 0
      %1092 = vmatprep.mubr.bf16.mxu0 0
      %1093 = vmatmul.mubr.bf16.gmra.mrb[0].mxu0 %v961
      %v1094 = vpop.f32.mrb[0].mxu0
      %v1095 = vadd.f32 %v856, %v1094
      %v1096 = vpop.f32.mrb[0].mxu0
      %v1097 = vpop.f32.mrb[0].mxu0
      %v1098 = vpop.f32.mrb[0].mxu0
      %1099 = vdwg.mxu0
      %1101 = vrot.lane.b32.xlu0 %v330, 127
      %v1102 = vpop.permute.xlu0 %1101
      %v1103 = vsel %vm346, %v524, %v1102
      %1106 = vrot.lane.b32.xlu0 %v330, 126
      %v1107 = vpop.permute.xlu0 %1106
      %v1108 = vsel %vm366, %v529, %v1107
      %1111 = vrot.lane.b32.xlu0 %v330, 118
      %v1112 = vpop.permute.xlu0 %1111
      %v1113 = vsel %vm386, %v534, %v1112
      %1116 = vrot.lane.b32.xlu0 %v330, 117
      %v1117 = vpop.permute.xlu0 %1116
      %v1118 = vsel %vm406, %v539, %v1117
      %1121 = vrot.lane.b32.xlu0 %v330, 116
      %v1122 = vpop.permute.xlu0 %1121
      %v1123 = vsel %vm426, %v545, %v1122
      %1126 = vrot.lane.b32.xlu0 %v330, 108
      %v1127 = vpop.permute.xlu0 %1126
      %v1128 = vsel %vm446, %v551, %v1127
      %1131 = vrot.lane.b32.xlu0 %v330, 107
      %v1132 = vpop.permute.xlu0 %1131
      %v1133 = vsel %vm466, %v557, %v1132
      %1136 = vrot.lane.b32.xlu0 %v330, 106
      %v1137 = vpop.permute.xlu0 %1136
      %v1138 = vsel %vm486, %v563, %v1137
      %s1141 = scalar_lea.vmem %s2, 8
      %v1142 = vld [vmem:[%s1141] sm:$0xf]
      %v1143 = vpack.c.bf16 %v1103, %v329
      %v1144 = vpack.c.bf16 %v1102, %v330
      %v1145 = vpack.c.bf16 %v1113, %v1108
      %v1146 = vpack.c.bf16 %v1112, %v1107
      %v1147 = vpack.c.bf16 %v1123, %v1118
      %v1148 = vpack.c.bf16 %v1122, %v1117
      %v1149 = vpack.c.bf16 %v1133, %v1128
      %v1150 = vpack.c.bf16 %v1132, %v1127
      %v1151 = vpack.c.bf16 %v1138, %v1138
      %v1152 = vpack.c.bf16 %v1137, %v1137
      %1163 = vrot.lane.b32.xlu0 %v498, 39
      %v1164 = vpop.permute.xlu0 %1163
      %1165 = vrot.lane.b32.xlu0 %v499, 39
      %v1166 = vpop.permute.xlu0 %1165
      %1167 = vrot.lane.b32.xlu0 %v500, 39
      %v1168 = vpop.permute.xlu0 %1167
      %1169 = vrot.lane.b32.xlu0 %v570, 39
      %v1170 = vpop.permute.xlu0 %1169
      %1171 = vrot.lane.b32.xlu0 %v1143, 39
      %v1172 = vpop.permute.xlu0 %1171
      %1173 = vrot.lane.b32.xlu0 %v1144, 39
      %v1174 = vpop.permute.xlu0 %1173
      %1175 = vrot.lane.b32.xlu0 %v503, 39
      %v1176 = vpop.permute.xlu0 %1175
      %1177 = vrot.lane.b32.xlu0 %v504, 39
      %v1178 = vpop.permute.xlu0 %1177
      %1179 = vrot.lane.b32.xlu0 %v505, 39
      %v1180 = vpop.permute.xlu0 %1179
      %1181 = vrot.lane.b32.xlu0 %v572, 39
      %v1182 = vpop.permute.xlu0 %1181
      %1183 = vrot.lane.b32.xlu0 %v1145, 39
      %v1184 = vpop.permute.xlu0 %1183
      %1185 = vrot.lane.b32.xlu0 %v1146, 39
      %v1186 = vpop.permute.xlu0 %1185
      %1187 = vrot.lane.b32.xlu0 %v508, 39
      %v1188 = vpop.permute.xlu0 %1187
      %1189 = vrot.lane.b32.xlu0 %v509, 39
      %v1190 = vpop.permute.xlu0 %1189
      %1191 = vrot.lane.b32.xlu0 %v510, 39
      %v1192 = vpop.permute.xlu0 %1191
      %1193 = vrot.lane.b32.xlu0 %v575, 39
      %v1194 = vpop.permute.xlu0 %1193
      %1195 = vrot.lane.b32.xlu0 %v1147, 39
      %v1196 = vpop.permute.xlu0 %1195
      %1197 = vrot.lane.b32.xlu0 %v1148, 39
      %v1198 = vpop.permute.xlu0 %1197
      %1199 = vrot.lane.b32.xlu0 %v513, 39
      %v1200 = vpop.permute.xlu0 %1199
      %1201 = vrot.lane.b32.xlu0 %v514, 39
      %v1202 = vpop.permute.xlu0 %1201
      %1203 = vrot.lane.b32.xlu0 %v515, 39
      %v1204 = vpop.permute.xlu0 %1203
      %1205 = vrot.lane.b32.xlu0 %v578, 39
      %v1206 = vpop.permute.xlu0 %1205
      %1207 = vrot.lane.b32.xlu0 %v1149, 39
      %v1208 = vpop.permute.xlu0 %1207
      %1209 = vrot.lane.b32.xlu0 %v1150, 39
      %v1210 = vpop.permute.xlu0 %1209
      %1211 = vrot.lane.b32.xlu0 %v518, 39
      %v1212 = vpop.permute.xlu0 %1211
      %1213 = vrot.lane.b32.xlu0 %v519, 39
      %v1214 = vpop.permute.xlu0 %1213
      %1215 = vrot.lane.b32.xlu0 %v520, 39
      %v1216 = vpop.permute.xlu0 %1215
      %1217 = vrot.lane.b32.xlu0 %v581, 39
      %v1218 = vpop.permute.xlu0 %1217
      %1219 = vrot.lane.b32.xlu0 %v1151, 39
      %v1220 = vpop.permute.xlu0 %1219
      %1221 = vrot.lane.b32.xlu0 %v1152, 39
      %v1222 = vpop.permute.xlu0 %1221
      %vm1223 = vcmask 318464
      %v1224 = vsel %vm1223, %v1164, %v1166
      %v1225 = vsel %vm1223, %v1166, %v1168
      %v1226 = vsel %vm1223, %v1168, %v1170
      %v1227 = vsel %vm1223, %v1170, %v1172
      %v1228 = vsel %vm1223, %v1172, %v1174
      %v1229 = vsel %vm1223, %v1176, %v1178
      %v1230 = vsel %vm1223, %v1178, %v1180
      %v1231 = vsel %vm1223, %v1180, %v1182
      %v1232 = vsel %vm1223, %v1182, %v1184
      %v1233 = vsel %vm1223, %v1184, %v1186
      %v1234 = vsel %vm1223, %v1188, %v1190
      %v1235 = vsel %vm1223, %v1190, %v1192
      %v1236 = vsel %vm1223, %v1192, %v1194
      %v1237 = vsel %vm1223, %v1194, %v1196
      %v1238 = vsel %vm1223, %v1196, %v1198
      %v1239 = vsel %vm1223, %v1200, %v1202
      %v1240 = vsel %vm1223, %v1202, %v1204
      %v1241 = vsel %vm1223, %v1204, %v1206
      %v1242 = vsel %vm1223, %v1206, %v1208
      %v1243 = vsel %vm1223, %v1208, %v1210
      %v1244 = vsel %vm1223, %v1212, %v1214
      %v1245 = vsel %vm1223, %v1214, %v1216
      %v1246 = vsel %vm1223, %v1216, %v1218
      %v1247 = vsel %vm1223, %v1218, %v1220
      %v1248 = vsel %vm1223, %v1220, %v1222
      %v1270 = vsel %vm719, %v1142, 0
      %v1273 = vsel %vm723, %v1244, 0
      %v1276 = vsel %vm723, %v1245, 0
      %v1279 = vsel %vm723, %v1246, 0
      %v1282 = vsel %vm723, %v1247, 0
      %v1285 = vsel %vm723, %v1248, 0
      %1287 = vmatprep.subr.bf16.mxu0 %v1225
      %1288 = vmatpush1.bf16.msra.mxu0 %v1224
      %1289 = vmatprep.subr.bf16.mxu0 %v1230
      %1290 = vmatpush1.bf16.msra.mxu0 %v1229
      %1291 = vmatprep.subr.bf16.mxu0 %v1235
      %1292 = vmatpush1.bf16.msra.mxu0 %v1234
      %1293 = vmatprep.subr.bf16.mxu0 %v1240
      %1294 = vmatpush1.bf16.msra.mxu0 %v1239
      %1295 = vmatprep.subr.bf16.mxu0 %v1276
      %1296 = vmatpush1.bf16.msra.mxu0 %v1273
      %1297 = vmatprep.subr.bf16.mxu0 0
      %1298 = vmatpush1.bf16.msra.mxu0 0
      %1299 = vmatprep.subr.bf16.mxu0 0
      %1300 = vmatpush1.bf16.msra.mxu0 0
      %1301 = vmatprep.subr.bf16.mxu0 0
      %1302 = vmatpush1.bf16.msra.mxu0 0
      %1303 = vmatprep.subr.bf16.mxu0 0
      %1304 = vmatpush1.bf16.msra.mxu0 0
      %1305 = vmatprep.subr.bf16.mxu0 0
      %1306 = vmatpush1.bf16.msra.mxu0 0
      %1307 = vmatprep.subr.bf16.mxu0 0
      %1308 = vmatpush1.bf16.msra.mxu0 0
      %1309 = vmatprep.subr.bf16.mxu0 0
      %1310 = vmatpush1.bf16.msra.mxu0 0
      %1311 = vmatprep.subr.bf16.mxu0 0
      %1312 = vmatpush1.bf16.msra.mxu0 0
      %1313 = vmatprep.subr.bf16.mxu0 0
      %1314 = vmatpush1.bf16.msra.mxu0 0
      %1315 = vmatprep.subr.bf16.mxu0 0
      %1316 = vmatpush1.bf16.msra.mxu0 0
      %1317 = vmatprep.subr.bf16.mxu0 0
      %1318 = vmatpush1.bf16.msra.mxu0 0
      %1319 = vmatprep.mubr.bf16.mxu0 0
      %1320 = vmatmul.mubr.bf16.gmra.mrb[0].mxu0 %v1270
      %v1321 = vpop.f32.mrb[0].mxu0
      %v1322 = vadd.f32 0.0, %v1321
      %v1323 = vpop.f32.mrb[0].mxu0
      %v1324 = vadd.f32 0.0, %v1323
      %v1325 = vpop.f32.mrb[0].mxu0
      %v1326 = vpop.f32.mrb[0].mxu0
      %1327 = vdwg.mxu0
      %1328 = vmatprep.subr.bf16.mxu0 %v1227
      %1329 = vmatpush1.bf16.msra.mxu0 %v1226
      %1330 = vmatprep.subr.bf16.mxu0 %v1232
      %1331 = vmatpush1.bf16.msra.mxu0 %v1231
      %1332 = vmatprep.subr.bf16.mxu0 %v1237
      %1333 = vmatpush1.bf16.msra.mxu0 %v1236
      %1334 = vmatprep.subr.bf16.mxu0 %v1242
      %1335 = vmatpush1.bf16.msra.mxu0 %v1241
      %1336 = vmatprep.subr.bf16.mxu0 %v1282
      %1337 = vmatpush1.bf16.msra.mxu0 %v1279
      %1338 = vmatprep.subr.bf16.mxu0 0
      %1339 = vmatpush1.bf16.msra.mxu0 0
      %1340 = vmatprep.subr.bf16.mxu0 0
      %1341 = vmatpush1.bf16.msra.mxu0 0
      %1342 = vmatprep.subr.bf16.mxu0 0
      %1343 = vmatpush1.bf16.msra.mxu0 0
      %1344 = vmatprep.subr.bf16.mxu0 0
      %1345 = vmatpush1.bf16.msra.mxu0 0
      %1346 = vmatprep.subr.bf16.mxu0 0
      %1347 = vmatpush1.bf16.msra.mxu0 0
      %1348 = vmatprep.subr.bf16.mxu0 0
      %1349 = vmatpush1.bf16.msra.mxu0 0
      %1350 = vmatprep.subr.bf16.mxu0 0
      %1351 = vmatpush1.bf16.msra.mxu0 0
      %1352 = vmatprep.subr.bf16.mxu0 0
      %1353 = vmatpush1.bf16.msra.mxu0 0
      %1354 = vmatprep.subr.bf16.mxu0 0
      %1355 = vmatpush1.bf16.msra.mxu0 0
      %1356 = vmatprep.subr.bf16.mxu0 0
      %1357 = vmatpush1.bf16.msra.mxu0 0
      %1358 = vmatprep.subr.bf16.mxu0 0
      %1359 = vmatpush1.bf16.msra.mxu0 0
      %1360 = vmatprep.mubr.bf16.mxu0 0
      %1361 = vmatmul.mubr.bf16.gmra.mrb[0].mxu0 %v1270
      %v1362 = vpop.f32.mrb[0].mxu0
      %v1363 = vadd.f32 0.0, %v1362
      %v1364 = vpop.f32.mrb[0].mxu0
      %v1365 = vadd.f32 0.0, %v1364
      %v1366 = vpop.f32.mrb[0].mxu0
      %v1367 = vpop.f32.mrb[0].mxu0
      %1368 = vdwg.mxu0
      %1369 = vmatprep.subr.bf16.mxu0 0
      %1370 = vmatpush1.bf16.msra.mxu0 %v1228
      %1371 = vmatprep.subr.bf16.mxu0 0
      %1372 = vmatpush1.bf16.msra.mxu0 %v1233
      %1373 = vmatprep.subr.bf16.mxu0 0
      %1374 = vmatpush1.bf16.msra.mxu0 %v1238
      %1375 = vmatprep.subr.bf16.mxu0 0
      %1376 = vmatpush1.bf16.msra.mxu0 %v1243
      %1377 = vmatprep.subr.bf16.mxu0 0
      %1378 = vmatpush1.bf16.msra.mxu0 %v1285
      %1379 = vmatprep.subr.bf16.mxu0 0
      %1380 = vmatpush1.bf16.msra.mxu0 0
      %1381 = vmatprep.subr.bf16.mxu0 0
      %1382 = vmatpush1.bf16.msra.mxu0 0
      %1383 = vmatprep.subr.bf16.mxu0 0
      %1384 = vmatpush1.bf16.msra.mxu0 0
      %1385 = vmatprep.subr.bf16.mxu0 0
      %1386 = vmatpush1.bf16.msra.mxu0 0
      %1387 = vmatprep.subr.bf16.mxu0 0
      %1388 = vmatpush1.bf16.msra.mxu0 0
      %1389 = vmatprep.subr.bf16.mxu0 0
      %1390 = vmatpush1.bf16.msra.mxu0 0
      %1391 = vmatprep.subr.bf16.mxu0 0
      %1392 = vmatpush1.bf16.msra.mxu0 0
      %1393 = vmatprep.subr.bf16.mxu0 0
      %1394 = vmatpush1.bf16.msra.mxu0 0
      %1395 = vmatprep.subr.bf16.mxu0 0
      %1396 = vmatpush1.bf16.msra.mxu0 0
      %1397 = vmatprep.subr.bf16.mxu0 0
      %1398 = vmatpush1.bf16.msra.mxu0 0
      %1399 = vmatprep.subr.bf16.mxu0 0
      %1400 = vmatpush1.bf16.msra.mxu0 0
      %1401 = vmatprep.mubr.bf16.mxu0 0
      %1402 = vmatmul.mubr.bf16.gmra.mrb[0].mxu0 %v1270
      %v1403 = vpop.f32.mrb[0].mxu0
      %v1404 = vadd.f32 0.0, %v1403
      %v1405 = vpop.f32.mrb[0].mxu0
      %v1406 = vpop.f32.mrb[0].mxu0
      %v1407 = vpop.f32.mrb[0].mxu0
      %1408 = vdwg.mxu0
      %v1409 = vadd.f32 %v1013, %v1322
      %v1410 = vadd.f32 %v1015, %v1324
      %v1411 = vadd.f32 %v1054, %v1363
      %v1412 = vadd.f32 %v1056, %v1365
      %v1413 = vadd.f32 %v1095, %v1404
      %v1414 = vld [vmem:[%s3] sm:$0xff]
      %1416 = vset.pattern.permute.xlu0 0
      %1417 = vperm.xlu0 %1416, %v1414
      %v1418 = vpop.permute.xlu0 %1417
      %v1420 = vadd.f32 %v1409, %v1418
      %v1421 = vadd.f32 %v1410, %v1418
      %v1422 = vadd.f32 %v1411, %v1418
      %v1423 = vadd.f32 %v1412, %v1418
      %v1424 = vadd.f32 %v1413, %v1418
      %vm1425 = vcmp.gt.f32.partialorder %v1420, 0.0
      %vm1426 = vcmp.gt.f32.partialorder %v1421, 0.0
      %vm1427 = vcmp.gt.f32.partialorder %v1422, 0.0
      %vm1428 = vcmp.gt.f32.partialorder %v1423, 0.0
      %vm1429 = vcmp.gt.f32.partialorder %v1424, 0.0
      %v1430 = vmul.f32 %v1420, 0.2
      %v1431 = vmul.f32 %v1421, 0.2
      %v1432 = vmul.f32 %v1422, 0.2
      %v1433 = vmul.f32 %v1423, 0.2
      %v1434 = vmul.f32 %v1424, 0.2
      %v1435 = vsel %vm1425, %v1420, %v1430
      %v1436 = vsel %vm1426, %v1421, %v1431
      %v1437 = vsel %vm1427, %v1422, %v1432
      %v1438 = vsel %vm1428, %v1423, %v1433
      %v1439 = vsel %vm1429, %v1424, %v1434
      %v1440 = vadd.f32 %v1435, 0.0
      %v1441 = vadd.f32 %v1436, 0.0
      %v1442 = vadd.f32 %v1437, 0.0
      %v1443 = vadd.f32 %v1438, 0.0
      %v1444 = vadd.f32 %v1439, 0.0
      %v1445 = vld [vmem:[%s293 + $0x8] sm:$0xff]
      %v1446 = vld [vmem:[%s293 + $0x10] sm:$0xff]
      %v1447 = vld [vmem:[%s293 + $0x18] sm:$0xff]
      %v1448 = vld [vmem:[%s293 + $0x20] sm:$0xff]
      %v1449 = vld [vmem:[%s293 + $0x28] sm:$0xff]
      %v1450 = vadd.f32 %v1440, %v1445
      %v1451 = vadd.f32 %v1441, %v1446
      %v1452 = vadd.f32 %v1442, %v1447
      %v1453 = vadd.f32 %v1443, %v1448
      %v1454 = vadd.f32 %v1444, %v1449
      %v1455 = vsel %vm323, 1, 0
      %v1456 = vlaneseq
      %v1457 = vshrl.u32 %v1456, 7
      %v1458 = vsub.s32 0, %v1457
      %v1459 = vrot.slane %v1455, %v1458
      %v1460 = vlaneseq
      %v1461 = vshrl.u32 %v1460, 7
      %v1462 = vsub.s32 1, %v1461
      %v1463 = vrot.slane %v1455, %v1462
      %v1464 = vlaneseq
      %v1465 = vshrl.u32 %v1464, 7
      %v1466 = vsub.s32 2, %v1465
      %v1467 = vrot.slane %v1455, %v1466
      %v1468 = vlaneseq
      %v1469 = vshrl.u32 %v1468, 7
      %v1470 = vsub.s32 3, %v1469
      %v1471 = vrot.slane %v1455, %v1470
      %v1472 = vlaneseq
      %v1473 = vshrl.u32 %v1472, 7
      %v1474 = vsub.s32 4, %v1473
      %v1475 = vrot.slane %v1455, %v1474
      %vm1476 = vcmp.eq.s32.totalorder %v1459, 1
      %vm1477 = vcmp.eq.s32.totalorder %v1463, 1
      %vm1478 = vcmp.eq.s32.totalorder %v1467, 1
      %vm1479 = vcmp.eq.s32.totalorder %v1471, 1
      %vm1480 = vcmp.eq.s32.totalorder %v1475, 1
      %v1481 = vsel %vm1476, %v1450, 0.0
      %v1482 = vsel %vm1477, %v1451, 0.0
      %v1483 = vsel %vm1478, %v1452, 0.0
      %v1484 = vsel %vm1479, %v1453, 0.0
      %v1485 = vsel %vm1480, %v1454, 0.0
      %1486 = vst [vmem:[#allocation2 + $0x8] sm:$0xff] %v1481
      %1487 = vst [vmem:[#allocation2 + $0x10] sm:$0xff] %v1482
      %1488 = vst [vmem:[#allocation2 + $0x18] sm:$0xff] %v1483
      %1489 = vst [vmem:[#allocation2 + $0x20] sm:$0xff] %v1484
      %1490 = vst.msk [vmem:[#allocation2 + $0x28] sm:$0xff] %vm306, %v1485
      %v1491 = vld [vmem:[#allocation2] sm:$0xff]
      %v1492 = vld [vmem:[#allocation2 + $0x8] sm:$0xff]
      %v1493 = vld [vmem:[#allocation2 + $0x10] sm:$0xff]
      %v1494 = vld [vmem:[#allocation2 + $0x18] sm:$0xff]
      %v1495 = vld [vmem:[#allocation2 + $0x20] sm:$0xff]
      %v1496 = vld [vmem:[#allocation2 + $0x28] sm:$0xff]
      %v1497 = vld [vmem:[#allocation2 + $0x30] sm:$0xff]
      %1503 = vrot.lane.b32.xlu0 %v1491, 127
      %v1504 = vpop.permute.xlu0 %1503
      %1505 = vrot.lane.b32.xlu0 %v1492, 127
      %v1506 = vpop.permute.xlu0 %1505
      %1507 = vrot.lane.b32.xlu0 %v1493, 127
      %v1508 = vpop.permute.xlu0 %1507
      %1509 = vrot.lane.b32.xlu0 %v1494, 127
      %v1510 = vpop.permute.xlu0 %1509
      %1511 = vrot.lane.b32.xlu0 %v1495, 127
      %v1512 = vpop.permute.xlu0 %1511
      %v1513 = vsel %vm346, %v1504, %v1506
      %v1514 = vsel %vm346, %v1506, %v1508
      %v1515 = vsel %vm346, %v1508, %v1510
      %v1516 = vsel %vm346, %v1510, %v1512
      %1522 = vrot.lane.b32.xlu0 %v1491, 126
      %v1523 = vpop.permute.xlu0 %1522
      %1524 = vrot.lane.b32.xlu0 %v1492, 126
      %v1525 = vpop.permute.xlu0 %1524
      %1526 = vrot.lane.b32.xlu0 %v1493, 126
      %v1527 = vpop.permute.xlu0 %1526
      %1528 = vrot.lane.b32.xlu0 %v1494, 126
      %v1529 = vpop.permute.xlu0 %1528
      %1530 = vrot.lane.b32.xlu0 %v1495, 126
      %v1531 = vpop.permute.xlu0 %1530
      %v1532 = vsel %vm366, %v1523, %v1525
      %v1533 = vsel %vm366, %v1525, %v1527
      %v1534 = vsel %vm366, %v1527, %v1529
      %v1535 = vsel %vm366, %v1529, %v1531
      %1541 = vrot.lane.b32.xlu0 %v1491, 118
      %v1542 = vpop.permute.xlu0 %1541
      %1543 = vrot.lane.b32.xlu0 %v1492, 118
      %v1544 = vpop.permute.xlu0 %1543
      %1545 = vrot.lane.b32.xlu0 %v1493, 118
      %v1546 = vpop.permute.xlu0 %1545
      %1547 = vrot.lane.b32.xlu0 %v1494, 118
      %v1548 = vpop.permute.xlu0 %1547
      %1549 = vrot.lane.b32.xlu0 %v1495, 118
      %v1550 = vpop.permute.xlu0 %1549
      %v1551 = vsel %vm386, %v1542, %v1544
      %v1552 = vsel %vm386, %v1544, %v1546
      %v1553 = vsel %vm386, %v1546, %v1548
      %v1554 = vsel %vm386, %v1548, %v1550
      %1560 = vrot.lane.b32.xlu0 %v1491, 117
      %v1561 = vpop.permute.xlu0 %1560
      %1562 = vrot.lane.b32.xlu0 %v1492, 117
      %v1563 = vpop.permute.xlu0 %1562
      %1564 = vrot.lane.b32.xlu0 %v1493, 117
      %v1565 = vpop.permute.xlu0 %1564
      %1566 = vrot.lane.b32.xlu0 %v1494, 117
      %v1567 = vpop.permute.xlu0 %1566
      %1568 = vrot.lane.b32.xlu0 %v1495, 117
      %v1569 = vpop.permute.xlu0 %1568
      %v1570 = vsel %vm406, %v1561, %v1563
      %v1571 = vsel %vm406, %v1563, %v1565
      %v1572 = vsel %vm406, %v1565, %v1567
      %v1573 = vsel %vm406, %v1567, %v1569
      %1579 = vrot.lane.b32.xlu0 %v1491, 116
      %v1580 = vpop.permute.xlu0 %1579
      %1581 = vrot.lane.b32.xlu0 %v1492, 116
      %v1582 = vpop.permute.xlu0 %1581
      %1583 = vrot.lane.b32.xlu0 %v1493, 116
      %v1584 = vpop.permute.xlu0 %1583
      %1585 = vrot.lane.b32.xlu0 %v1494, 116
      %v1586 = vpop.permute.xlu0 %1585
      %1587 = vrot.lane.b32.xlu0 %v1495, 116
      %v1588 = vpop.permute.xlu0 %1587
      %v1589 = vsel %vm426, %v1580, %v1582
      %v1590 = vsel %vm426, %v1582, %v1584
      %v1591 = vsel %vm426, %v1584, %v1586
      %v1592 = vsel %vm426, %v1586, %v1588
      %1598 = vrot.lane.b32.xlu0 %v1491, 108
      %v1599 = vpop.permute.xlu0 %1598
      %1600 = vrot.lane.b32.xlu0 %v1492, 108
      %v1601 = vpop.permute.xlu0 %1600
      %1602 = vrot.lane.b32.xlu0 %v1493, 108
      %v1603 = vpop.permute.xlu0 %1602
      %1604 = vrot.lane.b32.xlu0 %v1494, 108
      %v1605 = vpop.permute.xlu0 %1604
      %1606 = vrot.lane.b32.xlu0 %v1495, 108
      %v1607 = vpop.permute.xlu0 %1606
      %v1608 = vsel %vm446, %v1599, %v1601
      %v1609 = vsel %vm446, %v1601, %v1603
      %v1610 = vsel %vm446, %v1603, %v1605
      %v1611 = vsel %vm446, %v1605, %v1607
      %1617 = vrot.lane.b32.xlu0 %v1491, 107
      %v1618 = vpop.permute.xlu0 %1617
      %1619 = vrot.lane.b32.xlu0 %v1492, 107
      %v1620 = vpop.permute.xlu0 %1619
      %1621 = vrot.lane.b32.xlu0 %v1493, 107
      %v1622 = vpop.permute.xlu0 %1621
      %1623 = vrot.lane.b32.xlu0 %v1494, 107
      %v1624 = vpop.permute.xlu0 %1623
      %1625 = vrot.lane.b32.xlu0 %v1495, 107
      %v1626 = vpop.permute.xlu0 %1625
      %v1627 = vsel %vm466, %v1618, %v1620
      %v1628 = vsel %vm466, %v1620, %v1622
      %v1629 = vsel %vm466, %v1622, %v1624
      %v1630 = vsel %vm466, %v1624, %v1626
      %1636 = vrot.lane.b32.xlu0 %v1491, 106
      %v1637 = vpop.permute.xlu0 %1636
      %1638 = vrot.lane.b32.xlu0 %v1492, 106
      %v1639 = vpop.permute.xlu0 %1638
      %1640 = vrot.lane.b32.xlu0 %v1493, 106
      %v1641 = vpop.permute.xlu0 %1640
      %1642 = vrot.lane.b32.xlu0 %v1494, 106
      %v1643 = vpop.permute.xlu0 %1642
      %1644 = vrot.lane.b32.xlu0 %v1495, 106
      %v1645 = vpop.permute.xlu0 %1644
      %v1646 = vsel %vm486, %v1637, %v1639
      %v1647 = vsel %vm486, %v1639, %v1641
      %v1648 = vsel %vm486, %v1641, %v1643
      %v1649 = vsel %vm486, %v1643, %v1645
      %s1655 = scalar_lea.vmem %s2, 12
      %v1656 = vld [vmem:[%s1655] sm:$0xf]
      %v1657 = vpack.c.bf16 %v1513, %v1491
      %v1658 = vpack.c.bf16 %v1514, %v1492
      %v1659 = vpack.c.bf16 %v1515, %v1493
      %v1660 = vpack.c.bf16 %v1516, %v1494
      %v1661 = vpack.c.bf16 %v1512, %v1495
      %v1662 = vpack.c.bf16 %v1551, %v1532
      %v1663 = vpack.c.bf16 %v1552, %v1533
      %v1664 = vpack.c.bf16 %v1553, %v1534
      %v1665 = vpack.c.bf16 %v1554, %v1535
      %v1666 = vpack.c.bf16 %v1550, %v1531
      %v1667 = vpack.c.bf16 %v1589, %v1570
      %v1668 = vpack.c.bf16 %v1590, %v1571
      %v1669 = vpack.c.bf16 %v1591, %v1572
      %v1670 = vpack.c.bf16 %v1592, %v1573
      %v1671 = vpack.c.bf16 %v1588, %v1569
      %v1672 = vpack.c.bf16 %v1627, %v1608
      %v1673 = vpack.c.bf16 %v1628, %v1609
      %v1674 = vpack.c.bf16 %v1629, %v1610
      %v1675 = vpack.c.bf16 %v1630, %v1611
      %v1676 = vpack.c.bf16 %v1626, %v1607
      %v1677 = vpack.c.bf16 %v1646, %v1646
      %v1678 = vpack.c.bf16 %v1647, %v1647
      %v1679 = vpack.c.bf16 %v1648, %v1648
      %v1680 = vpack.c.bf16 %v1649, %v1649
      %v1681 = vpack.c.bf16 %v1645, %v1645
      %1683 = vrot.lane.b32.xlu0 %v1496, 127
      %v1684 = vpop.permute.xlu0 %1683
      %v1685 = vsel %vm346, %v1512, %v1684
      %1688 = vrot.lane.b32.xlu0 %v1496, 126
      %v1689 = vpop.permute.xlu0 %1688
      %v1690 = vsel %vm366, %v1531, %v1689
      %1693 = vrot.lane.b32.xlu0 %v1496, 118
      %v1694 = vpop.permute.xlu0 %1693
      %v1695 = vsel %vm386, %v1550, %v1694
      %1698 = vrot.lane.b32.xlu0 %v1496, 117
      %v1699 = vpop.permute.xlu0 %1698
      %v1700 = vsel %vm406, %v1569, %v1699
      %1704 = vrot.lane.b32.xlu0 %v1496, 116
      %v1705 = vpop.permute.xlu0 %1704
      %v1706 = vsel %vm426, %v1588, %v1705
      %1710 = vrot.lane.b32.xlu0 %v1496, 108
      %v1711 = vpop.permute.xlu0 %1710
      %v1712 = vsel %vm446, %v1607, %v1711
      %1716 = vrot.lane.b32.xlu0 %v1496, 107
      %v1717 = vpop.permute.xlu0 %1716
      %v1718 = vsel %vm466, %v1626, %v1717
      %1722 = vrot.lane.b32.xlu0 %v1496, 106
      %v1723 = vpop.permute.xlu0 %1722
      %v1724 = vsel %vm486, %v1645, %v1723
      %s1728 = scalar_lea.vmem %s2, 16
      %v1729 = vld [vmem:[%s1728] sm:$0xf]
      %v1730 = vpack.c.bf16 %v1685, %v1495
      %v1731 = vpack.c.bf16 %v1684, %v1496
      %v1732 = vpack.c.bf16 %v1695, %v1690
      %v1733 = vpack.c.bf16 %v1694, %v1689
      %v1734 = vpack.c.bf16 %v1582, %v1563
      %v1735 = vpack.c.bf16 %v1706, %v1700
      %v1736 = vpack.c.bf16 %v1705, %v1699
      %v1737 = vpack.c.bf16 %v1620, %v1601
      %v1738 = vpack.c.bf16 %v1718, %v1712
      %v1739 = vpack.c.bf16 %v1717, %v1711
      %v1740 = vpack.c.bf16 %v1639, %v1639
      %v1741 = vpack.c.bf16 %v1724, %v1724
      %v1742 = vpack.c.bf16 %v1723, %v1723
      %1773 = vrot.lane.b32.xlu0 %v1657, 11
      %v1774 = vpop.permute.xlu0 %1773
      %1775 = vrot.lane.b32.xlu0 %v1658, 11
      %v1776 = vpop.permute.xlu0 %1775
      %1777 = vrot.lane.b32.xlu0 %v1659, 11
      %v1778 = vpop.permute.xlu0 %1777
      %1779 = vrot.lane.b32.xlu0 %v1660, 11
      %v1780 = vpop.permute.xlu0 %1779
      %1781 = vrot.lane.b32.xlu0 %v1730, 11
      %v1782 = vpop.permute.xlu0 %1781
      %1783 = vrot.lane.b32.xlu0 %v1731, 11
      %v1784 = vpop.permute.xlu0 %1783
      %1785 = vrot.lane.b32.xlu0 %v1662, 11
      %v1786 = vpop.permute.xlu0 %1785
      %1787 = vrot.lane.b32.xlu0 %v1663, 11
      %v1788 = vpop.permute.xlu0 %1787
      %1789 = vrot.lane.b32.xlu0 %v1664, 11
      %v1790 = vpop.permute.xlu0 %1789
      %1791 = vrot.lane.b32.xlu0 %v1665, 11
      %v1792 = vpop.permute.xlu0 %1791
      %1793 = vrot.lane.b32.xlu0 %v1732, 11
      %v1794 = vpop.permute.xlu0 %1793
      %1795 = vrot.lane.b32.xlu0 %v1733, 11
      %v1796 = vpop.permute.xlu0 %1795
      %1797 = vrot.lane.b32.xlu0 %v1734, 11
      %v1798 = vpop.permute.xlu0 %1797
      %1799 = vrot.lane.b32.xlu0 %v1668, 11
      %v1800 = vpop.permute.xlu0 %1799
      %1801 = vrot.lane.b32.xlu0 %v1669, 11
      %v1802 = vpop.permute.xlu0 %1801
      %1803 = vrot.lane.b32.xlu0 %v1670, 11
      %v1804 = vpop.permute.xlu0 %1803
      %1805 = vrot.lane.b32.xlu0 %v1735, 11
      %v1806 = vpop.permute.xlu0 %1805
      %1807 = vrot.lane.b32.xlu0 %v1736, 11
      %v1808 = vpop.permute.xlu0 %1807
      %1809 = vrot.lane.b32.xlu0 %v1737, 11
      %v1810 = vpop.permute.xlu0 %1809
      %1811 = vrot.lane.b32.xlu0 %v1673, 11
      %v1812 = vpop.permute.xlu0 %1811
      %1813 = vrot.lane.b32.xlu0 %v1674, 11
      %v1814 = vpop.permute.xlu0 %1813
      %1815 = vrot.lane.b32.xlu0 %v1675, 11
      %v1816 = vpop.permute.xlu0 %1815
      %1817 = vrot.lane.b32.xlu0 %v1738, 11
      %v1818 = vpop.permute.xlu0 %1817
      %1819 = vrot.lane.b32.xlu0 %v1739, 11
      %v1820 = vpop.permute.xlu0 %1819
      %1821 = vrot.lane.b32.xlu0 %v1740, 11
      %v1822 = vpop.permute.xlu0 %1821
      %1823 = vrot.lane.b32.xlu0 %v1678, 11
      %v1824 = vpop.permute.xlu0 %1823
      %1825 = vrot.lane.b32.xlu0 %v1679, 11
      %v1826 = vpop.permute.xlu0 %1825
      %1827 = vrot.lane.b32.xlu0 %v1680, 11
      %v1828 = vpop.permute.xlu0 %1827
      %1829 = vrot.lane.b32.xlu0 %v1741, 11
      %v1830 = vpop.permute.xlu0 %1829
      %1831 = vrot.lane.b32.xlu0 %v1742, 11
      %v1832 = vpop.permute.xlu0 %1831
      %v1833 = vsel %vm673, %v1774, %v1776
      %v1834 = vsel %vm673, %v1776, %v1778
      %v1835 = vsel %vm673, %v1778, %v1780
      %v1836 = vsel %vm673, %v1780, %v1782
      %v1837 = vsel %vm673, %v1782, %v1784
      %v1838 = vsel %vm673, %v1786, %v1788
      %v1839 = vsel %vm673, %v1788, %v1790
      %v1840 = vsel %vm673, %v1790, %v1792
      %v1841 = vsel %vm673, %v1792, %v1794
      %v1842 = vsel %vm673, %v1794, %v1796
      %v1843 = vsel %vm673, %v1798, %v1800
      %v1844 = vsel %vm673, %v1800, %v1802
      %v1845 = vsel %vm673, %v1802, %v1804
      %v1846 = vsel %vm673, %v1804, %v1806
      %v1847 = vsel %vm673, %v1806, %v1808
      %v1848 = vsel %vm673, %v1810, %v1812
      %v1849 = vsel %vm673, %v1812, %v1814
      %v1850 = vsel %vm673, %v1814, %v1816
      %v1851 = vsel %vm673, %v1816, %v1818
      %v1852 = vsel %vm673, %v1818, %v1820
      %v1853 = vsel %vm673, %v1822, %v1824
      %v1854 = vsel %vm673, %v1824, %v1826
      %v1855 = vsel %vm673, %v1826, %v1828
      %v1856 = vsel %vm673, %v1828, %v1830
      %v1857 = vsel %vm673, %v1830, %v1832
      %v1879 = vsel %vm719, %v1729, 0
      %v1882 = vsel %vm723, %v1853, 0
      %v1885 = vsel %vm723, %v1854, 0
      %v1888 = vsel %vm723, %v1855, 0
      %v1891 = vsel %vm723, %v1856, 0
      %v1894 = vsel %vm723, %v1857, 0
      %1896 = vmatprep.subr.bf16.mxu0 %v1834
      %1897 = vmatpush1.bf16.msra.mxu0 %v1833
      %1898 = vmatprep.subr.bf16.mxu0 %v1839
      %1899 = vmatpush1.bf16.msra.mxu0 %v1838
      %1900 = vmatprep.subr.bf16.mxu0 %v1844
      %1901 = vmatpush1.bf16.msra.mxu0 %v1843
      %1902 = vmatprep.subr.bf16.mxu0 %v1849
      %1903 = vmatpush1.bf16.msra.mxu0 %v1848
      %1904 = vmatprep.subr.bf16.mxu0 %v1885
      %1905 = vmatpush1.bf16.msra.mxu0 %v1882
      %1906 = vmatprep.subr.bf16.mxu0 0
      %1907 = vmatpush1.bf16.msra.mxu0 0
      %1908 = vmatprep.subr.bf16.mxu0 0
      %1909 = vmatpush1.bf16.msra.mxu0 0
      %1910 = vmatprep.subr.bf16.mxu0 0
      %1911 = vmatpush1.bf16.msra.mxu0 0
      %1912 = vmatprep.subr.bf16.mxu0 0
      %1913 = vmatpush1.bf16.msra.mxu0 0
      %1914 = vmatprep.subr.bf16.mxu0 0
      %1915 = vmatpush1.bf16.msra.mxu0 0
      %1916 = vmatprep.subr.bf16.mxu0 0
      %1917 = vmatpush1.bf16.msra.mxu0 0
      %1918 = vmatprep.subr.bf16.mxu0 0
      %1919 = vmatpush1.bf16.msra.mxu0 0
      %1920 = vmatprep.subr.bf16.mxu0 0
      %1921 = vmatpush1.bf16.msra.mxu0 0
      %1922 = vmatprep.subr.bf16.mxu0 0
      %1923 = vmatpush1.bf16.msra.mxu0 0
      %1924 = vmatprep.subr.bf16.mxu0 0
      %1925 = vmatpush1.bf16.msra.mxu0 0
      %1926 = vmatprep.subr.bf16.mxu0 0
      %1927 = vmatpush1.bf16.msra.mxu0 0
      %1928 = vmatprep.mubr.bf16.mxu0 0
      %1929 = vmatmul.mubr.bf16.gmra.mrb[0].mxu0 %v1879
      %v1930 = vpop.f32.mrb[0].mxu0
      %v1931 = vadd.f32 0.0, %v1930
      %v1932 = vpop.f32.mrb[0].mxu0
      %v1933 = vadd.f32 0.0, %v1932
      %v1934 = vpop.f32.mrb[0].mxu0
      %v1935 = vpop.f32.mrb[0].mxu0
      %1936 = vdwg.mxu0
      %1937 = vmatprep.subr.bf16.mxu0 %v1836
      %1938 = vmatpush1.bf16.msra.mxu0 %v1835
      %1939 = vmatprep.subr.bf16.mxu0 %v1841
      %1940 = vmatpush1.bf16.msra.mxu0 %v1840
      %1941 = vmatprep.subr.bf16.mxu0 %v1846
      %1942 = vmatpush1.bf16.msra.mxu0 %v1845
      %1943 = vmatprep.subr.bf16.mxu0 %v1851
      %1944 = vmatpush1.bf16.msra.mxu0 %v1850
      %1945 = vmatprep.subr.bf16.mxu0 %v1891
      %1946 = vmatpush1.bf16.msra.mxu0 %v1888
      %1947 = vmatprep.subr.bf16.mxu0 0
      %1948 = vmatpush1.bf16.msra.mxu0 0
      %1949 = vmatprep.subr.bf16.mxu0 0
      %1950 = vmatpush1.bf16.msra.mxu0 0
      %1951 = vmatprep.subr.bf16.mxu0 0
      %1952 = vmatpush1.bf16.msra.mxu0 0
      %1953 = vmatprep.subr.bf16.mxu0 0
      %1954 = vmatpush1.bf16.msra.mxu0 0
      %1955 = vmatprep.subr.bf16.mxu0 0
      %1956 = vmatpush1.bf16.msra.mxu0 0
      %1957 = vmatprep.subr.bf16.mxu0 0
      %1958 = vmatpush1.bf16.msra.mxu0 0
      %1959 = vmatprep.subr.bf16.mxu0 0
      %1960 = vmatpush1.bf16.msra.mxu0 0
      %1961 = vmatprep.subr.bf16.mxu0 0
      %1962 = vmatpush1.bf16.msra.mxu0 0
      %1963 = vmatprep.subr.bf16.mxu0 0
      %1964 = vmatpush1.bf16.msra.mxu0 0
      %1965 = vmatprep.subr.bf16.mxu0 0
      %1966 = vmatpush1.bf16.msra.mxu0 0
      %1967 = vmatprep.subr.bf16.mxu0 0
      %1968 = vmatpush1.bf16.msra.mxu0 0
      %1969 = vmatprep.mubr.bf16.mxu0 0
      %1970 = vmatmul.mubr.bf16.gmra.mrb[0].mxu0 %v1879
      %v1971 = vpop.f32.mrb[0].mxu0
      %v1972 = vadd.f32 0.0, %v1971
      %v1973 = vpop.f32.mrb[0].mxu0
      %v1974 = vadd.f32 0.0, %v1973
      %v1975 = vpop.f32.mrb[0].mxu0
      %v1976 = vpop.f32.mrb[0].mxu0
      %1977 = vdwg.mxu0
      %1978 = vmatprep.subr.bf16.mxu0 0
      %1979 = vmatpush1.bf16.msra.mxu0 %v1837
      %1980 = vmatprep.subr.bf16.mxu0 0
      %1981 = vmatpush1.bf16.msra.mxu0 %v1842
      %1982 = vmatprep.subr.bf16.mxu0 0
      %1983 = vmatpush1.bf16.msra.mxu0 %v1847
      %1984 = vmatprep.subr.bf16.mxu0 0
      %1985 = vmatpush1.bf16.msra.mxu0 %v1852
      %1986 = vmatprep.subr.bf16.mxu0 0
      %1987 = vmatpush1.bf16.msra.mxu0 %v1894
      %1988 = vmatprep.subr.bf16.mxu0 0
      %1989 = vmatpush1.bf16.msra.mxu0 0
      %1990 = vmatprep.subr.bf16.mxu0 0
      %1991 = vmatpush1.bf16.msra.mxu0 0
      %1992 = vmatprep.subr.bf16.mxu0 0
      %1993 = vmatpush1.bf16.msra.mxu0 0
      %1994 = vmatprep.subr.bf16.mxu0 0
      %1995 = vmatpush1.bf16.msra.mxu0 0
      %1996 = vmatprep.subr.bf16.mxu0 0
      %1997 = vmatpush1.bf16.msra.mxu0 0
      %1998 = vmatprep.subr.bf16.mxu0 0
      %1999 = vmatpush1.bf16.msra.mxu0 0
      %2000 = vmatprep.subr.bf16.mxu0 0
      %2001 = vmatpush1.bf16.msra.mxu0 0
      %2002 = vmatprep.subr.bf16.mxu0 0
      %2003 = vmatpush1.bf16.msra.mxu0 0
      %2004 = vmatprep.subr.bf16.mxu0 0
      %2005 = vmatpush1.bf16.msra.mxu0 0
      %2006 = vmatprep.subr.bf16.mxu0 0
      %2007 = vmatpush1.bf16.msra.mxu0 0
      %2008 = vmatprep.subr.bf16.mxu0 0
      %2009 = vmatpush1.bf16.msra.mxu0 0
      %2010 = vmatprep.mubr.bf16.mxu0 0
      %2011 = vmatmul.mubr.bf16.gmra.mrb[0].mxu0 %v1879
      %v2012 = vpop.f32.mrb[0].mxu0
      %v2013 = vadd.f32 0.0, %v2012
      %v2014 = vpop.f32.mrb[0].mxu0
      %v2015 = vpop.f32.mrb[0].mxu0
      %v2016 = vpop.f32.mrb[0].mxu0
      %2017 = vdwg.mxu0
      %2026 = vrot.lane.b32.xlu0 %v1657, 111
      %v2027 = vpop.permute.xlu0 %2026
      %2028 = vrot.lane.b32.xlu0 %v1658, 111
      %v2029 = vpop.permute.xlu0 %2028
      %2030 = vrot.lane.b32.xlu0 %v1659, 111
      %v2031 = vpop.permute.xlu0 %2030
      %2032 = vrot.lane.b32.xlu0 %v1660, 111
      %v2033 = vpop.permute.xlu0 %2032
      %2034 = vrot.lane.b32.xlu0 %v1661, 111
      %v2035 = vpop.permute.xlu0 %2034
      %2036 = vrot.lane.b32.xlu0 %v1662, 111
      %v2037 = vpop.permute.xlu0 %2036
      %2038 = vrot.lane.b32.xlu0 %v1663, 111
      %v2039 = vpop.permute.xlu0 %2038
      %2040 = vrot.lane.b32.xlu0 %v1664, 111
      %v2041 = vpop.permute.xlu0 %2040
      %2042 = vrot.lane.b32.xlu0 %v1665, 111
      %v2043 = vpop.permute.xlu0 %2042
      %2044 = vrot.lane.b32.xlu0 %v1666, 111
      %v2045 = vpop.permute.xlu0 %2044
      %2046 = vrot.lane.b32.xlu0 %v1667, 111
      %v2047 = vpop.permute.xlu0 %2046
      %2048 = vrot.lane.b32.xlu0 %v1668, 111
      %v2049 = vpop.permute.xlu0 %2048
      %2050 = vrot.lane.b32.xlu0 %v1669, 111
      %v2051 = vpop.permute.xlu0 %2050
      %2052 = vrot.lane.b32.xlu0 %v1670, 111
      %v2053 = vpop.permute.xlu0 %2052
      %2054 = vrot.lane.b32.xlu0 %v1671, 111
      %v2055 = vpop.permute.xlu0 %2054
      %2056 = vrot.lane.b32.xlu0 %v1672, 111
      %v2057 = vpop.permute.xlu0 %2056
      %2058 = vrot.lane.b32.xlu0 %v1673, 111
      %v2059 = vpop.permute.xlu0 %2058
      %2060 = vrot.lane.b32.xlu0 %v1674, 111
      %v2061 = vpop.permute.xlu0 %2060
      %2062 = vrot.lane.b32.xlu0 %v1675, 111
      %v2063 = vpop.permute.xlu0 %2062
      %2064 = vrot.lane.b32.xlu0 %v1676, 111
      %v2065 = vpop.permute.xlu0 %2064
      %2066 = vrot.lane.b32.xlu0 %v1677, 111
      %v2067 = vpop.permute.xlu0 %2066
      %2068 = vrot.lane.b32.xlu0 %v1678, 111
      %v2069 = vpop.permute.xlu0 %2068
      %2070 = vrot.lane.b32.xlu0 %v1679, 111
      %v2071 = vpop.permute.xlu0 %2070
      %2072 = vrot.lane.b32.xlu0 %v1680, 111
      %v2073 = vpop.permute.xlu0 %2072
      %2074 = vrot.lane.b32.xlu0 %v1681, 111
      %v2075 = vpop.permute.xlu0 %2074
      %v2076 = vsel %vm919, %v2027, %v2029
      %v2077 = vsel %vm919, %v2029, %v2031
      %v2078 = vsel %vm919, %v2031, %v2033
      %v2079 = vsel %vm919, %v2033, %v2035
      %v2080 = vsel %vm919, %v2037, %v2039
      %v2081 = vsel %vm919, %v2039, %v2041
      %v2082 = vsel %vm919, %v2041, %v2043
      %v2083 = vsel %vm919, %v2043, %v2045
      %v2084 = vsel %vm919, %v2047, %v2049
      %v2085 = vsel %vm919, %v2049, %v2051
      %v2086 = vsel %vm919, %v2051, %v2053
      %v2087 = vsel %vm919, %v2053, %v2055
      %v2088 = vsel %vm919, %v2057, %v2059
      %v2089 = vsel %vm919, %v2059, %v2061
      %v2090 = vsel %vm919, %v2061, %v2063
      %v2091 = vsel %vm919, %v2063, %v2065
      %v2092 = vsel %vm919, %v2067, %v2069
      %v2093 = vsel %vm919, %v2069, %v2071
      %v2094 = vsel %vm919, %v2071, %v2073
      %v2095 = vsel %vm919, %v2073, %v2075
      %v2117 = vsel %vm719, %v1656, 0
      %v2120 = vsel %vm723, %v2092, 0
      %v2123 = vsel %vm723, %v2093, 0
      %v2126 = vsel %vm723, %v2094, 0
      %v2129 = vsel %vm723, %v2095, 0
      %v2132 = vsel %vm723, %v2075, 0
      %2134 = vmatprep.subr.bf16.mxu0 %v2077
      %2135 = vmatpush1.bf16.msra.mxu0 %v2076
      %2136 = vmatprep.subr.bf16.mxu0 %v2081
      %2137 = vmatpush1.bf16.msra.mxu0 %v2080
      %2138 = vmatprep.subr.bf16.mxu0 %v2085
      %2139 = vmatpush1.bf16.msra.mxu0 %v2084
      %2140 = vmatprep.subr.bf16.mxu0 %v2089
      %2141 = vmatpush1.bf16.msra.mxu0 %v2088
      %2142 = vmatprep.subr.bf16.mxu0 %v2123
      %2143 = vmatpush1.bf16.msra.mxu0 %v2120
      %2144 = vmatprep.subr.bf16.mxu0 0
      %2145 = vmatpush1.bf16.msra.mxu0 0
      %2146 = vmatprep.subr.bf16.mxu0 0
      %2147 = vmatpush1.bf16.msra.mxu0 0
      %2148 = vmatprep.subr.bf16.mxu0 0
      %2149 = vmatpush1.bf16.msra.mxu0 0
      %2150 = vmatprep.subr.bf16.mxu0 0
      %2151 = vmatpush1.bf16.msra.mxu0 0
      %2152 = vmatprep.subr.bf16.mxu0 0
      %2153 = vmatpush1.bf16.msra.mxu0 0
      %2154 = vmatprep.subr.bf16.mxu0 0
      %2155 = vmatpush1.bf16.msra.mxu0 0
      %2156 = vmatprep.subr.bf16.mxu0 0
      %2157 = vmatpush1.bf16.msra.mxu0 0
      %2158 = vmatprep.subr.bf16.mxu0 0
      %2159 = vmatpush1.bf16.msra.mxu0 0
      %2160 = vmatprep.subr.bf16.mxu0 0
      %2161 = vmatpush1.bf16.msra.mxu0 0
      %2162 = vmatprep.subr.bf16.mxu0 0
      %2163 = vmatpush1.bf16.msra.mxu0 0
      %2164 = vmatprep.subr.bf16.mxu0 0
      %2165 = vmatpush1.bf16.msra.mxu0 0
      %2166 = vmatprep.mubr.bf16.mxu0 0
      %2167 = vmatmul.mubr.bf16.gmra.mrb[0].mxu0 %v2117
      %v2168 = vpop.f32.mrb[0].mxu0
      %v2169 = vadd.f32 %v1931, %v2168
      %v2170 = vpop.f32.mrb[0].mxu0
      %v2171 = vadd.f32 %v1933, %v2170
      %v2172 = vpop.f32.mrb[0].mxu0
      %v2173 = vpop.f32.mrb[0].mxu0
      %2174 = vdwg.mxu0
      %2175 = vmatprep.subr.bf16.mxu0 %v2079
      %2176 = vmatpush1.bf16.msra.mxu0 %v2078
      %2177 = vmatprep.subr.bf16.mxu0 %v2083
      %2178 = vmatpush1.bf16.msra.mxu0 %v2082
      %2179 = vmatprep.subr.bf16.mxu0 %v2087
      %2180 = vmatpush1.bf16.msra.mxu0 %v2086
      %2181 = vmatprep.subr.bf16.mxu0 %v2091
      %2182 = vmatpush1.bf16.msra.mxu0 %v2090
      %2183 = vmatprep.subr.bf16.mxu0 %v2129
      %2184 = vmatpush1.bf16.msra.mxu0 %v2126
      %2185 = vmatprep.subr.bf16.mxu0 0
      %2186 = vmatpush1.bf16.msra.mxu0 0
      %2187 = vmatprep.subr.bf16.mxu0 0
      %2188 = vmatpush1.bf16.msra.mxu0 0
      %2189 = vmatprep.subr.bf16.mxu0 0
      %2190 = vmatpush1.bf16.msra.mxu0 0
      %2191 = vmatprep.subr.bf16.mxu0 0
      %2192 = vmatpush1.bf16.msra.mxu0 0
      %2193 = vmatprep.subr.bf16.mxu0 0
      %2194 = vmatpush1.bf16.msra.mxu0 0
      %2195 = vmatprep.subr.bf16.mxu0 0
      %2196 = vmatpush1.bf16.msra.mxu0 0
      %2197 = vmatprep.subr.bf16.mxu0 0
      %2198 = vmatpush1.bf16.msra.mxu0 0
      %2199 = vmatprep.subr.bf16.mxu0 0
      %2200 = vmatpush1.bf16.msra.mxu0 0
      %2201 = vmatprep.subr.bf16.mxu0 0
      %2202 = vmatpush1.bf16.msra.mxu0 0
      %2203 = vmatprep.subr.bf16.mxu0 0
      %2204 = vmatpush1.bf16.msra.mxu0 0
      %2205 = vmatprep.subr.bf16.mxu0 0
      %2206 = vmatpush1.bf16.msra.mxu0 0
      %2207 = vmatprep.mubr.bf16.mxu0 0
      %2208 = vmatmul.mubr.bf16.gmra.mrb[0].mxu0 %v2117
      %v2209 = vpop.f32.mrb[0].mxu0
      %v2210 = vadd.f32 %v1972, %v2209
      %v2211 = vpop.f32.mrb[0].mxu0
      %v2212 = vadd.f32 %v1974, %v2211
      %v2213 = vpop.f32.mrb[0].mxu0
      %v2214 = vpop.f32.mrb[0].mxu0
      %2215 = vdwg.mxu0
      %2216 = vmatprep.subr.bf16.mxu0 0
      %2217 = vmatpush1.bf16.msra.mxu0 %v2035
      %2218 = vmatprep.subr.bf16.mxu0 0
      %2219 = vmatpush1.bf16.msra.mxu0 %v2045
      %2220 = vmatprep.subr.bf16.mxu0 0
      %2221 = vmatpush1.bf16.msra.mxu0 %v2055
      %2222 = vmatprep.subr.bf16.mxu0 0
      %2223 = vmatpush1.bf16.msra.mxu0 %v2065
      %2224 = vmatprep.subr.bf16.mxu0 0
      %2225 = vmatpush1.bf16.msra.mxu0 %v2132
      %2226 = vmatprep.subr.bf16.mxu0 0
      %2227 = vmatpush1.bf16.msra.mxu0 0
      %2228 = vmatprep.subr.bf16.mxu0 0
      %2229 = vmatpush1.bf16.msra.mxu0 0
      %2230 = vmatprep.subr.bf16.mxu0 0
      %2231 = vmatpush1.bf16.msra.mxu0 0
      %2232 = vmatprep.subr.bf16.mxu0 0
      %2233 = vmatpush1.bf16.msra.mxu0 0
      %2234 = vmatprep.subr.bf16.mxu0 0
      %2235 = vmatpush1.bf16.msra.mxu0 0
      %2236 = vmatprep.subr.bf16.mxu0 0
      %2237 = vmatpush1.bf16.msra.mxu0 0
      %2238 = vmatprep.subr.bf16.mxu0 0
      %2239 = vmatpush1.bf16.msra.mxu0 0
      %2240 = vmatprep.subr.bf16.mxu0 0
      %2241 = vmatpush1.bf16.msra.mxu0 0
      %2242 = vmatprep.subr.bf16.mxu0 0
      %2243 = vmatpush1.bf16.msra.mxu0 0
      %2244 = vmatprep.subr.bf16.mxu0 0
      %2245 = vmatpush1.bf16.msra.mxu0 0
      %2246 = vmatprep.subr.bf16.mxu0 0
      %2247 = vmatpush1.bf16.msra.mxu0 0
      %2248 = vmatprep.mubr.bf16.mxu0 0
      %2249 = vmatmul.mubr.bf16.gmra.mrb[0].mxu0 %v2117
      %v2250 = vpop.f32.mrb[0].mxu0
      %v2251 = vadd.f32 %v2013, %v2250
      %v2252 = vpop.f32.mrb[0].mxu0
      %v2253 = vpop.f32.mrb[0].mxu0
      %v2254 = vpop.f32.mrb[0].mxu0
      %2255 = vdwg.mxu0
      %2257 = vrot.lane.b32.xlu0 %v1497, 127
      %v2258 = vpop.permute.xlu0 %2257
      %v2259 = vsel %vm346, %v1684, %v2258
      %2262 = vrot.lane.b32.xlu0 %v1497, 126
      %v2263 = vpop.permute.xlu0 %2262
      %v2264 = vsel %vm366, %v1689, %v2263
      %2267 = vrot.lane.b32.xlu0 %v1497, 118
      %v2268 = vpop.permute.xlu0 %2267
      %v2269 = vsel %vm386, %v1694, %v2268
      %2272 = vrot.lane.b32.xlu0 %v1497, 117
      %v2273 = vpop.permute.xlu0 %2272
      %v2274 = vsel %vm406, %v1699, %v2273
      %2277 = vrot.lane.b32.xlu0 %v1497, 116
      %v2278 = vpop.permute.xlu0 %2277
      %v2279 = vsel %vm426, %v1705, %v2278
      %2282 = vrot.lane.b32.xlu0 %v1497, 108
      %v2283 = vpop.permute.xlu0 %2282
      %v2284 = vsel %vm446, %v1711, %v2283
      %2287 = vrot.lane.b32.xlu0 %v1497, 107
      %v2288 = vpop.permute.xlu0 %2287
      %v2289 = vsel %vm466, %v1717, %v2288
      %2292 = vrot.lane.b32.xlu0 %v1497, 106
      %v2293 = vpop.permute.xlu0 %2292
      %v2294 = vsel %vm486, %v1723, %v2293
      %s2297 = scalar_lea.vmem %s2, 20
      %v2298 = vld [vmem:[%s2297] sm:$0xf]
      %v2299 = vpack.c.bf16 %v2259, %v1496
      %v2300 = vpack.c.bf16 %v2258, %v1497
      %v2301 = vpack.c.bf16 %v2269, %v2264
      %v2302 = vpack.c.bf16 %v2268, %v2263
      %v2303 = vpack.c.bf16 %v2279, %v2274
      %v2304 = vpack.c.bf16 %v2278, %v2273
      %v2305 = vpack.c.bf16 %v2289, %v2284
      %v2306 = vpack.c.bf16 %v2288, %v2283
      %v2307 = vpack.c.bf16 %v2294, %v2294
      %v2308 = vpack.c.bf16 %v2293, %v2293
      %2319 = vrot.lane.b32.xlu0 %v1658, 39
      %v2320 = vpop.permute.xlu0 %2319
      %2321 = vrot.lane.b32.xlu0 %v1659, 39
      %v2322 = vpop.permute.xlu0 %2321
      %2323 = vrot.lane.b32.xlu0 %v1660, 39
      %v2324 = vpop.permute.xlu0 %2323
      %2325 = vrot.lane.b32.xlu0 %v1730, 39
      %v2326 = vpop.permute.xlu0 %2325
      %2327 = vrot.lane.b32.xlu0 %v2299, 39
      %v2328 = vpop.permute.xlu0 %2327
      %2329 = vrot.lane.b32.xlu0 %v2300, 39
      %v2330 = vpop.permute.xlu0 %2329
      %2331 = vrot.lane.b32.xlu0 %v1663, 39
      %v2332 = vpop.permute.xlu0 %2331
      %2333 = vrot.lane.b32.xlu0 %v1664, 39
      %v2334 = vpop.permute.xlu0 %2333
      %2335 = vrot.lane.b32.xlu0 %v1665, 39
      %v2336 = vpop.permute.xlu0 %2335
      %2337 = vrot.lane.b32.xlu0 %v1732, 39
      %v2338 = vpop.permute.xlu0 %2337
      %2339 = vrot.lane.b32.xlu0 %v2301, 39
      %v2340 = vpop.permute.xlu0 %2339
      %2341 = vrot.lane.b32.xlu0 %v2302, 39
      %v2342 = vpop.permute.xlu0 %2341
      %2343 = vrot.lane.b32.xlu0 %v1668, 39
      %v2344 = vpop.permute.xlu0 %2343
      %2345 = vrot.lane.b32.xlu0 %v1669, 39
      %v2346 = vpop.permute.xlu0 %2345
      %2347 = vrot.lane.b32.xlu0 %v1670, 39
      %v2348 = vpop.permute.xlu0 %2347
      %2349 = vrot.lane.b32.xlu0 %v1735, 39
      %v2350 = vpop.permute.xlu0 %2349
      %2351 = vrot.lane.b32.xlu0 %v2303, 39
      %v2352 = vpop.permute.xlu0 %2351
      %2353 = vrot.lane.b32.xlu0 %v2304, 39
      %v2354 = vpop.permute.xlu0 %2353
      %2355 = vrot.lane.b32.xlu0 %v1673, 39
      %v2356 = vpop.permute.xlu0 %2355
      %2357 = vrot.lane.b32.xlu0 %v1674, 39
      %v2358 = vpop.permute.xlu0 %2357
      %2359 = vrot.lane.b32.xlu0 %v1675, 39
      %v2360 = vpop.permute.xlu0 %2359
      %2361 = vrot.lane.b32.xlu0 %v1738, 39
      %v2362 = vpop.permute.xlu0 %2361
      %2363 = vrot.lane.b32.xlu0 %v2305, 39
      %v2364 = vpop.permute.xlu0 %2363
      %2365 = vrot.lane.b32.xlu0 %v2306, 39
      %v2366 = vpop.permute.xlu0 %2365
      %2367 = vrot.lane.b32.xlu0 %v1678, 39
      %v2368 = vpop.permute.xlu0 %2367
      %2369 = vrot.lane.b32.xlu0 %v1679, 39
      %v2370 = vpop.permute.xlu0 %2369
      %2371 = vrot.lane.b32.xlu0 %v1680, 39
      %v2372 = vpop.permute.xlu0 %2371
      %2373 = vrot.lane.b32.xlu0 %v1741, 39
      %v2374 = vpop.permute.xlu0 %2373
      %2375 = vrot.lane.b32.xlu0 %v2307, 39
      %v2376 = vpop.permute.xlu0 %2375
      %2377 = vrot.lane.b32.xlu0 %v2308, 39
      %v2378 = vpop.permute.xlu0 %2377
      %v2379 = vsel %vm1223, %v2320, %v2322
      %v2380 = vsel %vm1223, %v2322, %v2324
      %v2381 = vsel %vm1223, %v2324, %v2326
      %v2382 = vsel %vm1223, %v2326, %v2328
      %v2383 = vsel %vm1223, %v2328, %v2330
      %v2384 = vsel %vm1223, %v2332, %v2334
      %v2385 = vsel %vm1223, %v2334, %v2336
      %v2386 = vsel %vm1223, %v2336, %v2338
      %v2387 = vsel %vm1223, %v2338, %v2340
      %v2388 = vsel %vm1223, %v2340, %v2342
      %v2389 = vsel %vm1223, %v2344, %v2346
      %v2390 = vsel %vm1223, %v2346, %v2348
      %v2391 = vsel %vm1223, %v2348, %v2350
      %v2392 = vsel %vm1223, %v2350, %v2352
      %v2393 = vsel %vm1223, %v2352, %v2354
      %v2394 = vsel %vm1223, %v2356, %v2358
      %v2395 = vsel %vm1223, %v2358, %v2360
      %v2396 = vsel %vm1223, %v2360, %v2362
      %v2397 = vsel %vm1223, %v2362, %v2364
      %v2398 = vsel %vm1223, %v2364, %v2366
      %v2399 = vsel %vm1223, %v2368, %v2370
      %v2400 = vsel %vm1223, %v2370, %v2372
      %v2401 = vsel %vm1223, %v2372, %v2374
      %v2402 = vsel %vm1223, %v2374, %v2376
      %v2403 = vsel %vm1223, %v2376, %v2378
      %v2425 = vsel %vm719, %v2298, 0
      %v2428 = vsel %vm723, %v2399, 0
      %v2431 = vsel %vm723, %v2400, 0
      %v2434 = vsel %vm723, %v2401, 0
      %v2437 = vsel %vm723, %v2402, 0
      %v2440 = vsel %vm723, %v2403, 0
      %2442 = vmatprep.subr.bf16.mxu0 %v2380
      %2443 = vmatpush1.bf16.msra.mxu0 %v2379
      %2444 = vmatprep.subr.bf16.mxu0 %v2385
      %2445 = vmatpush1.bf16.msra.mxu0 %v2384
      %2446 = vmatprep.subr.bf16.mxu0 %v2390
      %2447 = vmatpush1.bf16.msra.mxu0 %v2389
      %2448 = vmatprep.subr.bf16.mxu0 %v2395
      %2449 = vmatpush1.bf16.msra.mxu0 %v2394
      %2450 = vmatprep.subr.bf16.mxu0 %v2431
      %2451 = vmatpush1.bf16.msra.mxu0 %v2428
      %2452 = vmatprep.subr.bf16.mxu0 0
      %2453 = vmatpush1.bf16.msra.mxu0 0
      %2454 = vmatprep.subr.bf16.mxu0 0
      %2455 = vmatpush1.bf16.msra.mxu0 0
      %2456 = vmatprep.subr.bf16.mxu0 0
      %2457 = vmatpush1.bf16.msra.mxu0 0
      %2458 = vmatprep.subr.bf16.mxu0 0
      %2459 = vmatpush1.bf16.msra.mxu0 0
      %2460 = vmatprep.subr.bf16.mxu0 0
      %2461 = vmatpush1.bf16.msra.mxu0 0
      %2462 = vmatprep.subr.bf16.mxu0 0
      %2463 = vmatpush1.bf16.msra.mxu0 0
      %2464 = vmatprep.subr.bf16.mxu0 0
      %2465 = vmatpush1.bf16.msra.mxu0 0
      %2466 = vmatprep.subr.bf16.mxu0 0
      %2467 = vmatpush1.bf16.msra.mxu0 0
      %2468 = vmatprep.subr.bf16.mxu0 0
      %2469 = vmatpush1.bf16.msra.mxu0 0
      %2470 = vmatprep.subr.bf16.mxu0 0
      %2471 = vmatpush1.bf16.msra.mxu0 0
      %2472 = vmatprep.subr.bf16.mxu0 0
      %2473 = vmatpush1.bf16.msra.mxu0 0
      %2474 = vmatprep.mubr.bf16.mxu0 0
      %2475 = vmatmul.mubr.bf16.gmra.mrb[0].mxu0 %v2425
      %v2476 = vpop.f32.mrb[0].mxu0
      %v2477 = vadd.f32 0.0, %v2476
      %v2478 = vpop.f32.mrb[0].mxu0
      %v2479 = vadd.f32 0.0, %v2478
      %v2480 = vpop.f32.mrb[0].mxu0
      %v2481 = vpop.f32.mrb[0].mxu0
      %2482 = vdwg.mxu0
      %2483 = vmatprep.subr.bf16.mxu0 %v2382
      %2484 = vmatpush1.bf16.msra.mxu0 %v2381
      %2485 = vmatprep.subr.bf16.mxu0 %v2387
      %2486 = vmatpush1.bf16.msra.mxu0 %v2386
      %2487 = vmatprep.subr.bf16.mxu0 %v2392
      %2488 = vmatpush1.bf16.msra.mxu0 %v2391
      %2489 = vmatprep.subr.bf16.mxu0 %v2397
      %2490 = vmatpush1.bf16.msra.mxu0 %v2396
      %2491 = vmatprep.subr.bf16.mxu0 %v2437
      %2492 = vmatpush1.bf16.msra.mxu0 %v2434
      %2493 = vmatprep.subr.bf16.mxu0 0
      %2494 = vmatpush1.bf16.msra.mxu0 0
      %2495 = vmatprep.subr.bf16.mxu0 0
      %2496 = vmatpush1.bf16.msra.mxu0 0
      %2497 = vmatprep.subr.bf16.mxu0 0
      %2498 = vmatpush1.bf16.msra.mxu0 0
      %2499 = vmatprep.subr.bf16.mxu0 0
      %2500 = vmatpush1.bf16.msra.mxu0 0
      %2501 = vmatprep.subr.bf16.mxu0 0
      %2502 = vmatpush1.bf16.msra.mxu0 0
      %2503 = vmatprep.subr.bf16.mxu0 0
      %2504 = vmatpush1.bf16.msra.mxu0 0
      %2505 = vmatprep.subr.bf16.mxu0 0
      %2506 = vmatpush1.bf16.msra.mxu0 0
      %2507 = vmatprep.subr.bf16.mxu0 0
      %2508 = vmatpush1.bf16.msra.mxu0 0
      %2509 = vmatprep.subr.bf16.mxu0 0
      %2510 = vmatpush1.bf16.msra.mxu0 0
      %2511 = vmatprep.subr.bf16.mxu0 0
      %2512 = vmatpush1.bf16.msra.mxu0 0
      %2513 = vmatprep.subr.bf16.mxu0 0
      %2514 = vmatpush1.bf16.msra.mxu0 0
      %2515 = vmatprep.mubr.bf16.mxu0 0
      %2516 = vmatmul.mubr.bf16.gmra.mrb[0].mxu0 %v2425
      %v2517 = vpop.f32.mrb[0].mxu0
      %v2518 = vadd.f32 0.0, %v2517
      %v2519 = vpop.f32.mrb[0].mxu0
      %v2520 = vadd.f32 0.0, %v2519
      %v2521 = vpop.f32.mrb[0].mxu0
      %v2522 = vpop.f32.mrb[0].mxu0
      %2523 = vdwg.mxu0
      %2524 = vmatprep.subr.bf16.mxu0 0
      %2525 = vmatpush1.bf16.msra.mxu0 %v2383
      %2526 = vmatprep.subr.bf16.mxu0 0
      %2527 = vmatpush1.bf16.msra.mxu0 %v2388
      %2528 = vmatprep.subr.bf16.mxu0 0
      %2529 = vmatpush1.bf16.msra.mxu0 %v2393
      %2530 = vmatprep.subr.bf16.mxu0 0
      %2531 = vmatpush1.bf16.msra.mxu0 %v2398
      %2532 = vmatprep.subr.bf16.mxu0 0
      %2533 = vmatpush1.bf16.msra.mxu0 %v2440
      %2534 = vmatprep.subr.bf16.mxu0 0
      %2535 = vmatpush1.bf16.msra.mxu0 0
      %2536 = vmatprep.subr.bf16.mxu0 0
      %2537 = vmatpush1.bf16.msra.mxu0 0
      %2538 = vmatprep.subr.bf16.mxu0 0
      %2539 = vmatpush1.bf16.msra.mxu0 0
      %2540 = vmatprep.subr.bf16.mxu0 0
      %2541 = vmatpush1.bf16.msra.mxu0 0
      %2542 = vmatprep.subr.bf16.mxu0 0
      %2543 = vmatpush1.bf16.msra.mxu0 0
      %2544 = vmatprep.subr.bf16.mxu0 0
      %2545 = vmatpush1.bf16.msra.mxu0 0
      %2546 = vmatprep.subr.bf16.mxu0 0
      %2547 = vmatpush1.bf16.msra.mxu0 0
      %2548 = vmatprep.subr.bf16.mxu0 0
      %2549 = vmatpush1.bf16.msra.mxu0 0
      %2550 = vmatprep.subr.bf16.mxu0 0
      %2551 = vmatpush1.bf16.msra.mxu0 0
      %2552 = vmatprep.subr.bf16.mxu0 0
      %2553 = vmatpush1.bf16.msra.mxu0 0
      %2554 = vmatprep.subr.bf16.mxu0 0
      %2555 = vmatpush1.bf16.msra.mxu0 0
      %2556 = vmatprep.mubr.bf16.mxu0 0
      %2557 = vmatmul.mubr.bf16.gmra.mrb[0].mxu0 %v2425
      %v2558 = vpop.f32.mrb[0].mxu0
      %v2559 = vadd.f32 0.0, %v2558
      %v2560 = vpop.f32.mrb[0].mxu0
      %v2561 = vpop.f32.mrb[0].mxu0
      %v2562 = vpop.f32.mrb[0].mxu0
      %2563 = vdwg.mxu0
      %v2564 = vadd.f32 %v2169, %v2477
      %v2565 = vadd.f32 %v2171, %v2479
      %v2566 = vadd.f32 %v2210, %v2518
      %v2567 = vadd.f32 %v2212, %v2520
      %v2568 = vadd.f32 %v2251, %v2559
      %s2569 = scalar_lea.vmem %s3, 8
      %v2570 = vld [vmem:[%s2569] sm:$0xff]
      %2572 = vset.pattern.permute.xlu0 0
      %2573 = vperm.xlu0 %2572, %v2570
      %v2574 = vpop.permute.xlu0 %2573
      %v2576 = vadd.f32 %v2564, %v2574
      %v2577 = vadd.f32 %v2565, %v2574
      %v2578 = vadd.f32 %v2566, %v2574
      %v2579 = vadd.f32 %v2567, %v2574
      %v2580 = vadd.f32 %v2568, %v2574
      %vm2581 = vcmp.gt.f32.partialorder %v2576, 0.0
      %vm2582 = vcmp.gt.f32.partialorder %v2577, 0.0
      %vm2583 = vcmp.gt.f32.partialorder %v2578, 0.0
      %vm2584 = vcmp.gt.f32.partialorder %v2579, 0.0
      %vm2585 = vcmp.gt.f32.partialorder %v2580, 0.0
      %v2586 = vmul.f32 %v2576, 0.2
      %v2587 = vmul.f32 %v2577, 0.2
      %v2588 = vmul.f32 %v2578, 0.2
      %v2589 = vmul.f32 %v2579, 0.2
      %v2590 = vmul.f32 %v2580, 0.2
      %v2591 = vsel %vm2581, %v2576, %v2586
      %v2592 = vsel %vm2582, %v2577, %v2587
      %v2593 = vsel %vm2583, %v2578, %v2588
      %v2594 = vsel %vm2584, %v2579, %v2589
      %v2595 = vsel %vm2585, %v2580, %v2590
      %v2596 = vadd.f32 %v2591, 0.0
      %v2597 = vadd.f32 %v2592, 0.0
      %v2598 = vadd.f32 %v2593, 0.0
      %v2599 = vadd.f32 %v2594, 0.0
      %v2600 = vadd.f32 %v2595, 0.0
      %v2601 = vld [vmem:[%s288 + $0x8] sm:$0xff]
      %v2602 = vld [vmem:[%s288 + $0x10] sm:$0xff]
      %v2603 = vld [vmem:[%s288 + $0x18] sm:$0xff]
      %v2604 = vld [vmem:[%s288 + $0x20] sm:$0xff]
      %v2605 = vld [vmem:[%s288 + $0x28] sm:$0xff]
      %v2606 = vadd.f32 %v2596, %v2601
      %v2607 = vadd.f32 %v2597, %v2602
      %v2608 = vadd.f32 %v2598, %v2603
      %v2609 = vadd.f32 %v2599, %v2604
      %v2610 = vadd.f32 %v2600, %v2605
      %v2611 = vsel %vm1476, %v2606, 0.0
      %v2612 = vsel %vm1477, %v2607, 0.0
      %v2613 = vsel %vm1478, %v2608, 0.0
      %v2614 = vsel %vm1479, %v2609, 0.0
      %v2615 = vsel %vm1480, %v2610, 0.0
      %2616 = vst [vmem:[#allocation3 + $0x8] sm:$0xff] %v2611
      %2617 = vst [vmem:[#allocation3 + $0x10] sm:$0xff] %v2612
      %2618 = vst [vmem:[#allocation3 + $0x18] sm:$0xff] %v2613
      %2619 = vst [vmem:[#allocation3 + $0x20] sm:$0xff] %v2614
      %2620 = vst.msk [vmem:[#allocation3 + $0x28] sm:$0xff] %vm306, %v2615
      %v2621 = vld [vmem:[#allocation3] sm:$0xff]
      %v2622 = vld [vmem:[#allocation3 + $0x8] sm:$0xff]
      %v2623 = vld [vmem:[#allocation3 + $0x10] sm:$0xff]
      %v2624 = vld [vmem:[#allocation3 + $0x18] sm:$0xff]
      %v2625 = vld [vmem:[#allocation3 + $0x20] sm:$0xff]
      %v2626 = vld [vmem:[#allocation3 + $0x28] sm:$0xff]
      %v2627 = vld [vmem:[#allocation3 + $0x30] sm:$0xff]
      %2633 = vrot.lane.b32.xlu0 %v2621, 127
      %v2634 = vpop.permute.xlu0 %2633
      %2635 = vrot.lane.b32.xlu0 %v2622, 127
      %v2636 = vpop.permute.xlu0 %2635
      %2637 = vrot.lane.b32.xlu0 %v2623, 127
      %v2638 = vpop.permute.xlu0 %2637
      %2639 = vrot.lane.b32.xlu0 %v2624, 127
      %v2640 = vpop.permute.xlu0 %2639
      %2641 = vrot.lane.b32.xlu0 %v2625, 127
      %v2642 = vpop.permute.xlu0 %2641
      %v2643 = vsel %vm346, %v2634, %v2636
      %v2644 = vsel %vm346, %v2636, %v2638
      %v2645 = vsel %vm346, %v2638, %v2640
      %v2646 = vsel %vm346, %v2640, %v2642
      %2652 = vrot.lane.b32.xlu0 %v2621, 126
      %v2653 = vpop.permute.xlu0 %2652
      %2654 = vrot.lane.b32.xlu0 %v2622, 126
      %v2655 = vpop.permute.xlu0 %2654
      %2656 = vrot.lane.b32.xlu0 %v2623, 126
      %v2657 = vpop.permute.xlu0 %2656
      %2658 = vrot.lane.b32.xlu0 %v2624, 126
      %v2659 = vpop.permute.xlu0 %2658
      %2660 = vrot.lane.b32.xlu0 %v2625, 126
      %v2661 = vpop.permute.xlu0 %2660
      %v2662 = vsel %vm366, %v2653, %v2655
      %v2663 = vsel %vm366, %v2655, %v2657
      %v2664 = vsel %vm366, %v2657, %v2659
      %v2665 = vsel %vm366, %v2659, %v2661
      %2671 = vrot.lane.b32.xlu0 %v2621, 118
      %v2672 = vpop.permute.xlu0 %2671
      %2673 = vrot.lane.b32.xlu0 %v2622, 118
      %v2674 = vpop.permute.xlu0 %2673
      %2675 = vrot.lane.b32.xlu0 %v2623, 118
      %v2676 = vpop.permute.xlu0 %2675
      %2677 = vrot.lane.b32.xlu0 %v2624, 118
      %v2678 = vpop.permute.xlu0 %2677
      %2679 = vrot.lane.b32.xlu0 %v2625, 118
      %v2680 = vpop.permute.xlu0 %2679
      %v2681 = vsel %vm386, %v2672, %v2674
      %v2682 = vsel %vm386, %v2674, %v2676
      %v2683 = vsel %vm386, %v2676, %v2678
      %v2684 = vsel %vm386, %v2678, %v2680
      %2690 = vrot.lane.b32.xlu0 %v2621, 117
      %v2691 = vpop.permute.xlu0 %2690
      %2692 = vrot.lane.b32.xlu0 %v2622, 117
      %v2693 = vpop.permute.xlu0 %2692
      %2694 = vrot.lane.b32.xlu0 %v2623, 117
      %v2695 = vpop.permute.xlu0 %2694
      %2696 = vrot.lane.b32.xlu0 %v2624, 117
      %v2697 = vpop.permute.xlu0 %2696
      %2698 = vrot.lane.b32.xlu0 %v2625, 117
      %v2699 = vpop.permute.xlu0 %2698
      %v2700 = vsel %vm406, %v2691, %v2693
      %v2701 = vsel %vm406, %v2693, %v2695
      %v2702 = vsel %vm406, %v2695, %v2697
      %v2703 = vsel %vm406, %v2697, %v2699
      %2709 = vrot.lane.b32.xlu0 %v2621, 116
      %v2710 = vpop.permute.xlu0 %2709
      %2711 = vrot.lane.b32.xlu0 %v2622, 116
      %v2712 = vpop.permute.xlu0 %2711
      %2713 = vrot.lane.b32.xlu0 %v2623, 116
      %v2714 = vpop.permute.xlu0 %2713
      %2715 = vrot.lane.b32.xlu0 %v2624, 116
      %v2716 = vpop.permute.xlu0 %2715
      %2717 = vrot.lane.b32.xlu0 %v2625, 116
      %v2718 = vpop.permute.xlu0 %2717
      %v2719 = vsel %vm426, %v2710, %v2712
      %v2720 = vsel %vm426, %v2712, %v2714
      %v2721 = vsel %vm426, %v2714, %v2716
      %v2722 = vsel %vm426, %v2716, %v2718
      %2728 = vrot.lane.b32.xlu0 %v2621, 108
      %v2729 = vpop.permute.xlu0 %2728
      %2730 = vrot.lane.b32.xlu0 %v2622, 108
      %v2731 = vpop.permute.xlu0 %2730
      %2732 = vrot.lane.b32.xlu0 %v2623, 108
      %v2733 = vpop.permute.xlu0 %2732
      %2734 = vrot.lane.b32.xlu0 %v2624, 108
      %v2735 = vpop.permute.xlu0 %2734
      %2736 = vrot.lane.b32.xlu0 %v2625, 108
      %v2737 = vpop.permute.xlu0 %2736
      %v2738 = vsel %vm446, %v2729, %v2731
      %v2739 = vsel %vm446, %v2731, %v2733
      %v2740 = vsel %vm446, %v2733, %v2735
      %v2741 = vsel %vm446, %v2735, %v2737
      %2747 = vrot.lane.b32.xlu0 %v2621, 107
      %v2748 = vpop.permute.xlu0 %2747
      %2749 = vrot.lane.b32.xlu0 %v2622, 107
      %v2750 = vpop.permute.xlu0 %2749
      %2751 = vrot.lane.b32.xlu0 %v2623, 107
      %v2752 = vpop.permute.xlu0 %2751
      %2753 = vrot.lane.b32.xlu0 %v2624, 107
      %v2754 = vpop.permute.xlu0 %2753
      %2755 = vrot.lane.b32.xlu0 %v2625, 107
      %v2756 = vpop.permute.xlu0 %2755
      %v2757 = vsel %vm466, %v2748, %v2750
      %v2758 = vsel %vm466, %v2750, %v2752
      %v2759 = vsel %vm466, %v2752, %v2754
      %v2760 = vsel %vm466, %v2754, %v2756
      %2766 = vrot.lane.b32.xlu0 %v2621, 106
      %v2767 = vpop.permute.xlu0 %2766
      %2768 = vrot.lane.b32.xlu0 %v2622, 106
      %v2769 = vpop.permute.xlu0 %2768
      %2770 = vrot.lane.b32.xlu0 %v2623, 106
      %v2771 = vpop.permute.xlu0 %2770
      %2772 = vrot.lane.b32.xlu0 %v2624, 106
      %v2773 = vpop.permute.xlu0 %2772
      %2774 = vrot.lane.b32.xlu0 %v2625, 106
      %v2775 = vpop.permute.xlu0 %2774
      %v2776 = vsel %vm486, %v2767, %v2769
      %v2777 = vsel %vm486, %v2769, %v2771
      %v2778 = vsel %vm486, %v2771, %v2773
      %v2779 = vsel %vm486, %v2773, %v2775
      %s2785 = scalar_lea.vmem %s2, 24
      %v2786 = vld [vmem:[%s2785] sm:$0xf]
      %v2787 = vpack.c.bf16 %v2643, %v2621
      %v2788 = vpack.c.bf16 %v2644, %v2622
      %v2789 = vpack.c.bf16 %v2645, %v2623
      %v2790 = vpack.c.bf16 %v2646, %v2624
      %v2791 = vpack.c.bf16 %v2642, %v2625
      %v2792 = vpack.c.bf16 %v2681, %v2662
      %v2793 = vpack.c.bf16 %v2682, %v2663
      %v2794 = vpack.c.bf16 %v2683, %v2664
      %v2795 = vpack.c.bf16 %v2684, %v2665
      %v2796 = vpack.c.bf16 %v2680, %v2661
      %v2797 = vpack.c.bf16 %v2719, %v2700
      %v2798 = vpack.c.bf16 %v2720, %v2701
      %v2799 = vpack.c.bf16 %v2721, %v2702
      %v2800 = vpack.c.bf16 %v2722, %v2703
      %v2801 = vpack.c.bf16 %v2718, %v2699
      %v2802 = vpack.c.bf16 %v2757, %v2738
      %v2803 = vpack.c.bf16 %v2758, %v2739
      %v2804 = vpack.c.bf16 %v2759, %v2740
      %v2805 = vpack.c.bf16 %v2760, %v2741
      %v2806 = vpack.c.bf16 %v2756, %v2737
      %v2807 = vpack.c.bf16 %v2776, %v2776
      %v2808 = vpack.c.bf16 %v2777, %v2777
      %v2809 = vpack.c.bf16 %v2778, %v2778
      %v2810 = vpack.c.bf16 %v2779, %v2779
      %v2811 = vpack.c.bf16 %v2775, %v2775
      %2813 = vrot.lane.b32.xlu0 %v2626, 127
      %v2814 = vpop.permute.xlu0 %2813
      %v2815 = vsel %vm346, %v2642, %v2814
      %2818 = vrot.lane.b32.xlu0 %v2626, 126
      %v2819 = vpop.permute.xlu0 %2818
      %v2820 = vsel %vm366, %v2661, %v2819
      %2823 = vrot.lane.b32.xlu0 %v2626, 118
      %v2824 = vpop.permute.xlu0 %2823
      %v2825 = vsel %vm386, %v2680, %v2824
      %2828 = vrot.lane.b32.xlu0 %v2626, 117
      %v2829 = vpop.permute.xlu0 %2828
      %v2830 = vsel %vm406, %v2699, %v2829
      %2834 = vrot.lane.b32.xlu0 %v2626, 116
      %v2835 = vpop.permute.xlu0 %2834
      %v2836 = vsel %vm426, %v2718, %v2835
      %2840 = vrot.lane.b32.xlu0 %v2626, 108
      %v2841 = vpop.permute.xlu0 %2840
      %v2842 = vsel %vm446, %v2737, %v2841
      %2846 = vrot.lane.b32.xlu0 %v2626, 107
      %v2847 = vpop.permute.xlu0 %2846
      %v2848 = vsel %vm466, %v2756, %v2847
      %2852 = vrot.lane.b32.xlu0 %v2626, 106
      %v2853 = vpop.permute.xlu0 %2852
      %v2854 = vsel %vm486, %v2775, %v2853
      %s2858 = scalar_lea.vmem %s2, 28
      %v2859 = vld [vmem:[%s2858] sm:$0xf]
      %v2860 = vpack.c.bf16 %v2815, %v2625
      %v2861 = vpack.c.bf16 %v2814, %v2626
      %v2862 = vpack.c.bf16 %v2825, %v2820
      %v2863 = vpack.c.bf16 %v2824, %v2819
      %v2864 = vpack.c.bf16 %v2712, %v2693
      %v2865 = vpack.c.bf16 %v2836, %v2830
      %v2866 = vpack.c.bf16 %v2835, %v2829
      %v2867 = vpack.c.bf16 %v2750, %v2731
      %v2868 = vpack.c.bf16 %v2848, %v2842
      %v2869 = vpack.c.bf16 %v2847, %v2841
      %v2870 = vpack.c.bf16 %v2769, %v2769
      %v2871 = vpack.c.bf16 %v2854, %v2854
      %v2872 = vpack.c.bf16 %v2853, %v2853
      %2903 = vrot.lane.b32.xlu0 %v2787, 11
      %v2904 = vpop.permute.xlu0 %2903
      %2905 = vrot.lane.b32.xlu0 %v2788, 11
      %v2906 = vpop.permute.xlu0 %2905
      %2907 = vrot.lane.b32.xlu0 %v2789, 11
      %v2908 = vpop.permute.xlu0 %2907
      %2909 = vrot.lane.b32.xlu0 %v2790, 11
      %v2910 = vpop.permute.xlu0 %2909
      %2911 = vrot.lane.b32.xlu0 %v2860, 11
      %v2912 = vpop.permute.xlu0 %2911
      %2913 = vrot.lane.b32.xlu0 %v2861, 11
      %v2914 = vpop.permute.xlu0 %2913
      %2915 = vrot.lane.b32.xlu0 %v2792, 11
      %v2916 = vpop.permute.xlu0 %2915
      %2917 = vrot.lane.b32.xlu0 %v2793, 11
      %v2918 = vpop.permute.xlu0 %2917
      %2919 = vrot.lane.b32.xlu0 %v2794, 11
      %v2920 = vpop.permute.xlu0 %2919
      %2921 = vrot.lane.b32.xlu0 %v2795, 11
      %v2922 = vpop.permute.xlu0 %2921
      %2923 = vrot.lane.b32.xlu0 %v2862, 11
      %v2924 = vpop.permute.xlu0 %2923
      %2925 = vrot.lane.b32.xlu0 %v2863, 11
      %v2926 = vpop.permute.xlu0 %2925
      %2927 = vrot.lane.b32.xlu0 %v2864, 11
      %v2928 = vpop.permute.xlu0 %2927
      %2929 = vrot.lane.b32.xlu0 %v2798, 11
      %v2930 = vpop.permute.xlu0 %2929
      %2931 = vrot.lane.b32.xlu0 %v2799, 11
      %v2932 = vpop.permute.xlu0 %2931
      %2933 = vrot.lane.b32.xlu0 %v2800, 11
      %v2934 = vpop.permute.xlu0 %2933
      %2935 = vrot.lane.b32.xlu0 %v2865, 11
      %v2936 = vpop.permute.xlu0 %2935
      %2937 = vrot.lane.b32.xlu0 %v2866, 11
      %v2938 = vpop.permute.xlu0 %2937
      %2939 = vrot.lane.b32.xlu0 %v2867, 11
      %v2940 = vpop.permute.xlu0 %2939
      %2941 = vrot.lane.b32.xlu0 %v2803, 11
      %v2942 = vpop.permute.xlu0 %2941
      %2943 = vrot.lane.b32.xlu0 %v2804, 11
      %v2944 = vpop.permute.xlu0 %2943
      %2945 = vrot.lane.b32.xlu0 %v2805, 11
      %v2946 = vpop.permute.xlu0 %2945
      %2947 = vrot.lane.b32.xlu0 %v2868, 11
      %v2948 = vpop.permute.xlu0 %2947
      %2949 = vrot.lane.b32.xlu0 %v2869, 11
      %v2950 = vpop.permute.xlu0 %2949
      %2951 = vrot.lane.b32.xlu0 %v2870, 11
      %v2952 = vpop.permute.xlu0 %2951
      %2953 = vrot.lane.b32.xlu0 %v2808, 11
      %v2954 = vpop.permute.xlu0 %2953
      %2955 = vrot.lane.b32.xlu0 %v2809, 11
      %v2956 = vpop.permute.xlu0 %2955
      %2957 = vrot.lane.b32.xlu0 %v2810, 11
      %v2958 = vpop.permute.xlu0 %2957
      %2959 = vrot.lane.b32.xlu0 %v2871, 11
      %v2960 = vpop.permute.xlu0 %2959
      %2961 = vrot.lane.b32.xlu0 %v2872, 11
      %v2962 = vpop.permute.xlu0 %2961
      %v2963 = vsel %vm673, %v2904, %v2906
      %v2964 = vsel %vm673, %v2906, %v2908
      %v2965 = vsel %vm673, %v2908, %v2910
      %v2966 = vsel %vm673, %v2910, %v2912
      %v2967 = vsel %vm673, %v2912, %v2914
      %v2968 = vsel %vm673, %v2916, %v2918
      %v2969 = vsel %vm673, %v2918, %v2920
      %v2970 = vsel %vm673, %v2920, %v2922
      %v2971 = vsel %vm673, %v2922, %v2924
      %v2972 = vsel %vm673, %v2924, %v2926
      %v2973 = vsel %vm673, %v2928, %v2930
      %v2974 = vsel %vm673, %v2930, %v2932
      %v2975 = vsel %vm673, %v2932, %v2934
      %v2976 = vsel %vm673, %v2934, %v2936
      %v2977 = vsel %vm673, %v2936, %v2938
      %v2978 = vsel %vm673, %v2940, %v2942
      %v2979 = vsel %vm673, %v2942, %v2944
      %v2980 = vsel %vm673, %v2944, %v2946
      %v2981 = vsel %vm673, %v2946, %v2948
      %v2982 = vsel %vm673, %v2948, %v2950
      %v2983 = vsel %vm673, %v2952, %v2954
      %v2984 = vsel %vm673, %v2954, %v2956
      %v2985 = vsel %vm673, %v2956, %v2958
      %v2986 = vsel %vm673, %v2958, %v2960
      %v2987 = vsel %vm673, %v2960, %v2962
      %v3009 = vsel %vm719, %v2859, 0
      %v3012 = vsel %vm723, %v2983, 0
      %v3015 = vsel %vm723, %v2984, 0
      %v3018 = vsel %vm723, %v2985, 0
      %v3021 = vsel %vm723, %v2986, 0
      %v3024 = vsel %vm723, %v2987, 0
      %3026 = vmatprep.subr.bf16.mxu0 %v2964
      %3027 = vmatpush1.bf16.msra.mxu0 %v2963
      %3028 = vmatprep.subr.bf16.mxu0 %v2969
      %3029 = vmatpush1.bf16.msra.mxu0 %v2968
      %3030 = vmatprep.subr.bf16.mxu0 %v2974
      %3031 = vmatpush1.bf16.msra.mxu0 %v2973
      %3032 = vmatprep.subr.bf16.mxu0 %v2979
      %3033 = vmatpush1.bf16.msra.mxu0 %v2978
      %3034 = vmatprep.subr.bf16.mxu0 %v3015
      %3035 = vmatpush1.bf16.msra.mxu0 %v3012
      %3036 = vmatprep.subr.bf16.mxu0 0
      %3037 = vmatpush1.bf16.msra.mxu0 0
      %3038 = vmatprep.subr.bf16.mxu0 0
      %3039 = vmatpush1.bf16.msra.mxu0 0
      %3040 = vmatprep.subr.bf16.mxu0 0
      %3041 = vmatpush1.bf16.msra.mxu0 0
      %3042 = vmatprep.subr.bf16.mxu0 0
      %3043 = vmatpush1.bf16.msra.mxu0 0
      %3044 = vmatprep.subr.bf16.mxu0 0
      %3045 = vmatpush1.bf16.msra.mxu0 0
      %3046 = vmatprep.subr.bf16.mxu0 0
      %3047 = vmatpush1.bf16.msra.mxu0 0
      %3048 = vmatprep.subr.bf16.mxu0 0
      %3049 = vmatpush1.bf16.msra.mxu0 0
      %3050 = vmatprep.subr.bf16.mxu0 0
      %3051 = vmatpush1.bf16.msra.mxu0 0
      %3052 = vmatprep.subr.bf16.mxu0 0
      %3053 = vmatpush1.bf16.msra.mxu0 0
      %3054 = vmatprep.subr.bf16.mxu0 0
      %3055 = vmatpush1.bf16.msra.mxu0 0
      %3056 = vmatprep.subr.bf16.mxu0 0
      %3057 = vmatpush1.bf16.msra.mxu0 0
      %3058 = vmatprep.mubr.bf16.mxu0 0
      %3059 = vmatmul.mubr.bf16.gmra.mrb[0].mxu0 %v3009
      %v3060 = vpop.f32.mrb[0].mxu0
      %v3061 = vadd.f32 0.0, %v3060
      %v3062 = vpop.f32.mrb[0].mxu0
      %v3063 = vadd.f32 0.0, %v3062
      %v3064 = vpop.f32.mrb[0].mxu0
      %v3065 = vpop.f32.mrb[0].mxu0
      %3066 = vdwg.mxu0
      %3067 = vmatprep.subr.bf16.mxu0 %v2966
      %3068 = vmatpush1.bf16.msra.mxu0 %v2965
      %3069 = vmatprep.subr.bf16.mxu0 %v2971
      %3070 = vmatpush1.bf16.msra.mxu0 %v2970
      %3071 = vmatprep.subr.bf16.mxu0 %v2976
      %3072 = vmatpush1.bf16.msra.mxu0 %v2975
      %3073 = vmatprep.subr.bf16.mxu0 %v2981
      %3074 = vmatpush1.bf16.msra.mxu0 %v2980
      %3075 = vmatprep.subr.bf16.mxu0 %v3021
      %3076 = vmatpush1.bf16.msra.mxu0 %v3018
      %3077 = vmatprep.subr.bf16.mxu0 0
      %3078 = vmatpush1.bf16.msra.mxu0 0
      %3079 = vmatprep.subr.bf16.mxu0 0
      %3080 = vmatpush1.bf16.msra.mxu0 0
      %3081 = vmatprep.subr.bf16.mxu0 0
      %3082 = vmatpush1.bf16.msra.mxu0 0
      %3083 = vmatprep.subr.bf16.mxu0 0
      %3084 = vmatpush1.bf16.msra.mxu0 0
      %3085 = vmatprep.subr.bf16.mxu0 0
      %3086 = vmatpush1.bf16.msra.mxu0 0
      %3087 = vmatprep.subr.bf16.mxu0 0
      %3088 = vmatpush1.bf16.msra.mxu0 0
      %3089 = vmatprep.subr.bf16.mxu0 0
      %3090 = vmatpush1.bf16.msra.mxu0 0
      %3091 = vmatprep.subr.bf16.mxu0 0
      %3092 = vmatpush1.bf16.msra.mxu0 0
      %3093 = vmatprep.subr.bf16.mxu0 0
      %3094 = vmatpush1.bf16.msra.mxu0 0
      %3095 = vmatprep.subr.bf16.mxu0 0
      %3096 = vmatpush1.bf16.msra.mxu0 0
      %3097 = vmatprep.subr.bf16.mxu0 0
      %3098 = vmatpush1.bf16.msra.mxu0 0
      %3099 = vmatprep.mubr.bf16.mxu0 0
      %3100 = vmatmul.mubr.bf16.gmra.mrb[0].mxu0 %v3009
      %v3101 = vpop.f32.mrb[0].mxu0
      %v3102 = vadd.f32 0.0, %v3101
      %v3103 = vpop.f32.mrb[0].mxu0
      %v3104 = vadd.f32 0.0, %v3103
      %v3105 = vpop.f32.mrb[0].mxu0
      %v3106 = vpop.f32.mrb[0].mxu0
      %3107 = vdwg.mxu0
      %3108 = vmatprep.subr.bf16.mxu0 0
      %3109 = vmatpush1.bf16.msra.mxu0 %v2967
      %3110 = vmatprep.subr.bf16.mxu0 0
      %3111 = vmatpush1.bf16.msra.mxu0 %v2972
      %3112 = vmatprep.subr.bf16.mxu0 0
      %3113 = vmatpush1.bf16.msra.mxu0 %v2977
      %3114 = vmatprep.subr.bf16.mxu0 0
      %3115 = vmatpush1.bf16.msra.mxu0 %v2982
      %3116 = vmatprep.subr.bf16.mxu0 0
      %3117 = vmatpush1.bf16.msra.mxu0 %v3024
      %3118 = vmatprep.subr.bf16.mxu0 0
      %3119 = vmatpush1.bf16.msra.mxu0 0
      %3120 = vmatprep.subr.bf16.mxu0 0
      %3121 = vmatpush1.bf16.msra.mxu0 0
      %3122 = vmatprep.subr.bf16.mxu0 0
      %3123 = vmatpush1.bf16.msra.mxu0 0
      %3124 = vmatprep.subr.bf16.mxu0 0
      %3125 = vmatpush1.bf16.msra.mxu0 0
      %3126 = vmatprep.subr.bf16.mxu0 0
      %3127 = vmatpush1.bf16.msra.mxu0 0
      %3128 = vmatprep.subr.bf16.mxu0 0
      %3129 = vmatpush1.bf16.msra.mxu0 0
      %3130 = vmatprep.subr.bf16.mxu0 0
      %3131 = vmatpush1.bf16.msra.mxu0 0
      %3132 = vmatprep.subr.bf16.mxu0 0
      %3133 = vmatpush1.bf16.msra.mxu0 0
      %3134 = vmatprep.subr.bf16.mxu0 0
      %3135 = vmatpush1.bf16.msra.mxu0 0
      %3136 = vmatprep.subr.bf16.mxu0 0
      %3137 = vmatpush1.bf16.msra.mxu0 0
      %3138 = vmatprep.subr.bf16.mxu0 0
      %3139 = vmatpush1.bf16.msra.mxu0 0
      %3140 = vmatprep.mubr.bf16.mxu0 0
      %3141 = vmatmul.mubr.bf16.gmra.mrb[0].mxu0 %v3009
      %v3142 = vpop.f32.mrb[0].mxu0
      %v3143 = vadd.f32 0.0, %v3142
      %v3144 = vpop.f32.mrb[0].mxu0
      %v3145 = vpop.f32.mrb[0].mxu0
      %v3146 = vpop.f32.mrb[0].mxu0
      %3147 = vdwg.mxu0
      %3156 = vrot.lane.b32.xlu0 %v2787, 111
      %v3157 = vpop.permute.xlu0 %3156
      %3158 = vrot.lane.b32.xlu0 %v2788, 111
      %v3159 = vpop.permute.xlu0 %3158
      %3160 = vrot.lane.b32.xlu0 %v2789, 111
      %v3161 = vpop.permute.xlu0 %3160
      %3162 = vrot.lane.b32.xlu0 %v2790, 111
      %v3163 = vpop.permute.xlu0 %3162
      %3164 = vrot.lane.b32.xlu0 %v2791, 111
      %v3165 = vpop.permute.xlu0 %3164
      %3166 = vrot.lane.b32.xlu0 %v2792, 111
      %v3167 = vpop.permute.xlu0 %3166
      %3168 = vrot.lane.b32.xlu0 %v2793, 111
      %v3169 = vpop.permute.xlu0 %3168
      %3170 = vrot.lane.b32.xlu0 %v2794, 111
      %v3171 = vpop.permute.xlu0 %3170
      %3172 = vrot.lane.b32.xlu0 %v2795, 111
      %v3173 = vpop.permute.xlu0 %3172
      %3174 = vrot.lane.b32.xlu0 %v2796, 111
      %v3175 = vpop.permute.xlu0 %3174
      %3176 = vrot.lane.b32.xlu0 %v2797, 111
      %v3177 = vpop.permute.xlu0 %3176
      %3178 = vrot.lane.b32.xlu0 %v2798, 111
      %v3179 = vpop.permute.xlu0 %3178
      %3180 = vrot.lane.b32.xlu0 %v2799, 111
      %v3181 = vpop.permute.xlu0 %3180
      %3182 = vrot.lane.b32.xlu0 %v2800, 111
      %v3183 = vpop.permute.xlu0 %3182
      %3184 = vrot.lane.b32.xlu0 %v2801, 111
      %v3185 = vpop.permute.xlu0 %3184
      %3186 = vrot.lane.b32.xlu0 %v2802, 111
      %v3187 = vpop.permute.xlu0 %3186
      %3188 = vrot.lane.b32.xlu0 %v2803, 111
      %v3189 = vpop.permute.xlu0 %3188
      %3190 = vrot.lane.b32.xlu0 %v2804, 111
      %v3191 = vpop.permute.xlu0 %3190
      %3192 = vrot.lane.b32.xlu0 %v2805, 111
      %v3193 = vpop.permute.xlu0 %3192
      %3194 = vrot.lane.b32.xlu0 %v2806, 111
      %v3195 = vpop.permute.xlu0 %3194
      %3196 = vrot.lane.b32.xlu0 %v2807, 111
      %v3197 = vpop.permute.xlu0 %3196
      %3198 = vrot.lane.b32.xlu0 %v2808, 111
      %v3199 = vpop.permute.xlu0 %3198
      %3200 = vrot.lane.b32.xlu0 %v2809, 111
      %v3201 = vpop.permute.xlu0 %3200
      %3202 = vrot.lane.b32.xlu0 %v2810, 111
      %v3203 = vpop.permute.xlu0 %3202
      %3204 = vrot.lane.b32.xlu0 %v2811, 111
      %v3205 = vpop.permute.xlu0 %3204
      %v3206 = vsel %vm919, %v3157, %v3159
      %v3207 = vsel %vm919, %v3159, %v3161
      %v3208 = vsel %vm919, %v3161, %v3163
      %v3209 = vsel %vm919, %v3163, %v3165
      %v3210 = vsel %vm919, %v3167, %v3169
      %v3211 = vsel %vm919, %v3169, %v3171
      %v3212 = vsel %vm919, %v3171, %v3173
      %v3213 = vsel %vm919, %v3173, %v3175
      %v3214 = vsel %vm919, %v3177, %v3179
      %v3215 = vsel %vm919, %v3179, %v3181
      %v3216 = vsel %vm919, %v3181, %v3183
      %v3217 = vsel %vm919, %v3183, %v3185
      %v3218 = vsel %vm919, %v3187, %v3189
      %v3219 = vsel %vm919, %v3189, %v3191
      %v3220 = vsel %vm919, %v3191, %v3193
      %v3221 = vsel %vm919, %v3193, %v3195
      %v3222 = vsel %vm919, %v3197, %v3199
      %v3223 = vsel %vm919, %v3199, %v3201
      %v3224 = vsel %vm919, %v3201, %v3203
      %v3225 = vsel %vm919, %v3203, %v3205
      %v3247 = vsel %vm719, %v2786, 0
      %v3250 = vsel %vm723, %v3222, 0
      %v3253 = vsel %vm723, %v3223, 0
      %v3256 = vsel %vm723, %v3224, 0
      %v3259 = vsel %vm723, %v3225, 0
      %v3262 = vsel %vm723, %v3205, 0
      %3264 = vmatprep.subr.bf16.mxu0 %v3207
      %3265 = vmatpush1.bf16.msra.mxu0 %v3206
      %3266 = vmatprep.subr.bf16.mxu0 %v3211
      %3267 = vmatpush1.bf16.msra.mxu0 %v3210
      %3268 = vmatprep.subr.bf16.mxu0 %v3215
      %3269 = vmatpush1.bf16.msra.mxu0 %v3214
      %3270 = vmatprep.subr.bf16.mxu0 %v3219
      %3271 = vmatpush1.bf16.msra.mxu0 %v3218
      %3272 = vmatprep.subr.bf16.mxu0 %v3253
      %3273 = vmatpush1.bf16.msra.mxu0 %v3250
      %3274 = vmatprep.subr.bf16.mxu0 0
      %3275 = vmatpush1.bf16.msra.mxu0 0
      %3276 = vmatprep.subr.bf16.mxu0 0
      %3277 = vmatpush1.bf16.msra.mxu0 0
      %3278 = vmatprep.subr.bf16.mxu0 0
      %3279 = vmatpush1.bf16.msra.mxu0 0
      %3280 = vmatprep.subr.bf16.mxu0 0
      %3281 = vmatpush1.bf16.msra.mxu0 0
      %3282 = vmatprep.subr.bf16.mxu0 0
      %3283 = vmatpush1.bf16.msra.mxu0 0
      %3284 = vmatprep.subr.bf16.mxu0 0
      %3285 = vmatpush1.bf16.msra.mxu0 0
      %3286 = vmatprep.subr.bf16.mxu0 0
      %3287 = vmatpush1.bf16.msra.mxu0 0
      %3288 = vmatprep.subr.bf16.mxu0 0
      %3289 = vmatpush1.bf16.msra.mxu0 0
      %3290 = vmatprep.subr.bf16.mxu0 0
      %3291 = vmatpush1.bf16.msra.mxu0 0
      %3292 = vmatprep.subr.bf16.mxu0 0
      %3293 = vmatpush1.bf16.msra.mxu0 0
      %3294 = vmatprep.subr.bf16.mxu0 0
      %3295 = vmatpush1.bf16.msra.mxu0 0
      %3296 = vmatprep.mubr.bf16.mxu0 0
      %3297 = vmatmul.mubr.bf16.gmra.mrb[0].mxu0 %v3247
      %v3298 = vpop.f32.mrb[0].mxu0
      %v3299 = vadd.f32 %v3061, %v3298
      %v3300 = vpop.f32.mrb[0].mxu0
      %v3301 = vadd.f32 %v3063, %v3300
      %v3302 = vpop.f32.mrb[0].mxu0
      %v3303 = vpop.f32.mrb[0].mxu0
      %3304 = vdwg.mxu0
      %3305 = vmatprep.subr.bf16.mxu0 %v3209
      %3306 = vmatpush1.bf16.msra.mxu0 %v3208
      %3307 = vmatprep.subr.bf16.mxu0 %v3213
      %3308 = vmatpush1.bf16.msra.mxu0 %v3212
      %3309 = vmatprep.subr.bf16.mxu0 %v3217
      %3310 = vmatpush1.bf16.msra.mxu0 %v3216
      %3311 = vmatprep.subr.bf16.mxu0 %v3221
      %3312 = vmatpush1.bf16.msra.mxu0 %v3220
      %3313 = vmatprep.subr.bf16.mxu0 %v3259
      %3314 = vmatpush1.bf16.msra.mxu0 %v3256
      %3315 = vmatprep.subr.bf16.mxu0 0
      %3316 = vmatpush1.bf16.msra.mxu0 0
      %3317 = vmatprep.subr.bf16.mxu0 0
      %3318 = vmatpush1.bf16.msra.mxu0 0
      %3319 = vmatprep.subr.bf16.mxu0 0
      %3320 = vmatpush1.bf16.msra.mxu0 0
      %3321 = vmatprep.subr.bf16.mxu0 0
      %3322 = vmatpush1.bf16.msra.mxu0 0
      %3323 = vmatprep.subr.bf16.mxu0 0
      %3324 = vmatpush1.bf16.msra.mxu0 0
      %3325 = vmatprep.subr.bf16.mxu0 0
      %3326 = vmatpush1.bf16.msra.mxu0 0
      %3327 = vmatprep.subr.bf16.mxu0 0
      %3328 = vmatpush1.bf16.msra.mxu0 0
      %3329 = vmatprep.subr.bf16.mxu0 0
      %3330 = vmatpush1.bf16.msra.mxu0 0
      %3331 = vmatprep.subr.bf16.mxu0 0
      %3332 = vmatpush1.bf16.msra.mxu0 0
      %3333 = vmatprep.subr.bf16.mxu0 0
      %3334 = vmatpush1.bf16.msra.mxu0 0
      %3335 = vmatprep.subr.bf16.mxu0 0
      %3336 = vmatpush1.bf16.msra.mxu0 0
      %3337 = vmatprep.mubr.bf16.mxu0 0
      %3338 = vmatmul.mubr.bf16.gmra.mrb[0].mxu0 %v3247
      %v3339 = vpop.f32.mrb[0].mxu0
      %v3340 = vadd.f32 %v3102, %v3339
      %v3341 = vpop.f32.mrb[0].mxu0
      %v3342 = vadd.f32 %v3104, %v3341
      %v3343 = vpop.f32.mrb[0].mxu0
      %v3344 = vpop.f32.mrb[0].mxu0
      %3345 = vdwg.mxu0
      %3346 = vmatprep.subr.bf16.mxu0 0
      %3347 = vmatpush1.bf16.msra.mxu0 %v3165
      %3348 = vmatprep.subr.bf16.mxu0 0
      %3349 = vmatpush1.bf16.msra.mxu0 %v3175
      %3350 = vmatprep.subr.bf16.mxu0 0
      %3351 = vmatpush1.bf16.msra.mxu0 %v3185
      %3352 = vmatprep.subr.bf16.mxu0 0
      %3353 = vmatpush1.bf16.msra.mxu0 %v3195
      %3354 = vmatprep.subr.bf16.mxu0 0
      %3355 = vmatpush1.bf16.msra.mxu0 %v3262
      %3356 = vmatprep.subr.bf16.mxu0 0
      %3357 = vmatpush1.bf16.msra.mxu0 0
      %3358 = vmatprep.subr.bf16.mxu0 0
      %3359 = vmatpush1.bf16.msra.mxu0 0
      %3360 = vmatprep.subr.bf16.mxu0 0
      %3361 = vmatpush1.bf16.msra.mxu0 0
      %3362 = vmatprep.subr.bf16.mxu0 0
      %3363 = vmatpush1.bf16.msra.mxu0 0
      %3364 = vmatprep.subr.bf16.mxu0 0
      %3365 = vmatpush1.bf16.msra.mxu0 0
      %3366 = vmatprep.subr.bf16.mxu0 0
      %3367 = vmatpush1.bf16.msra.mxu0 0
      %3368 = vmatprep.subr.bf16.mxu0 0
      %3369 = vmatpush1.bf16.msra.mxu0 0
      %3370 = vmatprep.subr.bf16.mxu0 0
      %3371 = vmatpush1.bf16.msra.mxu0 0
      %3372 = vmatprep.subr.bf16.mxu0 0
      %3373 = vmatpush1.bf16.msra.mxu0 0
      %3374 = vmatprep.subr.bf16.mxu0 0
      %3375 = vmatpush1.bf16.msra.mxu0 0
      %3376 = vmatprep.subr.bf16.mxu0 0
      %3377 = vmatpush1.bf16.msra.mxu0 0
      %3378 = vmatprep.mubr.bf16.mxu0 0
      %3379 = vmatmul.mubr.bf16.gmra.mrb[0].mxu0 %v3247
      %v3380 = vpop.f32.mrb[0].mxu0
      %v3381 = vadd.f32 %v3143, %v3380
      %v3382 = vpop.f32.mrb[0].mxu0
      %v3383 = vpop.f32.mrb[0].mxu0
      %v3384 = vpop.f32.mrb[0].mxu0
      %3385 = vdwg.mxu0
      %3387 = vrot.lane.b32.xlu0 %v2627, 127
      %v3388 = vpop.permute.xlu0 %3387
      %v3389 = vsel %vm346, %v2814, %v3388
      %3392 = vrot.lane.b32.xlu0 %v2627, 126
      %v3393 = vpop.permute.xlu0 %3392
      %v3394 = vsel %vm366, %v2819, %v3393
      %3397 = vrot.lane.b32.xlu0 %v2627, 118
      %v3398 = vpop.permute.xlu0 %3397
      %v3399 = vsel %vm386, %v2824, %v3398
      %3402 = vrot.lane.b32.xlu0 %v2627, 117
      %v3403 = vpop.permute.xlu0 %3402
      %v3404 = vsel %vm406, %v2829, %v3403
      %3407 = vrot.lane.b32.xlu0 %v2627, 116
      %v3408 = vpop.permute.xlu0 %3407
      %v3409 = vsel %vm426, %v2835, %v3408
      %3412 = vrot.lane.b32.xlu0 %v2627, 108
      %v3413 = vpop.permute.xlu0 %3412
      %v3414 = vsel %vm446, %v2841, %v3413
      %3417 = vrot.lane.b32.xlu0 %v2627, 107
      %v3418 = vpop.permute.xlu0 %3417
      %v3419 = vsel %vm466, %v2847, %v3418
      %3422 = vrot.lane.b32.xlu0 %v2627, 106
      %v3423 = vpop.permute.xlu0 %3422
      %v3424 = vsel %vm486, %v2853, %v3423
      %s3427 = scalar_lea.vmem %s2, 32
      %v3428 = vld [vmem:[%s3427] sm:$0xf]
      %v3429 = vpack.c.bf16 %v3389, %v2626
      %v3430 = vpack.c.bf16 %v3388, %v2627
      %v3431 = vpack.c.bf16 %v3399, %v3394
      %v3432 = vpack.c.bf16 %v3398, %v3393
      %v3433 = vpack.c.bf16 %v3409, %v3404
      %v3434 = vpack.c.bf16 %v3408, %v3403
      %v3435 = vpack.c.bf16 %v3419, %v3414
      %v3436 = vpack.c.bf16 %v3418, %v3413
      %v3437 = vpack.c.bf16 %v3424, %v3424
      %v3438 = vpack.c.bf16 %v3423, %v3423
      %3449 = vrot.lane.b32.xlu0 %v2788, 39
      %v3450 = vpop.permute.xlu0 %3449
      %3451 = vrot.lane.b32.xlu0 %v2789, 39
      %v3452 = vpop.permute.xlu0 %3451
      %3453 = vrot.lane.b32.xlu0 %v2790, 39
      %v3454 = vpop.permute.xlu0 %3453
      %3455 = vrot.lane.b32.xlu0 %v2860, 39
      %v3456 = vpop.permute.xlu0 %3455
      %3457 = vrot.lane.b32.xlu0 %v3429, 39
      %v3458 = vpop.permute.xlu0 %3457
      %3459 = vrot.lane.b32.xlu0 %v3430, 39
      %v3460 = vpop.permute.xlu0 %3459
      %3461 = vrot.lane.b32.xlu0 %v2793, 39
      %v3462 = vpop.permute.xlu0 %3461
      %3463 = vrot.lane.b32.xlu0 %v2794, 39
      %v3464 = vpop.permute.xlu0 %3463
      %3465 = vrot.lane.b32.xlu0 %v2795, 39
      %v3466 = vpop.permute.xlu0 %3465
      %3467 = vrot.lane.b32.xlu0 %v2862, 39
      %v3468 = vpop.permute.xlu0 %3467
      %3469 = vrot.lane.b32.xlu0 %v3431, 39
      %v3470 = vpop.permute.xlu0 %3469
      %3471 = vrot.lane.b32.xlu0 %v3432, 39
      %v3472 = vpop.permute.xlu0 %3471
      %3473 = vrot.lane.b32.xlu0 %v2798, 39
      %v3474 = vpop.permute.xlu0 %3473
      %3475 = vrot.lane.b32.xlu0 %v2799, 39
      %v3476 = vpop.permute.xlu0 %3475
      %3477 = vrot.lane.b32.xlu0 %v2800, 39
      %v3478 = vpop.permute.xlu0 %3477
      %3479 = vrot.lane.b32.xlu0 %v2865, 39
      %v3480 = vpop.permute.xlu0 %3479
      %3481 = vrot.lane.b32.xlu0 %v3433, 39
      %v3482 = vpop.permute.xlu0 %3481
      %3483 = vrot.lane.b32.xlu0 %v3434, 39
      %v3484 = vpop.permute.xlu0 %3483
      %3485 = vrot.lane.b32.xlu0 %v2803, 39
      %v3486 = vpop.permute.xlu0 %3485
      %3487 = vrot.lane.b32.xlu0 %v2804, 39
      %v3488 = vpop.permute.xlu0 %3487
      %3489 = vrot.lane.b32.xlu0 %v2805, 39
      %v3490 = vpop.permute.xlu0 %3489
      %3491 = vrot.lane.b32.xlu0 %v2868, 39
      %v3492 = vpop.permute.xlu0 %3491
      %3493 = vrot.lane.b32.xlu0 %v3435, 39
      %v3494 = vpop.permute.xlu0 %3493
      %3495 = vrot.lane.b32.xlu0 %v3436, 39
      %v3496 = vpop.permute.xlu0 %3495
      %3497 = vrot.lane.b32.xlu0 %v2808, 39
      %v3498 = vpop.permute.xlu0 %3497
      %3499 = vrot.lane.b32.xlu0 %v2809, 39
      %v3500 = vpop.permute.xlu0 %3499
      %3501 = vrot.lane.b32.xlu0 %v2810, 39
      %v3502 = vpop.permute.xlu0 %3501
      %3503 = vrot.lane.b32.xlu0 %v2871, 39
      %v3504 = vpop.permute.xlu0 %3503
      %3505 = vrot.lane.b32.xlu0 %v3437, 39
      %v3506 = vpop.permute.xlu0 %3505
      %3507 = vrot.lane.b32.xlu0 %v3438, 39
      %v3508 = vpop.permute.xlu0 %3507
      %v3509 = vsel %vm1223, %v3450, %v3452
      %v3510 = vsel %vm1223, %v3452, %v3454
      %v3511 = vsel %vm1223, %v3454, %v3456
      %v3512 = vsel %vm1223, %v3456, %v3458
      %v3513 = vsel %vm1223, %v3458, %v3460
      %v3514 = vsel %vm1223, %v3462, %v3464
      %v3515 = vsel %vm1223, %v3464, %v3466
      %v3516 = vsel %vm1223, %v3466, %v3468
      %v3517 = vsel %vm1223, %v3468, %v3470
      %v3518 = vsel %vm1223, %v3470, %v3472
      %v3519 = vsel %vm1223, %v3474, %v3476
      %v3520 = vsel %vm1223, %v3476, %v3478
      %v3521 = vsel %vm1223, %v3478, %v3480
      %v3522 = vsel %vm1223, %v3480, %v3482
      %v3523 = vsel %vm1223, %v3482, %v3484
      %v3524 = vsel %vm1223, %v3486, %v3488
      %v3525 = vsel %vm1223, %v3488, %v3490
      %v3526 = vsel %vm1223, %v3490, %v3492
      %v3527 = vsel %vm1223, %v3492, %v3494
      %v3528 = vsel %vm1223, %v3494, %v3496
      %v3529 = vsel %vm1223, %v3498, %v3500
      %v3530 = vsel %vm1223, %v3500, %v3502
      %v3531 = vsel %vm1223, %v3502, %v3504
      %v3532 = vsel %vm1223, %v3504, %v3506
      %v3533 = vsel %vm1223, %v3506, %v3508
      %v3555 = vsel %vm719, %v3428, 0
      %v3558 = vsel %vm723, %v3529, 0
      %v3561 = vsel %vm723, %v3530, 0
      %v3564 = vsel %vm723, %v3531, 0
      %v3567 = vsel %vm723, %v3532, 0
      %v3570 = vsel %vm723, %v3533, 0
      %3572 = vmatprep.subr.bf16.mxu0 %v3510
      %3573 = vmatpush1.bf16.msra.mxu0 %v3509
      %3574 = vmatprep.subr.bf16.mxu0 %v3515
      %3575 = vmatpush1.bf16.msra.mxu0 %v3514
      %3576 = vmatprep.subr.bf16.mxu0 %v3520
      %3577 = vmatpush1.bf16.msra.mxu0 %v3519
      %3578 = vmatprep.subr.bf16.mxu0 %v3525
      %3579 = vmatpush1.bf16.msra.mxu0 %v3524
      %3580 = vmatprep.subr.bf16.mxu0 %v3561
      %3581 = vmatpush1.bf16.msra.mxu0 %v3558
      %3582 = vmatprep.subr.bf16.mxu0 0
      %3583 = vmatpush1.bf16.msra.mxu0 0
      %3584 = vmatprep.subr.bf16.mxu0 0
      %3585 = vmatpush1.bf16.msra.mxu0 0
      %3586 = vmatprep.subr.bf16.mxu0 0
      %3587 = vmatpush1.bf16.msra.mxu0 0
      %3588 = vmatprep.subr.bf16.mxu0 0
      %3589 = vmatpush1.bf16.msra.mxu0 0
      %3590 = vmatprep.subr.bf16.mxu0 0
      %3591 = vmatpush1.bf16.msra.mxu0 0
      %3592 = vmatprep.subr.bf16.mxu0 0
      %3593 = vmatpush1.bf16.msra.mxu0 0
      %3594 = vmatprep.subr.bf16.mxu0 0
      %3595 = vmatpush1.bf16.msra.mxu0 0
      %3596 = vmatprep.subr.bf16.mxu0 0
      %3597 = vmatpush1.bf16.msra.mxu0 0
      %3598 = vmatprep.subr.bf16.mxu0 0
      %3599 = vmatpush1.bf16.msra.mxu0 0
      %3600 = vmatprep.subr.bf16.mxu0 0
      %3601 = vmatpush1.bf16.msra.mxu0 0
      %3602 = vmatprep.subr.bf16.mxu0 0
      %3603 = vmatpush1.bf16.msra.mxu0 0
      %3604 = vmatprep.mubr.bf16.mxu0 0
      %3605 = vmatmul.mubr.bf16.gmra.mrb[0].mxu0 %v3555
      %v3606 = vpop.f32.mrb[0].mxu0
      %v3607 = vadd.f32 0.0, %v3606
      %v3608 = vpop.f32.mrb[0].mxu0
      %v3609 = vadd.f32 0.0, %v3608
      %v3610 = vpop.f32.mrb[0].mxu0
      %v3611 = vpop.f32.mrb[0].mxu0
      %3612 = vdwg.mxu0
      %3613 = vmatprep.subr.bf16.mxu0 %v3512
      %3614 = vmatpush1.bf16.msra.mxu0 %v3511
      %3615 = vmatprep.subr.bf16.mxu0 %v3517
      %3616 = vmatpush1.bf16.msra.mxu0 %v3516
      %3617 = vmatprep.subr.bf16.mxu0 %v3522
      %3618 = vmatpush1.bf16.msra.mxu0 %v3521
      %3619 = vmatprep.subr.bf16.mxu0 %v3527
      %3620 = vmatpush1.bf16.msra.mxu0 %v3526
      %3621 = vmatprep.subr.bf16.mxu0 %v3567
      %3622 = vmatpush1.bf16.msra.mxu0 %v3564
      %3623 = vmatprep.subr.bf16.mxu0 0
      %3624 = vmatpush1.bf16.msra.mxu0 0
      %3625 = vmatprep.subr.bf16.mxu0 0
      %3626 = vmatpush1.bf16.msra.mxu0 0
      %3627 = vmatprep.subr.bf16.mxu0 0
      %3628 = vmatpush1.bf16.msra.mxu0 0
      %3629 = vmatprep.subr.bf16.mxu0 0
      %3630 = vmatpush1.bf16.msra.mxu0 0
      %3631 = vmatprep.subr.bf16.mxu0 0
      %3632 = vmatpush1.bf16.msra.mxu0 0
      %3633 = vmatprep.subr.bf16.mxu0 0
      %3634 = vmatpush1.bf16.msra.mxu0 0
      %3635 = vmatprep.subr.bf16.mxu0 0
      %3636 = vmatpush1.bf16.msra.mxu0 0
      %3637 = vmatprep.subr.bf16.mxu0 0
      %3638 = vmatpush1.bf16.msra.mxu0 0
      %3639 = vmatprep.subr.bf16.mxu0 0
      %3640 = vmatpush1.bf16.msra.mxu0 0
      %3641 = vmatprep.subr.bf16.mxu0 0
      %3642 = vmatpush1.bf16.msra.mxu0 0
      %3643 = vmatprep.subr.bf16.mxu0 0
      %3644 = vmatpush1.bf16.msra.mxu0 0
      %3645 = vmatprep.mubr.bf16.mxu0 0
      %3646 = vmatmul.mubr.bf16.gmra.mrb[0].mxu0 %v3555
      %v3647 = vpop.f32.mrb[0].mxu0
      %v3648 = vadd.f32 0.0, %v3647
      %v3649 = vpop.f32.mrb[0].mxu0
      %v3650 = vadd.f32 0.0, %v3649
      %v3651 = vpop.f32.mrb[0].mxu0
      %v3652 = vpop.f32.mrb[0].mxu0
      %3653 = vdwg.mxu0
      %3654 = vmatprep.subr.bf16.mxu0 0
      %3655 = vmatpush1.bf16.msra.mxu0 %v3513
      %3656 = vmatprep.subr.bf16.mxu0 0
      %3657 = vmatpush1.bf16.msra.mxu0 %v3518
      %3658 = vmatprep.subr.bf16.mxu0 0
      %3659 = vmatpush1.bf16.msra.mxu0 %v3523
      %3660 = vmatprep.subr.bf16.mxu0 0
      %3661 = vmatpush1.bf16.msra.mxu0 %v3528
      %3662 = vmatprep.subr.bf16.mxu0 0
      %3663 = vmatpush1.bf16.msra.mxu0 %v3570
      %3664 = vmatprep.subr.bf16.mxu0 0
      %3665 = vmatpush1.bf16.msra.mxu0 0
      %3666 = vmatprep.subr.bf16.mxu0 0
      %3667 = vmatpush1.bf16.msra.mxu0 0
      %3668 = vmatprep.subr.bf16.mxu0 0
      %3669 = vmatpush1.bf16.msra.mxu0 0
      %3670 = vmatprep.subr.bf16.mxu0 0
      %3671 = vmatpush1.bf16.msra.mxu0 0
      %3672 = vmatprep.subr.bf16.mxu0 0
      %3673 = vmatpush1.bf16.msra.mxu0 0
      %3674 = vmatprep.subr.bf16.mxu0 0
      %3675 = vmatpush1.bf16.msra.mxu0 0
      %3676 = vmatprep.subr.bf16.mxu0 0
      %3677 = vmatpush1.bf16.msra.mxu0 0
      %3678 = vmatprep.subr.bf16.mxu0 0
      %3679 = vmatpush1.bf16.msra.mxu0 0
      %3680 = vmatprep.subr.bf16.mxu0 0
      %3681 = vmatpush1.bf16.msra.mxu0 0
      %3682 = vmatprep.subr.bf16.mxu0 0
      %3683 = vmatpush1.bf16.msra.mxu0 0
      %3684 = vmatprep.subr.bf16.mxu0 0
      %3685 = vmatpush1.bf16.msra.mxu0 0
      %3686 = vmatprep.mubr.bf16.mxu0 0
      %3687 = vmatmul.mubr.bf16.gmra.mrb[0].mxu0 %v3555
      %v3688 = vpop.f32.mrb[0].mxu0
      %v3689 = vadd.f32 0.0, %v3688
      %v3690 = vpop.f32.mrb[0].mxu0
      %v3691 = vpop.f32.mrb[0].mxu0
      %v3692 = vpop.f32.mrb[0].mxu0
      %3693 = vdwg.mxu0
      %v3694 = vadd.f32 %v3299, %v3607
      %v3695 = vadd.f32 %v3301, %v3609
      %v3696 = vadd.f32 %v3340, %v3648
      %v3697 = vadd.f32 %v3342, %v3650
      %v3698 = vadd.f32 %v3381, %v3689
      %s3699 = scalar_lea.vmem %s3, 16
      %v3700 = vld [vmem:[%s3699] sm:$0xff]
      %3702 = vset.pattern.permute.xlu0 0
      %3703 = vperm.xlu0 %3702, %v3700
      %v3704 = vpop.permute.xlu0 %3703
      %v3706 = vadd.f32 %v3694, %v3704
      %v3707 = vadd.f32 %v3695, %v3704
      %v3708 = vadd.f32 %v3696, %v3704
      %v3709 = vadd.f32 %v3697, %v3704
      %v3710 = vadd.f32 %v3698, %v3704
      %vm3711 = vcmp.gt.f32.partialorder %v3706, 0.0
      %vm3712 = vcmp.gt.f32.partialorder %v3707, 0.0
      %vm3713 = vcmp.gt.f32.partialorder %v3708, 0.0
      %vm3714 = vcmp.gt.f32.partialorder %v3709, 0.0
      %vm3715 = vcmp.gt.f32.partialorder %v3710, 0.0
      %v3716 = vmul.f32 %v3706, 0.2
      %v3717 = vmul.f32 %v3707, 0.2
      %v3718 = vmul.f32 %v3708, 0.2
      %v3719 = vmul.f32 %v3709, 0.2
      %v3720 = vmul.f32 %v3710, 0.2
      %v3721 = vsel %vm3711, %v3706, %v3716
      %v3722 = vsel %vm3712, %v3707, %v3717
      %v3723 = vsel %vm3713, %v3708, %v3718
      %v3724 = vsel %vm3714, %v3709, %v3719
      %v3725 = vsel %vm3715, %v3710, %v3720
      %v3726 = vadd.f32 %v3721, 0.0
      %v3727 = vadd.f32 %v3722, 0.0
      %v3728 = vadd.f32 %v3723, 0.0
      %v3729 = vadd.f32 %v3724, 0.0
      %v3730 = vadd.f32 %v3725, 0.0
      %v3731 = vld [vmem:[%s293 + $0x8] sm:$0xff]
      %v3732 = vld [vmem:[%s293 + $0x10] sm:$0xff]
      %v3733 = vld [vmem:[%s293 + $0x18] sm:$0xff]
      %v3734 = vld [vmem:[%s293 + $0x20] sm:$0xff]
      %v3735 = vld [vmem:[%s293 + $0x28] sm:$0xff]
      %v3736 = vadd.f32 %v3726, %v3731
      %v3737 = vadd.f32 %v3727, %v3732
      %v3738 = vadd.f32 %v3728, %v3733
      %v3739 = vadd.f32 %v3729, %v3734
      %v3740 = vadd.f32 %v3730, %v3735
      %v3741 = vsel %vm1476, %v3736, 0.0
      %v3742 = vsel %vm1477, %v3737, 0.0
      %v3743 = vsel %vm1478, %v3738, 0.0
      %v3744 = vsel %vm1479, %v3739, 0.0
      %v3745 = vsel %vm1480, %v3740, 0.0
      %3746 = vst [vmem:[#allocation4 + $0x8] sm:$0xff] %v3741
      %3747 = vst [vmem:[#allocation4 + $0x10] sm:$0xff] %v3742
      %3748 = vst [vmem:[#allocation4 + $0x18] sm:$0xff] %v3743
      %3749 = vst [vmem:[#allocation4 + $0x20] sm:$0xff] %v3744
      %3750 = vst.msk [vmem:[#allocation4 + $0x28] sm:$0xff] %vm306, %v3745
      %v3751 = vld [vmem:[#allocation2 + $0x8] sm:$0xff]
      %v3752 = vld [vmem:[#allocation2 + $0x10] sm:$0xff]
      %v3753 = vld [vmem:[#allocation2 + $0x18] sm:$0xff]
      %v3754 = vld [vmem:[#allocation2 + $0x20] sm:$0xff]
      %v3755 = vld [vmem:[#allocation2 + $0x28] sm:$0xff]
      %v3756 = vld [vmem:[#allocation3 + $0x8] sm:$0xff]
      %v3757 = vld [vmem:[#allocation3 + $0x10] sm:$0xff]
      %v3758 = vld [vmem:[#allocation3 + $0x18] sm:$0xff]
      %v3759 = vld [vmem:[#allocation3 + $0x20] sm:$0xff]
      %v3760 = vld [vmem:[#allocation3 + $0x28] sm:$0xff]
      %v3761 = vld [vmem:[#allocation4 + $0x8] sm:$0xff]
      %v3762 = vld [vmem:[#allocation4 + $0x10] sm:$0xff]
      %v3763 = vld [vmem:[#allocation4 + $0x18] sm:$0xff]
      %v3764 = vld [vmem:[#allocation4 + $0x20] sm:$0xff]
      %v3765 = vld [vmem:[#allocation4 + $0x28] sm:$0xff]
      %v3766 = vld [vmem:[%s4] sm:$0xf]
      %v3767 = vld [vmem:[%s4 + $0x4] sm:$0xf]
      %v3768 = vld [vmem:[%s4 + $0x8] sm:$0xf]
      %v3769 = vld [vmem:[%s4 + $0xc] sm:$0xf]
      %v3770 = vpack.c.bf16 %v3756, %v3751
      %v3771 = vpack.c.bf16 %v3757, %v3752
      %v3772 = vpack.c.bf16 %v3758, %v3753
      %v3773 = vpack.c.bf16 %v3759, %v3754
      %v3774 = vpack.c.bf16 %v3760, %v3755
      %v3775 = vpack.c.bf16 %v3761, %v3761
      %v3776 = vpack.c.bf16 %v3762, %v3762
      %v3777 = vpack.c.bf16 %v3763, %v3763
      %v3778 = vpack.c.bf16 %v3764, %v3764
      %v3779 = vpack.c.bf16 %v3765, %v3765
      %v3780 = vld [vmem:[%s5] sm:$0xff]
      %v3781 = vld [vmem:[%s5 + $0x8] sm:$0xff]
      %v3782 = vld [vmem:[%s5 + $0x10] sm:$0xff]
      %v3783 = vld [vmem:[%s5 + $0x18] sm:$0xff]
      %3785 = vset.pattern.permute.xlu0 0
      %3786 = vperm.xlu0 %3785, %v3780
      %v3787 = vpop.permute.xlu0 %3786
      %3790 = vset.pattern.permute.xlu0 0
      %3791 = vperm.xlu0 %3790, %v3781
      %v3792 = vpop.permute.xlu0 %3791
      %3795 = vset.pattern.permute.xlu0 0
      %3796 = vperm.xlu0 %3795, %v3782
      %v3797 = vpop.permute.xlu0 %3796
      %3800 = vset.pattern.permute.xlu0 0
      %3801 = vperm.xlu0 %3800, %v3783
      %v3802 = vpop.permute.xlu0 %3801
      %v3808 = vunpack.c.l.b16 %v3766
      %v3809 = vunpack.c.l.b16 %v3767
      %v3810 = vunpack.c.l.b16 %v3768
      %v3811 = vunpack.c.l.b16 %v3769
      %v3812 = vpack.c.b16 %v3809, %v3808
      %v3813 = vpack.c.b16 %v3811, %v3810
      %vm3814 = vcmask 195584
      %v3816 = vsel %vm3814, %v3812, 0
      %v3819 = vsel %vm3814, %v3813, 0
      %v3822 = vsel %vm723, %v3775, 0
      %v3825 = vsel %vm723, %v3776, 0
      %v3828 = vsel %vm723, %v3777, 0
      %v3831 = vsel %vm723, %v3778, 0
      %v3834 = vsel %vm723, %v3779, 0
      %3836 = vmatprep.subr.bf16.mxu0 %v3771
      %3837 = vmatpush1.bf16.msra.mxu0 %v3770
      %3838 = vmatprep.subr.bf16.mxu0 %v3825
      %3839 = vmatpush1.bf16.msra.mxu0 %v3822
      %3840 = vmatprep.subr.bf16.mxu0 0
      %3841 = vmatpush1.bf16.msra.mxu0 0
      %3842 = vmatprep.subr.bf16.mxu0 0
      %3843 = vmatpush1.bf16.msra.mxu0 0
      %3844 = vmatprep.subr.bf16.mxu0 0
      %3845 = vmatpush1.bf16.msra.mxu0 0
      %3846 = vmatprep.subr.bf16.mxu0 0
      %3847 = vmatpush1.bf16.msra.mxu0 0
      %3848 = vmatprep.subr.bf16.mxu0 0
      %3849 = vmatpush1.bf16.msra.mxu0 0
      %3850 = vmatprep.subr.bf16.mxu0 0
      %3851 = vmatpush1.bf16.msra.mxu0 0
      %3852 = vmatprep.subr.bf16.mxu0 0
      %3853 = vmatpush1.bf16.msra.mxu0 0
      %3854 = vmatprep.subr.bf16.mxu0 0
      %3855 = vmatpush1.bf16.msra.mxu0 0
      %3856 = vmatprep.subr.bf16.mxu0 0
      %3857 = vmatpush1.bf16.msra.mxu0 0
      %3858 = vmatprep.subr.bf16.mxu0 0
      %3859 = vmatpush1.bf16.msra.mxu0 0
      %3860 = vmatprep.subr.bf16.mxu0 0
      %3861 = vmatpush1.bf16.msra.mxu0 0
      %3862 = vmatprep.subr.bf16.mxu0 0
      %3863 = vmatpush1.bf16.msra.mxu0 0
      %3864 = vmatprep.subr.bf16.mxu0 0
      %3865 = vmatpush1.bf16.msra.mxu0 0
      %3866 = vmatprep.subr.bf16.mxu0 0
      %3867 = vmatpush1.bf16.msra.mxu0 0
      %3868 = vmatprep.mubr.bf16.mxu0 0
      %3869 = vmatmul.mubr.bf16.gmra.mrb[0].mxu0 %v3816
      %v3870 = vpop.f32.mrb[0].mxu0
      %v3871 = vadd.f32 %v3787, %v3870
      %v3872 = vpop.f32.mrb[0].mxu0
      %v3873 = vadd.f32 %v3787, %v3872
      %v3874 = vpop.f32.mrb[0].mxu0
      %v3875 = vadd.f32 %v3792, %v3874
      %v3876 = vpop.f32.mrb[0].mxu0
      %v3877 = vadd.f32 %v3792, %v3876
      %3878 = vmatprep.mubr.bf16.mxu0 0
      %3879 = vmatmul.mubr.bf16.gmra.mrb[0].mxu0 %v3819
      %v3880 = vpop.f32.mrb[0].mxu0
      %v3881 = vadd.f32 %v3797, %v3880
      %v3882 = vpop.f32.mrb[0].mxu0
      %v3883 = vadd.f32 %v3797, %v3882
      %v3884 = vpop.f32.mrb[0].mxu0
      %v3885 = vadd.f32 %v3802, %v3884
      %v3886 = vpop.f32.mrb[0].mxu0
      %v3887 = vadd.f32 %v3802, %v3886
      %3888 = vdwg.mxu0
      %3889 = vmatprep.subr.bf16.mxu0 %v3773
      %3890 = vmatpush1.bf16.msra.mxu0 %v3772
      %3891 = vmatprep.subr.bf16.mxu0 %v3831
      %3892 = vmatpush1.bf16.msra.mxu0 %v3828
      %3893 = vmatprep.subr.bf16.mxu0 0
      %3894 = vmatpush1.bf16.msra.mxu0 0
      %3895 = vmatprep.subr.bf16.mxu0 0
      %3896 = vmatpush1.bf16.msra.mxu0 0
      %3897 = vmatprep.subr.bf16.mxu0 0
      %3898 = vmatpush1.bf16.msra.mxu0 0
      %3899 = vmatprep.subr.bf16.mxu0 0
      %3900 = vmatpush1.bf16.msra.mxu0 0
      %3901 = vmatprep.subr.bf16.mxu0 0
      %3902 = vmatpush1.bf16.msra.mxu0 0
      %3903 = vmatprep.subr.bf16.mxu0 0
      %3904 = vmatpush1.bf16.msra.mxu0 0
      %3905 = vmatprep.subr.bf16.mxu0 0
      %3906 = vmatpush1.bf16.msra.mxu0 0
      %3907 = vmatprep.subr.bf16.mxu0 0
      %3908 = vmatpush1.bf16.msra.mxu0 0
      %3909 = vmatprep.subr.bf16.mxu0 0
      %3910 = vmatpush1.bf16.msra.mxu0 0
      %3911 = vmatprep.subr.bf16.mxu0 0
      %3912 = vmatpush1.bf16.msra.mxu0 0
      %3913 = vmatprep.subr.bf16.mxu0 0
      %3914 = vmatpush1.bf16.msra.mxu0 0
      %3915 = vmatprep.subr.bf16.mxu0 0
      %3916 = vmatpush1.bf16.msra.mxu0 0
      %3917 = vmatprep.subr.bf16.mxu0 0
      %3918 = vmatpush1.bf16.msra.mxu0 0
      %3919 = vmatprep.subr.bf16.mxu0 0
      %3920 = vmatpush1.bf16.msra.mxu0 0
      %3921 = vmatprep.mubr.bf16.mxu0 0
      %3922 = vmatmul.mubr.bf16.gmra.mrb[0].mxu0 %v3816
      %v3923 = vpop.f32.mrb[0].mxu0
      %v3924 = vadd.f32 %v3787, %v3923
      %v3925 = vpop.f32.mrb[0].mxu0
      %v3926 = vadd.f32 %v3787, %v3925
      %v3927 = vpop.f32.mrb[0].mxu0
      %v3928 = vadd.f32 %v3792, %v3927
      %v3929 = vpop.f32.mrb[0].mxu0
      %v3930 = vadd.f32 %v3792, %v3929
      %3931 = vmatprep.mubr.bf16.mxu0 0
      %3932 = vmatmul.mubr.bf16.gmra.mrb[0].mxu0 %v3819
      %v3933 = vpop.f32.mrb[0].mxu0
      %v3934 = vadd.f32 %v3797, %v3933
      %v3935 = vpop.f32.mrb[0].mxu0
      %v3936 = vadd.f32 %v3797, %v3935
      %v3937 = vpop.f32.mrb[0].mxu0
      %v3938 = vadd.f32 %v3802, %v3937
      %v3939 = vpop.f32.mrb[0].mxu0
      %v3940 = vadd.f32 %v3802, %v3939
      %3941 = vdwg.mxu0
      %3942 = vmatprep.subr.bf16.mxu0 0
      %3943 = vmatpush1.bf16.msra.mxu0 %v3774
      %3944 = vmatprep.subr.bf16.mxu0 0
      %3945 = vmatpush1.bf16.msra.mxu0 %v3834
      %3946 = vmatprep.subr.bf16.mxu0 0
      %3947 = vmatpush1.bf16.msra.mxu0 0
      %3948 = vmatprep.subr.bf16.mxu0 0
      %3949 = vmatpush1.bf16.msra.mxu0 0
      %3950 = vmatprep.subr.bf16.mxu0 0
      %3951 = vmatpush1.bf16.msra.mxu0 0
      %3952 = vmatprep.subr.bf16.mxu0 0
      %3953 = vmatpush1.bf16.msra.mxu0 0
      %3954 = vmatprep.subr.bf16.mxu0 0
      %3955 = vmatpush1.bf16.msra.mxu0 0
      %3956 = vmatprep.subr.bf16.mxu0 0
      %3957 = vmatpush1.bf16.msra.mxu0 0
      %3958 = vmatprep.subr.bf16.mxu0 0
      %3959 = vmatpush1.bf16.msra.mxu0 0
      %3960 = vmatprep.subr.bf16.mxu0 0
      %3961 = vmatpush1.bf16.msra.mxu0 0
      %3962 = vmatprep.subr.bf16.mxu0 0
      %3963 = vmatpush1.bf16.msra.mxu0 0
      %3964 = vmatprep.subr.bf16.mxu0 0
      %3965 = vmatpush1.bf16.msra.mxu0 0
      %3966 = vmatprep.subr.bf16.mxu0 0
      %3967 = vmatpush1.bf16.msra.mxu0 0
      %3968 = vmatprep.subr.bf16.mxu0 0
      %3969 = vmatpush1.bf16.msra.mxu0 0
      %3970 = vmatprep.subr.bf16.mxu0 0
      %3971 = vmatpush1.bf16.msra.mxu0 0
      %3972 = vmatprep.subr.bf16.mxu0 0
      %3973 = vmatpush1.bf16.msra.mxu0 0
      %3974 = vmatprep.mubr.bf16.mxu0 0
      %3975 = vmatmul.mubr.bf16.gmra.mrb[0].mxu0 %v3816
      %v3976 = vpop.f32.mrb[0].mxu0
      %v3977 = vadd.f32 %v3787, %v3976
      %v3978 = vpop.f32.mrb[0].mxu0
      %v3979 = vpop.f32.mrb[0].mxu0
      %v3980 = vadd.f32 %v3792, %v3979
      %v3981 = vpop.f32.mrb[0].mxu0
      %3982 = vmatprep.mubr.bf16.mxu0 0
      %3983 = vmatmul.mubr.bf16.gmra.mrb[0].mxu0 %v3819
      %v3984 = vpop.f32.mrb[0].mxu0
      %v3985 = vadd.f32 %v3797, %v3984
      %v3986 = vpop.f32.mrb[0].mxu0
      %v3987 = vpop.f32.mrb[0].mxu0
      %v3988 = vadd.f32 %v3802, %v3987
      %v3989 = vpop.f32.mrb[0].mxu0
      %3990 = vdwg.mxu0
      %vm3991 = vcmp.gt.f32.partialorder %v3871, 0.0
      %vm3992 = vcmp.gt.f32.partialorder %v3873, 0.0
      %vm3993 = vcmp.gt.f32.partialorder %v3924, 0.0
      %vm3994 = vcmp.gt.f32.partialorder %v3926, 0.0
      %vm3995 = vcmp.gt.f32.partialorder %v3977, 0.0
      %vm3996 = vcmp.gt.f32.partialorder %v3875, 0.0
      %vm3997 = vcmp.gt.f32.partialorder %v3877, 0.0
      %vm3998 = vcmp.gt.f32.partialorder %v3928, 0.0
      %vm3999 = vcmp.gt.f32.partialorder %v3930, 0.0
      %vm4000 = vcmp.gt.f32.partialorder %v3980, 0.0
      %vm4001 = vcmp.gt.f32.partialorder %v3881, 0.0
      %vm4002 = vcmp.gt.f32.partialorder %v3883, 0.0
      %vm4003 = vcmp.gt.f32.partialorder %v3934, 0.0
      %vm4004 = vcmp.gt.f32.partialorder %v3936, 0.0
      %vm4005 = vcmp.gt.f32.partialorder %v3985, 0.0
      %vm4006 = vcmp.gt.f32.partialorder %v3885, 0.0
      %vm4007 = vcmp.gt.f32.partialorder %v3887, 0.0
      %vm4008 = vcmp.gt.f32.partialorder %v3938, 0.0
      %vm4009 = vcmp.gt.f32.partialorder %v3940, 0.0
      %vm4010 = vcmp.gt.f32.partialorder %v3988, 0.0
      %v4011 = vmul.f32 %v3871, 0.2
      %v4012 = vmul.f32 %v3873, 0.2
      %v4013 = vmul.f32 %v3924, 0.2
      %v4014 = vmul.f32 %v3926, 0.2
      %v4015 = vmul.f32 %v3977, 0.2
      %v4016 = vmul.f32 %v3875, 0.2
      %v4017 = vmul.f32 %v3877, 0.2
      %v4018 = vmul.f32 %v3928, 0.2
      %v4019 = vmul.f32 %v3930, 0.2
      %v4020 = vmul.f32 %v3980, 0.2
      %v4021 = vmul.f32 %v3881, 0.2
      %v4022 = vmul.f32 %v3883, 0.2
      %v4023 = vmul.f32 %v3934, 0.2
      %v4024 = vmul.f32 %v3936, 0.2
      %v4025 = vmul.f32 %v3985, 0.2
      %v4026 = vmul.f32 %v3885, 0.2
      %v4027 = vmul.f32 %v3887, 0.2
      %v4028 = vmul.f32 %v3938, 0.2
      %v4029 = vmul.f32 %v3940, 0.2
      %v4030 = vmul.f32 %v3988, 0.2
      %v4031 = vsel %vm3991, %v3871, %v4011
      %v4032 = vsel %vm3992, %v3873, %v4012
      %v4033 = vsel %vm3993, %v3924, %v4013
      %v4034 = vsel %vm3994, %v3926, %v4014
      %v4035 = vsel %vm3995, %v3977, %v4015
      %v4036 = vsel %vm3996, %v3875, %v4016
      %v4037 = vsel %vm3997, %v3877, %v4017
      %v4038 = vsel %vm3998, %v3928, %v4018
      %v4039 = vsel %vm3999, %v3930, %v4019
      %v4040 = vsel %vm4000, %v3980, %v4020
      %v4041 = vsel %vm4001, %v3881, %v4021
      %v4042 = vsel %vm4002, %v3883, %v4022
      %v4043 = vsel %vm4003, %v3934, %v4023
      %v4044 = vsel %vm4004, %v3936, %v4024
      %v4045 = vsel %vm4005, %v3985, %v4025
      %v4046 = vsel %vm4006, %v3885, %v4026
      %v4047 = vsel %vm4007, %v3887, %v4027
      %v4048 = vsel %vm4008, %v3938, %v4028
      %v4049 = vsel %vm4009, %v3940, %v4029
      %v4050 = vsel %vm4010, %v3988, %v4030
      %4051 = vst [vmem:[%s298] sm:$0xff] %v4031
      %4052 = vst [vmem:[%s298 + $0x8] sm:$0xff] %v4032
      %4053 = vst [vmem:[%s298 + $0x10] sm:$0xff] %v4033
      %4054 = vst [vmem:[%s298 + $0x18] sm:$0xff] %v4034
      %4055 = vst.msk [vmem:[%s298 + $0x20] sm:$0xff] %vm306, %v4035
      %4056 = vst [vmem:[%s298 + $0x28] sm:$0xff] %v4036
      %4057 = vst [vmem:[%s298 + $0x30] sm:$0xff] %v4037
      %4058 = vst [vmem:[%s298 + $0x38] sm:$0xff] %v4038
      %4059 = vst [vmem:[%s298 + $0x40] sm:$0xff] %v4039
      %4060 = vst.msk [vmem:[%s298 + $0x48] sm:$0xff] %vm306, %v4040
      %4061 = vst [vmem:[%s298 + $0x50] sm:$0xff] %v4041
      %4062 = vst [vmem:[%s298 + $0x58] sm:$0xff] %v4042
      %4063 = vst [vmem:[%s298 + $0x60] sm:$0xff] %v4043
      %4064 = vst [vmem:[%s298 + $0x68] sm:$0xff] %v4044
      %4065 = vst.msk [vmem:[%s298 + $0x70] sm:$0xff] %vm306, %v4045
      %4066 = vst [vmem:[%s298 + $0x78] sm:$0xff] %v4046
      %4067 = vst [vmem:[%s298 + $0x80] sm:$0xff] %v4047
      %4068 = vst [vmem:[%s298 + $0x88] sm:$0xff] %v4048
      %4069 = vst [vmem:[%s298 + $0x90] sm:$0xff] %v4049
      %4070 = vst.msk [vmem:[%s298 + $0x98] sm:$0xff] %vm306, %v4050
      %p4071 = scmp.lt.s32.totalorder %s18, 1
      %s4072 = scalar_select %p4071, %s18, 1
      %s4073 = smul.addr %s4072, 20
      %s4074 = smul.addr %s4073, 8
      %s4075 = scalar_lea.vmem %s7, %s4074
      // Predicated region
      $region49: #{fix_cell_forward.1} parent=47 // pred_check
        %p4076 = pneg %p193
      $region50: #{fix_cell_forward.1} parent=47 // pred_check_branch
        %4078 = sbr.rel (%p4076) target = $region52
      $region51: #{fix_cell_forward.1} parent=47 // pred_region
        _
      $region52: #{fix_cell_forward.1} parent=47 // pred_fallthru
        _
    $region48: #{fix_cell_forward.1} parent=5 // pred_fallthru
      _
    %p4079 = scmp.le.s32.totalorder 2, %s13
    // Predicated region
    $region53: #{fix_cell_forward.1} parent=5 // pred_check
      %p4080 = pneg %p4079
    $region54: #{fix_cell_forward.1} parent=5 // pred_check_branch
      %4082 = sbr.rel (%p4080) target = $region56
    $region55: #{fix_cell_forward.1} parent=5 // pred_region
      %s4083 = ssub.s32 %s13, 2
      // Predicated region
      $region57: #{fix_cell_forward.1} parent=55 // pred_check
        %p4084 = pneg %p199
      $region58: #{fix_cell_forward.1} parent=55 // pred_check_branch
        %4086 = sbr.rel (%p4084) target = $region60
      $region59: #{fix_cell_forward.1} parent=55 // pred_region
        %p4087 = scmp.lt.s32.totalorder %s19, 1
        %s4088 = scalar_select %p4087, %s19, 1
        %s4089 = smul.addr %s4088, 20
        %s4090 = smul.addr %s4089, 8
        %s4091 = scalar_lea.vmem %s7, %s4090
      $region60: #{fix_cell_forward.1} parent=55 // pred_fallthru
        _
    $region56: #{fix_cell_forward.1} parent=5 // pred_fallthru
      _
  $region6: #{fix_cell_forward.1} parent=0 // loop_footer
    %s17 = sadd.s32 1, %s13
  $region7: #{fix_cell_forward.1} parent=0 // loop_footer_branch
    %12 = sbr.rel target = $region3
  $region8: #{fix_cell_forward.1} parent=0 // loop_exit
    _

</llo_original>
